<compile_context>
chip_gen: v6e
topology: v6e:2x2x1
jax: 0.10.0
libtpu: 0.0.40
codegen_flags: <defaults>
</compile_context>

<pallas_src>
import functools

import jax
import jax.numpy as jnp
from jax.experimental import pallas as pl
from jax.experimental.pallas import tpu as pltpu


_SUB = 8  # sublane rows in each plane's output slab -> dense, unmasked stores


def _gap_max_kernel(xa_ref, xs_ref, xc_ref, o_ref, *, inv_hw):
    """One grid step == one MRI plane.

    x*_ref : (S_p, C, HW)  full backbone feature map of plane p in its native layout
                           (spatial HW on the lane axis, channels on the sublane axis).
    o_ref  : (_SUB, C)     column block p of the (_SUB, 3*C) output (C lane-dense).
    """
    p = pl.program_id(0)

    def reduce_plane(x):
        # AdaptiveAvgPool2d(1): spatial (lane-axis) sum; the 1/HW scale is applied after
        # the slice-max (exact: scaling by a positive constant is order-preserving).
        s = jnp.sum(x, axis=-1)                     # (S, C)  -- C on the lane axis
        m = jnp.max(s, axis=0, keepdims=True)       # (1, C)  -- torch.max over slices
        o_ref[...] = jnp.broadcast_to(m * inv_hw, o_ref.shape)

    @pl.when(p == 0)
    def _():
        reduce_plane(xa_ref[...])

    @pl.when(p == 1)
    def _():
        reduce_plane(xs_ref[...])

    @pl.when(p == 2)
    def _():
        reduce_plane(xc_ref[...])


def compressor_gap_max(feat_axial, feat_sagit, feat_coron):
    """Fused GAP + max-over-slices + concat for the three MRI planes.

    Each feat_* is a backbone feature map of shape (S_p, C, H, W); the planes may have
    different slice counts S_p but must share (C, H, W).  Returns w of shape (3*C,),
    matching `torch.cat((x, y, z), 1)[0]` of the PyTorch module.
    """
    feats = (feat_axial, feat_sagit, feat_coron)
    _, C, H, W = feats[0].shape
    for f in feats:
        assert f.shape[1:] == (C, H, W), "planes must share (C, H, W)"
    hw = H * W

    # Reshape only (free) -- native layout, no transpose / pad / concat HBM passes.
    xs = [f.reshape(f.shape[0], C, hw) for f in feats]

    kernel = functools.partial(_gap_max_kernel, inv_hw=1.0 / hw)

    total_elems = sum(int(x.size) for x in xs)
    cost = pl.CostEstimate(
        flops=total_elems + sum(int(x.shape[0]) for x in xs) * C,
        transcendentals=0,
        bytes_accessed=total_elems * 4 + _SUB * 3 * C * 4,
    )

    out = pl.pallas_call(
        kernel,
        out_shape=jax.ShapeDtypeStruct((_SUB, 3 * C), jnp.float32),
        grid_spec=pltpu.PrefetchScalarGridSpec(
            num_scalar_prefetch=0,
            grid=(3,),
            in_specs=[
                # Full-plane blocks: last two block dims equal the full array dims
                # (C, HW), so the (8, 128) tiling constraint is satisfied.
                pl.BlockSpec(x.shape, lambda p: (0, 0, 0))
                for x in xs
            ],
            out_specs=pl.BlockSpec((_SUB, C), lambda p: (0, p)),
        ),
        compiler_params=pltpu.CompilerParams(
            dimension_semantics=("parallel",),
        ),
        cost_estimate=cost,
    )(*xs)

    # Row 0 holds the result (all _SUB rows are identical); columns are already the
    # concatenation [axial | sagit | coron].
    return out[0]


def _reference(fa, fs, fc):
    def one(f):
        gap = jnp.mean(f, axis=(2, 3))     # AdaptiveAvgPool2d(1) + view(S, -1)
        return jnp.max(gap, axis=0)        # torch.max(gap, 0, keepdim=True)[0]
    return jnp.concatenate([one(fa), one(fs), one(fc)], axis=0)  # cat(..., 1)[0]


if __name__ == "__main__":
    # Small shapes consistent with the module: a 256-channel backbone (e.g. alexnet path),
    # 7x7 spatial feature maps, different slice counts per MRI plane.
    C, H, W = 256, 7, 7
    S_axial, S_sagit, S_coron = 10, 8, 6

    key = jax.random.PRNGKey(0)
    ka, ks, kc = jax.random.split(key, 3)
    feat_axial = jax.random.normal(ka, (S_axial, C, H, W), dtype=jnp.float32)
    feat_sagit = jax.random.normal(ks, (S_sagit, C, H, W), dtype=jnp.float32)
    feat_coron = jax.random.normal(kc, (S_coron, C, H, W), dtype=jnp.float32)

    w = compressor_gap_max(feat_axial, feat_sagit, feat_coron)
    w = jax.block_until_ready(w)

    ref = _reference(feat_axial, feat_sagit, feat_coron)
    assert w.shape == (3 * C,)
    assert jnp.allclose(w, ref, atol=1e-5, rtol=1e-5), "mismatch vs reference"

    print("KERNEL_OK")
</pallas_src>

<mosaic_0001>
module attributes {stable_mosaic.version = 11 : i64} {
  func.func @_gap_max_kernel(%arg0: i32, %arg1: memref<10x256x49xf32, #tpu.memory_space<vmem>>, %arg2: memref<8x256x49xf32, #tpu.memory_space<vmem>>, %arg3: memref<6x256x49xf32, #tpu.memory_space<vmem>>, %arg4: memref<8x256xf32, #tpu.memory_space<vmem>>) attributes {dimension_semantics = [#tpu.dimension_semantics<parallel>], iteration_bounds = array<i64: 3>, scalar_prefetch = 0 : i64, scratch_operands = 0 : i64, tpu.core_type = #tpu.core_type<tc>, window_params = [{pipeline_mode = #tpu.pipeline_mode<synchronous>, transform_indices = @transform_0, window_bounds = array<i64: 10, 256, 49>}, {pipeline_mode = #tpu.pipeline_mode<synchronous>, transform_indices = @transform_1, window_bounds = array<i64: 8, 256, 49>}, {pipeline_mode = #tpu.pipeline_mode<synchronous>, transform_indices = @transform_2, window_bounds = array<i64: 6, 256, 49>}, {transform_indices = @transform_3, window_bounds = array<i64: 8, 256>}]} {
    %c0_i32 = arith.constant 0 : i32
    %0 = arith.cmpi eq, %arg0, %c0_i32 : i32
    %1 = arith.extui %0 : i1 to i32
    %c0_i32_0 = arith.constant 0 : i32
    %2 = arith.cmpi ne, %1, %c0_i32_0 : i32
    scf.if %2 {
      %c0 = arith.constant 0 : index
      %c0_3 = arith.constant 0 : index
      %c0_4 = arith.constant 0 : index
      %9 = vector.load %arg1[%c0, %c0_3, %c0_4] : memref<10x256x49xf32, #tpu.memory_space<vmem>>, vector<10x256x49xf32>
      %cst = arith.constant dense<0.000000e+00> : vector<10x256xf32>
      %10 = vector.multi_reduction <add>, %9, %cst [2] : vector<10x256x49xf32> to vector<10x256xf32>
      %cst_5 = arith.constant dense<0xFF800000> : vector<256xf32>
      %11 = vector.multi_reduction <maximumf>, %10, %cst_5 [0] : vector<10x256xf32> to vector<256xf32>
      %12 = vector.shape_cast %11 : vector<256xf32> to vector<1x256xf32>
      %cst_6 = arith.constant 0.0204081628 : f32
      %13 = vector.broadcast %cst_6 : f32 to vector<1x256xf32>
      %14 = arith.mulf %12, %13 : vector<1x256xf32>
      %15 = vector.shape_cast %14 : vector<1x256xf32> to vector<1x256xf32>
      %16 = vector.broadcast %15 : vector<1x256xf32> to vector<8x256xf32>
      %c0_7 = arith.constant 0 : index
      %c0_8 = arith.constant 0 : index
      %17 = vector.load %arg4[%c0_7, %c0_8] : memref<8x256xf32, #tpu.memory_space<vmem>>, vector<8x256xf32>
      tpu.vector_store %arg4[%c0_7, %c0_8], %16 {strides = array<i32>} : memref<8x256xf32, #tpu.memory_space<vmem>>, vector<8x256xf32>,
    } else {
    }
    %c1_i32 = arith.constant 1 : i32
    %3 = arith.cmpi eq, %arg0, %c1_i32 : i32
    %4 = arith.extui %3 : i1 to i32
    %c0_i32_1 = arith.constant 0 : i32
    %5 = arith.cmpi ne, %4, %c0_i32_1 : i32
    scf.if %5 {
      %c0 = arith.constant 0 : index
      %c0_3 = arith.constant 0 : index
      %c0_4 = arith.constant 0 : index
      %9 = vector.load %arg2[%c0, %c0_3, %c0_4] : memref<8x256x49xf32, #tpu.memory_space<vmem>>, vector<8x256x49xf32>
      %cst = arith.constant dense<0.000000e+00> : vector<8x256xf32>
      %10 = vector.multi_reduction <add>, %9, %cst [2] : vector<8x256x49xf32> to vector<8x256xf32>
      %cst_5 = arith.constant dense<0xFF800000> : vector<256xf32>
      %11 = vector.multi_reduction <maximumf>, %10, %cst_5 [0] : vector<8x256xf32> to vector<256xf32>
      %12 = vector.shape_cast %11 : vector<256xf32> to vector<1x256xf32>
      %cst_6 = arith.constant 0.0204081628 : f32
      %13 = vector.broadcast %cst_6 : f32 to vector<1x256xf32>
      %14 = arith.mulf %12, %13 : vector<1x256xf32>
      %15 = vector.shape_cast %14 : vector<1x256xf32> to vector<1x256xf32>
      %16 = vector.broadcast %15 : vector<1x256xf32> to vector<8x256xf32>
      %c0_7 = arith.constant 0 : index
      %c0_8 = arith.constant 0 : index
      %17 = vector.load %arg4[%c0_7, %c0_8] : memref<8x256xf32, #tpu.memory_space<vmem>>, vector<8x256xf32>
      tpu.vector_store %arg4[%c0_7, %c0_8], %16 {strides = array<i32>} : memref<8x256xf32, #tpu.memory_space<vmem>>, vector<8x256xf32>,
    } else {
    }
    %c2_i32 = arith.constant 2 : i32
    %6 = arith.cmpi eq, %arg0, %c2_i32 : i32
    %7 = arith.extui %6 : i1 to i32
    %c0_i32_2 = arith.constant 0 : i32
    %8 = arith.cmpi ne, %7, %c0_i32_2 : i32
    scf.if %8 {
      %c0 = arith.constant 0 : index
      %c0_3 = arith.constant 0 : index
      %c0_4 = arith.constant 0 : index
      %9 = vector.load %arg3[%c0, %c0_3, %c0_4] : memref<6x256x49xf32, #tpu.memory_space<vmem>>, vector<6x256x49xf32>
      %cst = arith.constant dense<0.000000e+00> : vector<6x256xf32>
      %10 = vector.multi_reduction <add>, %9, %cst [2] : vector<6x256x49xf32> to vector<6x256xf32>
      %cst_5 = arith.constant dense<0xFF800000> : vector<256xf32>
      %11 = vector.multi_reduction <maximumf>, %10, %cst_5 [0] : vector<6x256xf32> to vector<256xf32>
      %12 = vector.shape_cast %11 : vector<256xf32> to vector<1x256xf32>
      %cst_6 = arith.constant 0.0204081628 : f32
      %13 = vector.broadcast %cst_6 : f32 to vector<1x256xf32>
      %14 = arith.mulf %12, %13 : vector<1x256xf32>
      %15 = vector.shape_cast %14 : vector<1x256xf32> to vector<1x256xf32>
      %16 = vector.broadcast %15 : vector<1x256xf32> to vector<8x256xf32>
      %c0_7 = arith.constant 0 : index
      %c0_8 = arith.constant 0 : index
      %17 = vector.load %arg4[%c0_7, %c0_8] : memref<8x256xf32, #tpu.memory_space<vmem>>, vector<8x256xf32>
      tpu.vector_store %arg4[%c0_7, %c0_8], %16 {strides = array<i32>} : memref<8x256xf32, #tpu.memory_space<vmem>>, vector<8x256xf32>,
    } else {
    }
    return
  }
  func.func @transform_0(%arg0: i32) -> (i32, i32, i32) {
    %c0_i32 = arith.constant 0 : i32
    %c0_i32_0 = arith.constant 0 : i32
    %c0_i32_1 = arith.constant 0 : i32
    %c0_i32_2 = arith.constant 0 : i32
    return %c0_i32, %c0_i32_0, %c0_i32_1 : i32, i32, i32
  }
  func.func @transform_1(%arg0: i32) -> (i32, i32, i32) {
    %c0_i32 = arith.constant 0 : i32
    %c0_i32_0 = arith.constant 0 : i32
    %c0_i32_1 = arith.constant 0 : i32
    %c0_i32_2 = arith.constant 0 : i32
    return %c0_i32, %c0_i32_0, %c0_i32_1 : i32, i32, i32
  }
  func.func @transform_2(%arg0: i32) -> (i32, i32, i32) {
    %c0_i32 = arith.constant 0 : i32
    %c0_i32_0 = arith.constant 0 : i32
    %c0_i32_1 = arith.constant 0 : i32
    %c0_i32_2 = arith.constant 0 : i32
    return %c0_i32, %c0_i32_0, %c0_i32_1 : i32, i32, i32
  }
  func.func @transform_3(%arg0: i32) -> (i32, i32) {
    %c0_i32 = arith.constant 0 : i32
    %c0_i32_0 = arith.constant 0 : i32
    return %c0_i32, %arg0 : i32, i32
  }
}

</mosaic_0001>

<llo_original>
// kernel: tpu_custom_call.1
$region0: #{tpu_custom_call.1}
  #allocation0 [shape = 'u32[]', space=smem, size = 0x4, offset = 0x4, fixed_abs, tag = 'smem constant byte address 0x4 - core index']
  #allocation1 [shape = 'u32[144,128]{1,0:T(1,128)}', space=vmem, size = 0x12000, scoped, tag = 'internal scratch']
  %s0 = inlined_call_operand.vmem [shape: f32[10,256,49], index: 0, kind: input, shape index: {}]
  %s1 = inlined_call_operand.vmem [shape: f32[8,256,49], index: 1, kind: input, shape index: {}]
  %s2 = inlined_call_operand.vmem [shape: f32[6,256,49], index: 2, kind: input, shape index: {}]
  %s3 = inlined_call_operand.hbm [shape: f32[8,768], index: 3, kind: output, shape index: {}]
  %s4 = sld [smem:[#allocation0]]
  $region57: #{tpu_custom_call.1} parent=0
    _
  %s6 = ssub.s32 1, %s4
  %s7 = scalar_select 0, %s6, %s4
  $region1: #{tpu_custom_call.1} parent=0
    #allocation2 [shape = 'u8[16384]{0}', space=vmem, size = 0x4000, scoped, tag = 'output window, operand 0']
    #allocation3 [shape = 's32[2]{0}', space=sflag, size = 0x8, scoped, tag = 'scoped memory for tpu_custom_call.1']
    %8 = vsyncpa [#allocation3], 0
    %s9 = scalar_lea.sflag [#allocation3], 1
    %10 = vsyncpa %s9, 0
    loop: start=0, step=1, limit=5
    $region2: #{tpu_custom_call.1} parent=1 // loop_pre_header
      _
    $region3: #{tpu_custom_call.1} parent=1 // loop_header
      %s12 = sphi 0, %s16
      %p13 = scmp.ge.s32.totalorder %s12, 5
      %s20 = sphi 0, %s20
      %s22 = sphi 0, %s20
      %s23 = sphi 0, %s22
      %s37 = sphi 0, %s23
      %s41 = sphi 0, %s41
      %s43 = sphi 0, %s41
      %s44 = sphi 0, %s43
      %s58 = sphi 0, %s44
      %s62 = sphi 0, %s62
      %s64 = sphi 0, %s62
      %s65 = sphi 0, %s64
      %s79 = sphi 0, %s65
      %s85 = sphi 0, %s87
      %s88 = sphi 0, %s85
      %s89 = sphi 0, %s88
      %s105 = sphi 0, %s89
    $region4: #{tpu_custom_call.1} parent=1 // loop_header_branch
      %15 = sbr.rel (%p13) target = $region8
    $region5: #{tpu_custom_call.1} parent=1 // loop_body
      %s17 = ssub.s32 %s12, 1
      %s18 = ssub.s32 %s12, 2
      %s19 = sadd.s32 %s12, 1
      %s21 = sadd.s32 %s20, 1
      %p24 = scmp.eq.s32.totalorder %s12, 2
      %p25 = scmp.ne.s32.totalorder %s20, %s22
      %p26 = scmp.eq.s32.totalorder %s12, 0
      %p27 = por %p25, %p26
      %p28 = scmp.ne.s32.totalorder %s20, %s22
      %p29 = scmp.eq.s32.totalorder %s17, 2
      %p30 = por %p28, %p29
      %p31 = scmp.ne.s32.totalorder %s22, %s23
      %p32 = scmp.eq.s32.totalorder %s17, 0
      %p33 = por %p31, %p32
      %p34 = scmp.ne.s32.totalorder %s22, %s23
      %p35 = scmp.eq.s32.totalorder %s18, 2
      %p36 = por %p34, %p35
      %p38 = scmp.ne.s32.totalorder %s23, %s37
      %p39 = scmp.eq.s32.totalorder %s18, 0
      %p40 = por %p38, %p39
      %s42 = sadd.s32 %s41, 1
      %p45 = scmp.eq.s32.totalorder %s12, 2
      %p46 = scmp.ne.s32.totalorder %s41, %s43
      %p47 = scmp.eq.s32.totalorder %s12, 0
      %p48 = por %p46, %p47
      %p49 = scmp.ne.s32.totalorder %s41, %s43
      %p50 = scmp.eq.s32.totalorder %s17, 2
      %p51 = por %p49, %p50
      %p52 = scmp.ne.s32.totalorder %s43, %s44
      %p53 = scmp.eq.s32.totalorder %s17, 0
      %p54 = por %p52, %p53
      %p55 = scmp.ne.s32.totalorder %s43, %s44
      %p56 = scmp.eq.s32.totalorder %s18, 2
      %p57 = por %p55, %p56
      %p59 = scmp.ne.s32.totalorder %s44, %s58
      %p60 = scmp.eq.s32.totalorder %s18, 0
      %p61 = por %p59, %p60
      %s63 = sadd.s32 %s62, 1
      %p66 = scmp.eq.s32.totalorder %s12, 2
      %p67 = scmp.ne.s32.totalorder %s62, %s64
      %p68 = scmp.eq.s32.totalorder %s12, 0
      %p69 = por %p67, %p68
      %p70 = scmp.ne.s32.totalorder %s62, %s64
      %p71 = scmp.eq.s32.totalorder %s17, 2
      %p72 = por %p70, %p71
      %p73 = scmp.ne.s32.totalorder %s64, %s65
      %p74 = scmp.eq.s32.totalorder %s17, 0
      %p75 = por %p73, %p74
      %p76 = scmp.ne.s32.totalorder %s64, %s65
      %p77 = scmp.eq.s32.totalorder %s18, 2
      %p78 = por %p76, %p77
      %p80 = scmp.ne.s32.totalorder %s65, %s79
      %p81 = scmp.eq.s32.totalorder %s18, 0
      %p82 = por %p80, %p81
      %s83 = ssub.s32 %s12, %s19
      %p84 = scmp.eq.s32.totalorder %s83, 0
      %s86 = sadd.s32 %s85, 1
      %s87 = scalar_select %p84, %s85, %s86
      %p90 = pneg %p84
      %p91 = scmp.eq.s32.totalorder %s12, 2
      %p92 = por %p90, %p91
      %p93 = scmp.ne.s32.totalorder %s85, %s88
      %p94 = scmp.eq.s32.totalorder %s12, 0
      %p95 = por %p93, %p94
      %p96 = scmp.ne.s32.totalorder %s85, %s88
      %p97 = scmp.eq.s32.totalorder %s17, 2
      %p98 = por %p96, %p97
      %p99 = scmp.ne.s32.totalorder %s88, %s89
      %p100 = scmp.eq.s32.totalorder %s17, 0
      %p101 = por %p99, %p100
      %p102 = scmp.ne.s32.totalorder %s88, %s89
      %p103 = scmp.eq.s32.totalorder %s18, 2
      %p104 = por %p102, %p103
      %p106 = scmp.ne.s32.totalorder %s89, %s105
      %p107 = scmp.eq.s32.totalorder %s18, 0
      %p108 = por %p106, %p107
      %p109 = scmp.le.s32.totalorder 1, %s12
      %p110 = scmp.lt.s32.totalorder %s12, 4
      %p111 = pnand %p109, %p110
      %p112 = pneg %p111
      // Predicated region
      $region9: #{tpu_custom_call.1} parent=5 // pred_check
        _
      $region10: #{tpu_custom_call.1} parent=5 // pred_check_branch
        %114 = sbr.rel (%p111) target = $region12
      $region11: #{tpu_custom_call.1} parent=5 // pred_region
        %s115 = ssub.s32 %s12, 1
        // Predicated region
        $region13: #{tpu_custom_call.1} parent=11 // pred_check
          %p116 = pneg %p33
        $region14: #{tpu_custom_call.1} parent=11 // pred_check_branch
          %118 = sbr.rel (%p116) target = $region16
        $region15: #{tpu_custom_call.1} parent=11 // pred_region
          _
        $region16: #{tpu_custom_call.1} parent=11 // pred_fallthru
          _
        // Predicated region
        $region17: #{tpu_custom_call.1} parent=11 // pred_check
          %p119 = pneg %p54
        $region18: #{tpu_custom_call.1} parent=11 // pred_check_branch
          %121 = sbr.rel (%p119) target = $region20
        $region19: #{tpu_custom_call.1} parent=11 // pred_region
          _
        $region20: #{tpu_custom_call.1} parent=11 // pred_fallthru
          _
        // Predicated region
        $region21: #{tpu_custom_call.1} parent=11 // pred_check
          %p122 = pneg %p75
        $region22: #{tpu_custom_call.1} parent=11 // pred_check_branch
          %124 = sbr.rel (%p122) target = $region24
        $region23: #{tpu_custom_call.1} parent=11 // pred_region
          _
        $region24: #{tpu_custom_call.1} parent=11 // pred_fallthru
          _
      $region12: #{tpu_custom_call.1} parent=5 // pred_fallthru
        _
      %p125 = scmp.lt.s32.totalorder %s12, 3
      // Predicated region
      $region25: #{tpu_custom_call.1} parent=5 // pred_check
        %p126 = pneg %p125
      $region26: #{tpu_custom_call.1} parent=5 // pred_check_branch
        %128 = sbr.rel (%p126) target = $region28
      $region27: #{tpu_custom_call.1} parent=5 // pred_region
        _
      $region28: #{tpu_custom_call.1} parent=5 // pred_fallthru
        _
      %p129 = scmp.le.s32.totalorder 1, %s12
      %p130 = scmp.lt.s32.totalorder %s12, 4
      %p131 = pnand %p129, %p130
      %p132 = pneg %p131
      // Predicated region
      $region29: #{tpu_custom_call.1} parent=5 // pred_check
        _
      $region30: #{tpu_custom_call.1} parent=5 // pred_check_branch
        %134 = sbr.rel (%p131) target = $region32
      $region31: #{tpu_custom_call.1} parent=5 // pred_region
        %s135 = ssub.s32 %s12, 1
        %p136 = pneg %p33
        %p137 = pneg %p30
        %p138 = pneg %p54
        %p139 = pneg %p51
        %p140 = pneg %p75
        %p141 = pneg %p72
        %p142 = pneg %p101
        %p143 = pneg %p98
        %s144 = sand.u32 %s88, 1
        %s145 = scalar_lea.sflag [#allocation3], %s144
        %s146 = sand.u32 %s88, 1
        %s147 = smul.addr %s146, 16
        %s148 = scalar_lea.vmem [#allocation2], %s147
        %s149 = smul.u32 2, %s17
        %p150 = scmp.eq.s32.totalorder %s17, 0
        // Predicated region
        $region33: #{tpu_custom_call.1} parent=31 // pred_check
          %p151 = pneg %p150
        $region34: #{tpu_custom_call.1} parent=31 // pred_check_branch
          %153 = sbr.rel (%p151) target = $region36
        $region35: #{tpu_custom_call.1} parent=31 // pred_region
          %v154 = vld [vmem:[%s0] sm:$0xff]
          %v155 = vld [vmem:[%s0 + $0x8] sm:$0xff]
          %v156 = vld [vmem:[%s0 + $0x10] sm:$0xff]
          %v157 = vld [vmem:[%s0 + $0x18] sm:$0xff]
          %v158 = vld [vmem:[%s0 + $0x20] sm:$0xff]
          %v159 = vld [vmem:[%s0 + $0x28] sm:$0xff]
          %v160 = vld [vmem:[%s0 + $0x30] sm:$0xff]
          %v161 = vld [vmem:[%s0 + $0x38] sm:$0xff]
          %v162 = vld [vmem:[%s0 + $0x40] sm:$0xff]
          %v163 = vld [vmem:[%s0 + $0x48] sm:$0xff]
          %v164 = vld [vmem:[%s0 + $0x50] sm:$0xff]
          %v165 = vld [vmem:[%s0 + $0x58] sm:$0xff]
          %v166 = vld [vmem:[%s0 + $0x60] sm:$0xff]
          %v167 = vld [vmem:[%s0 + $0x68] sm:$0xff]
          %v168 = vld [vmem:[%s0 + $0x70] sm:$0xff]
          %v169 = vld [vmem:[%s0 + $0x78] sm:$0xff]
          %v170 = vld [vmem:[%s0 + $0x80] sm:$0xff]
          %v171 = vld [vmem:[%s0 + $0x88] sm:$0xff]
          %v172 = vld [vmem:[%s0 + $0x90] sm:$0xff]
          %v173 = vld [vmem:[%s0 + $0x98] sm:$0xff]
          %v174 = vld [vmem:[%s0 + $0xa0] sm:$0xff]
          %v175 = vld [vmem:[%s0 + $0xa8] sm:$0xff]
          %v176 = vld [vmem:[%s0 + $0xb0] sm:$0xff]
          %v177 = vld [vmem:[%s0 + $0xb8] sm:$0xff]
          %v178 = vld [vmem:[%s0 + $0xc0] sm:$0xff]
          %v179 = vld [vmem:[%s0 + $0xc8] sm:$0xff]
          %v180 = vld [vmem:[%s0 + $0xd0] sm:$0xff]
          %v181 = vld [vmem:[%s0 + $0xd8] sm:$0xff]
          %v182 = vld [vmem:[%s0 + $0xe0] sm:$0xff]
          %v183 = vld [vmem:[%s0 + $0xe8] sm:$0xff]
          %v184 = vld [vmem:[%s0 + $0xf0] sm:$0xff]
          %v185 = vld [vmem:[%s0 + $0xf8] sm:$0xff]
          %v186 = vld [vmem:[%s0 + $0x100] sm:$0xff]
          %v187 = vld [vmem:[%s0 + $0x108] sm:$0xff]
          %v188 = vld [vmem:[%s0 + $0x110] sm:$0xff]
          %v189 = vld [vmem:[%s0 + $0x118] sm:$0xff]
          %v190 = vld [vmem:[%s0 + $0x120] sm:$0xff]
          %v191 = vld [vmem:[%s0 + $0x128] sm:$0xff]
          %v192 = vld [vmem:[%s0 + $0x130] sm:$0xff]
          %v193 = vld [vmem:[%s0 + $0x138] sm:$0xff]
          %v194 = vld [vmem:[%s0 + $0x140] sm:$0xff]
          %v195 = vld [vmem:[%s0 + $0x148] sm:$0xff]
          %v196 = vld [vmem:[%s0 + $0x150] sm:$0xff]
          %v197 = vld [vmem:[%s0 + $0x158] sm:$0xff]
          %v198 = vld [vmem:[%s0 + $0x160] sm:$0xff]
          %v199 = vld [vmem:[%s0 + $0x168] sm:$0xff]
          %v200 = vld [vmem:[%s0 + $0x170] sm:$0xff]
          %v201 = vld [vmem:[%s0 + $0x178] sm:$0xff]
          %v202 = vld [vmem:[%s0 + $0x180] sm:$0xff]
          %v203 = vld [vmem:[%s0 + $0x188] sm:$0xff]
          %v204 = vld [vmem:[%s0 + $0x190] sm:$0xff]
          %v205 = vld [vmem:[%s0 + $0x198] sm:$0xff]
          %v206 = vld [vmem:[%s0 + $0x1a0] sm:$0xff]
          %v207 = vld [vmem:[%s0 + $0x1a8] sm:$0xff]
          %v208 = vld [vmem:[%s0 + $0x1b0] sm:$0xff]
          %v209 = vld [vmem:[%s0 + $0x1b8] sm:$0xff]
          %v210 = vld [vmem:[%s0 + $0x1c0] sm:$0xff]
          %v211 = vld [vmem:[%s0 + $0x1c8] sm:$0xff]
          %v212 = vld [vmem:[%s0 + $0x1d0] sm:$0xff]
          %v213 = vld [vmem:[%s0 + $0x1d8] sm:$0xff]
          %v214 = vld [vmem:[%s0 + $0x1e0] sm:$0xff]
          %v215 = vld [vmem:[%s0 + $0x1e8] sm:$0xff]
          %v216 = vld [vmem:[%s0 + $0x1f0] sm:$0xff]
          %v217 = vld [vmem:[%s0 + $0x1f8] sm:$0xff]
          %v218 = vld [vmem:[%s0 + $0x200] sm:$0xff]
          %v219 = vld [vmem:[%s0 + $0x208] sm:$0xff]
          %v220 = vld [vmem:[%s0 + $0x210] sm:$0xff]
          %v221 = vld [vmem:[%s0 + $0x218] sm:$0xff]
          %v222 = vld [vmem:[%s0 + $0x220] sm:$0xff]
          %v223 = vld [vmem:[%s0 + $0x228] sm:$0xff]
          %v224 = vld [vmem:[%s0 + $0x230] sm:$0xff]
          %v225 = vld [vmem:[%s0 + $0x238] sm:$0xff]
          %v226 = vld [vmem:[%s0 + $0x240] sm:$0xff]
          %v227 = vld [vmem:[%s0 + $0x248] sm:$0xff]
          %v228 = vld [vmem:[%s0 + $0x250] sm:$0xff]
          %v229 = vld [vmem:[%s0 + $0x258] sm:$0xff]
          %v230 = vld [vmem:[%s0 + $0x260] sm:$0xff]
          %v231 = vld [vmem:[%s0 + $0x268] sm:$0xff]
          %v232 = vld [vmem:[%s0 + $0x270] sm:$0xff]
          %v233 = vld [vmem:[%s0 + $0x278] sm:$0xff]
          %v234 = vld [vmem:[%s0 + $0x280] sm:$0xff]
          %v235 = vld [vmem:[%s0 + $0x288] sm:$0xff]
          %v236 = vld [vmem:[%s0 + $0x290] sm:$0xff]
          %v237 = vld [vmem:[%s0 + $0x298] sm:$0xff]
          %v238 = vld [vmem:[%s0 + $0x2a0] sm:$0xff]
          %v239 = vld [vmem:[%s0 + $0x2a8] sm:$0xff]
          %v240 = vld [vmem:[%s0 + $0x2b0] sm:$0xff]
          %v241 = vld [vmem:[%s0 + $0x2b8] sm:$0xff]
          %v242 = vld [vmem:[%s0 + $0x2c0] sm:$0xff]
          %v243 = vld [vmem:[%s0 + $0x2c8] sm:$0xff]
          %v244 = vld [vmem:[%s0 + $0x2d0] sm:$0xff]
          %v245 = vld [vmem:[%s0 + $0x2d8] sm:$0xff]
          %v246 = vld [vmem:[%s0 + $0x2e0] sm:$0xff]
          %v247 = vld [vmem:[%s0 + $0x2e8] sm:$0xff]
          %v248 = vld [vmem:[%s0 + $0x2f0] sm:$0xff]
          %v249 = vld [vmem:[%s0 + $0x2f8] sm:$0xff]
          %v250 = vld [vmem:[%s0 + $0x300] sm:$0xff]
          %v251 = vld [vmem:[%s0 + $0x308] sm:$0xff]
          %v252 = vld [vmem:[%s0 + $0x310] sm:$0xff]
          %v253 = vld [vmem:[%s0 + $0x318] sm:$0xff]
          %v254 = vld [vmem:[%s0 + $0x320] sm:$0xff]
          %v255 = vld [vmem:[%s0 + $0x328] sm:$0xff]
          %v256 = vld [vmem:[%s0 + $0x330] sm:$0xff]
          %v257 = vld [vmem:[%s0 + $0x338] sm:$0xff]
          %v258 = vld [vmem:[%s0 + $0x340] sm:$0xff]
          %v259 = vld [vmem:[%s0 + $0x348] sm:$0xff]
          %v260 = vld [vmem:[%s0 + $0x350] sm:$0xff]
          %v261 = vld [vmem:[%s0 + $0x358] sm:$0xff]
          %v262 = vld [vmem:[%s0 + $0x360] sm:$0xff]
          %v263 = vld [vmem:[%s0 + $0x368] sm:$0xff]
          %v264 = vld [vmem:[%s0 + $0x370] sm:$0xff]
          %v265 = vld [vmem:[%s0 + $0x378] sm:$0xff]
          %v266 = vld [vmem:[%s0 + $0x380] sm:$0xff]
          %v267 = vld [vmem:[%s0 + $0x388] sm:$0xff]
          %v268 = vld [vmem:[%s0 + $0x390] sm:$0xff]
          %v269 = vld [vmem:[%s0 + $0x398] sm:$0xff]
          %v270 = vld [vmem:[%s0 + $0x3a0] sm:$0xff]
          %v271 = vld [vmem:[%s0 + $0x3a8] sm:$0xff]
          %v272 = vld [vmem:[%s0 + $0x3b0] sm:$0xff]
          %v273 = vld [vmem:[%s0 + $0x3b8] sm:$0xff]
          %v274 = vld [vmem:[%s0 + $0x3c0] sm:$0xff]
          %v275 = vld [vmem:[%s0 + $0x3c8] sm:$0xff]
          %v276 = vld [vmem:[%s0 + $0x3d0] sm:$0xff]
          %v277 = vld [vmem:[%s0 + $0x3d8] sm:$0xff]
          %v278 = vld [vmem:[%s0 + $0x3e0] sm:$0xff]
          %v279 = vld [vmem:[%s0 + $0x3e8] sm:$0xff]
          %v280 = vld [vmem:[%s0 + $0x3f0] sm:$0xff]
          %v281 = vld [vmem:[%s0 + $0x3f8] sm:$0xff]
          %v282 = vld [vmem:[%s0 + $0x400] sm:$0xff]
          %v283 = vld [vmem:[%s0 + $0x408] sm:$0xff]
          %v284 = vld [vmem:[%s0 + $0x410] sm:$0xff]
          %v285 = vld [vmem:[%s0 + $0x418] sm:$0xff]
          %v286 = vld [vmem:[%s0 + $0x420] sm:$0xff]
          %v287 = vld [vmem:[%s0 + $0x428] sm:$0xff]
          %v288 = vld [vmem:[%s0 + $0x430] sm:$0xff]
          %v289 = vld [vmem:[%s0 + $0x438] sm:$0xff]
          %v290 = vld [vmem:[%s0 + $0x440] sm:$0xff]
          %v291 = vld [vmem:[%s0 + $0x448] sm:$0xff]
          %v292 = vld [vmem:[%s0 + $0x450] sm:$0xff]
          %v293 = vld [vmem:[%s0 + $0x458] sm:$0xff]
          %v294 = vld [vmem:[%s0 + $0x460] sm:$0xff]
          %v295 = vld [vmem:[%s0 + $0x468] sm:$0xff]
          %v296 = vld [vmem:[%s0 + $0x470] sm:$0xff]
          %v297 = vld [vmem:[%s0 + $0x478] sm:$0xff]
          %v298 = vld [vmem:[%s0 + $0x480] sm:$0xff]
          %v299 = vld [vmem:[%s0 + $0x488] sm:$0xff]
          %v300 = vld [vmem:[%s0 + $0x490] sm:$0xff]
          %v301 = vld [vmem:[%s0 + $0x498] sm:$0xff]
          %v302 = vld [vmem:[%s0 + $0x4a0] sm:$0xff]
          %v303 = vld [vmem:[%s0 + $0x4a8] sm:$0xff]
          %v304 = vld [vmem:[%s0 + $0x4b0] sm:$0xff]
          %v305 = vld [vmem:[%s0 + $0x4b8] sm:$0xff]
          %v306 = vld [vmem:[%s0 + $0x4c0] sm:$0xff]
          %v307 = vld [vmem:[%s0 + $0x4c8] sm:$0xff]
          %v308 = vld [vmem:[%s0 + $0x4d0] sm:$0xff]
          %v309 = vld [vmem:[%s0 + $0x4d8] sm:$0xff]
          %v310 = vld [vmem:[%s0 + $0x4e0] sm:$0xff]
          %v311 = vld [vmem:[%s0 + $0x4e8] sm:$0xff]
          %v312 = vld [vmem:[%s0 + $0x4f0] sm:$0xff]
          %v313 = vld [vmem:[%s0 + $0x4f8] sm:$0xff]
          %v314 = vld [vmem:[%s0 + $0x500] sm:$0xff]
          %v315 = vld [vmem:[%s0 + $0x508] sm:$0xff]
          %v316 = vld [vmem:[%s0 + $0x510] sm:$0xff]
          %v317 = vld [vmem:[%s0 + $0x518] sm:$0xff]
          %v318 = vld [vmem:[%s0 + $0x520] sm:$0xff]
          %v319 = vld [vmem:[%s0 + $0x528] sm:$0xff]
          %v320 = vld [vmem:[%s0 + $0x530] sm:$0xff]
          %v321 = vld [vmem:[%s0 + $0x538] sm:$0xff]
          %v322 = vld [vmem:[%s0 + $0x540] sm:$0xff]
          %v323 = vld [vmem:[%s0 + $0x548] sm:$0xff]
          %v324 = vld [vmem:[%s0 + $0x550] sm:$0xff]
          %v325 = vld [vmem:[%s0 + $0x558] sm:$0xff]
          %v326 = vld [vmem:[%s0 + $0x560] sm:$0xff]
          %v327 = vld [vmem:[%s0 + $0x568] sm:$0xff]
          %v328 = vld [vmem:[%s0 + $0x570] sm:$0xff]
          %v329 = vld [vmem:[%s0 + $0x578] sm:$0xff]
          %v330 = vld [vmem:[%s0 + $0x580] sm:$0xff]
          %v331 = vld [vmem:[%s0 + $0x588] sm:$0xff]
          %v332 = vld [vmem:[%s0 + $0x590] sm:$0xff]
          %v333 = vld [vmem:[%s0 + $0x598] sm:$0xff]
          %v334 = vld [vmem:[%s0 + $0x5a0] sm:$0xff]
          %v335 = vld [vmem:[%s0 + $0x5a8] sm:$0xff]
          %v336 = vld [vmem:[%s0 + $0x5b0] sm:$0xff]
          %v337 = vld [vmem:[%s0 + $0x5b8] sm:$0xff]
          %v338 = vld [vmem:[%s0 + $0x5c0] sm:$0xff]
          %v339 = vld [vmem:[%s0 + $0x5c8] sm:$0xff]
          %v340 = vld [vmem:[%s0 + $0x5d0] sm:$0xff]
          %v341 = vld [vmem:[%s0 + $0x5d8] sm:$0xff]
          %v342 = vld [vmem:[%s0 + $0x5e0] sm:$0xff]
          %v343 = vld [vmem:[%s0 + $0x5e8] sm:$0xff]
          %v344 = vld [vmem:[%s0 + $0x5f0] sm:$0xff]
          %v345 = vld [vmem:[%s0 + $0x5f8] sm:$0xff]
          %v346 = vld [vmem:[%s0 + $0x600] sm:$0xff]
          %v347 = vld [vmem:[%s0 + $0x608] sm:$0xff]
          %v348 = vld [vmem:[%s0 + $0x610] sm:$0xff]
          %v349 = vld [vmem:[%s0 + $0x618] sm:$0xff]
          %v350 = vld [vmem:[%s0 + $0x620] sm:$0xff]
          %v351 = vld [vmem:[%s0 + $0x628] sm:$0xff]
          %v352 = vld [vmem:[%s0 + $0x630] sm:$0xff]
          %v353 = vld [vmem:[%s0 + $0x638] sm:$0xff]
          %v354 = vld [vmem:[%s0 + $0x640] sm:$0xff]
          %v355 = vld [vmem:[%s0 + $0x648] sm:$0xff]
          %v356 = vld [vmem:[%s0 + $0x650] sm:$0xff]
          %v357 = vld [vmem:[%s0 + $0x658] sm:$0xff]
          %v358 = vld [vmem:[%s0 + $0x660] sm:$0xff]
          %v359 = vld [vmem:[%s0 + $0x668] sm:$0xff]
          %v360 = vld [vmem:[%s0 + $0x670] sm:$0xff]
          %v361 = vld [vmem:[%s0 + $0x678] sm:$0xff]
          %v362 = vld [vmem:[%s0 + $0x680] sm:$0xff]
          %v363 = vld [vmem:[%s0 + $0x688] sm:$0xff]
          %v364 = vld [vmem:[%s0 + $0x690] sm:$0xff]
          %v365 = vld [vmem:[%s0 + $0x698] sm:$0xff]
          %v366 = vld [vmem:[%s0 + $0x6a0] sm:$0xff]
          %v367 = vld [vmem:[%s0 + $0x6a8] sm:$0xff]
          %v368 = vld [vmem:[%s0 + $0x6b0] sm:$0xff]
          %v369 = vld [vmem:[%s0 + $0x6b8] sm:$0xff]
          %v370 = vld [vmem:[%s0 + $0x6c0] sm:$0xff]
          %v371 = vld [vmem:[%s0 + $0x6c8] sm:$0xff]
          %v372 = vld [vmem:[%s0 + $0x6d0] sm:$0xff]
          %v373 = vld [vmem:[%s0 + $0x6d8] sm:$0xff]
          %v374 = vld [vmem:[%s0 + $0x6e0] sm:$0xff]
          %v375 = vld [vmem:[%s0 + $0x6e8] sm:$0xff]
          %v376 = vld [vmem:[%s0 + $0x6f0] sm:$0xff]
          %v377 = vld [vmem:[%s0 + $0x6f8] sm:$0xff]
          %v378 = vld [vmem:[%s0 + $0x700] sm:$0xff]
          %v379 = vld [vmem:[%s0 + $0x708] sm:$0xff]
          %v380 = vld [vmem:[%s0 + $0x710] sm:$0xff]
          %v381 = vld [vmem:[%s0 + $0x718] sm:$0xff]
          %v382 = vld [vmem:[%s0 + $0x720] sm:$0xff]
          %v383 = vld [vmem:[%s0 + $0x728] sm:$0xff]
          %v384 = vld [vmem:[%s0 + $0x730] sm:$0xff]
          %v385 = vld [vmem:[%s0 + $0x738] sm:$0xff]
          %v386 = vld [vmem:[%s0 + $0x740] sm:$0xff]
          %v387 = vld [vmem:[%s0 + $0x748] sm:$0xff]
          %v388 = vld [vmem:[%s0 + $0x750] sm:$0xff]
          %v389 = vld [vmem:[%s0 + $0x758] sm:$0xff]
          %v390 = vld [vmem:[%s0 + $0x760] sm:$0xff]
          %v391 = vld [vmem:[%s0 + $0x768] sm:$0xff]
          %v392 = vld [vmem:[%s0 + $0x770] sm:$0xff]
          %v393 = vld [vmem:[%s0 + $0x778] sm:$0xff]
          %v394 = vld [vmem:[%s0 + $0x780] sm:$0xff]
          %v395 = vld [vmem:[%s0 + $0x788] sm:$0xff]
          %v396 = vld [vmem:[%s0 + $0x790] sm:$0xff]
          %v397 = vld [vmem:[%s0 + $0x798] sm:$0xff]
          %v398 = vld [vmem:[%s0 + $0x7a0] sm:$0xff]
          %v399 = vld [vmem:[%s0 + $0x7a8] sm:$0xff]
          %v400 = vld [vmem:[%s0 + $0x7b0] sm:$0xff]
          %v401 = vld [vmem:[%s0 + $0x7b8] sm:$0xff]
          %v402 = vld [vmem:[%s0 + $0x7c0] sm:$0xff]
          %v403 = vld [vmem:[%s0 + $0x7c8] sm:$0xff]
          %v404 = vld [vmem:[%s0 + $0x7d0] sm:$0xff]
          %v405 = vld [vmem:[%s0 + $0x7d8] sm:$0xff]
          %v406 = vld [vmem:[%s0 + $0x7e0] sm:$0xff]
          %v407 = vld [vmem:[%s0 + $0x7e8] sm:$0xff]
          %v408 = vld [vmem:[%s0 + $0x7f0] sm:$0xff]
          %v409 = vld [vmem:[%s0 + $0x7f8] sm:$0xff]
          %v410 = vld [vmem:[%s0 + $0x800] sm:$0xff]
          %v411 = vld [vmem:[%s0 + $0x808] sm:$0xff]
          %v412 = vld [vmem:[%s0 + $0x810] sm:$0xff]
          %v413 = vld [vmem:[%s0 + $0x818] sm:$0xff]
          %v414 = vld [vmem:[%s0 + $0x820] sm:$0xff]
          %v415 = vld [vmem:[%s0 + $0x828] sm:$0xff]
          %v416 = vld [vmem:[%s0 + $0x830] sm:$0xff]
          %v417 = vld [vmem:[%s0 + $0x838] sm:$0xff]
          %v418 = vld [vmem:[%s0 + $0x840] sm:$0xff]
          %v419 = vld [vmem:[%s0 + $0x848] sm:$0xff]
          %v420 = vld [vmem:[%s0 + $0x850] sm:$0xff]
          %v421 = vld [vmem:[%s0 + $0x858] sm:$0xff]
          %v422 = vld [vmem:[%s0 + $0x860] sm:$0xff]
          %v423 = vld [vmem:[%s0 + $0x868] sm:$0xff]
          %v424 = vld [vmem:[%s0 + $0x870] sm:$0xff]
          %v425 = vld [vmem:[%s0 + $0x878] sm:$0xff]
          %v426 = vld [vmem:[%s0 + $0x880] sm:$0xff]
          %v427 = vld [vmem:[%s0 + $0x888] sm:$0xff]
          %v428 = vld [vmem:[%s0 + $0x890] sm:$0xff]
          %v429 = vld [vmem:[%s0 + $0x898] sm:$0xff]
          %v430 = vld [vmem:[%s0 + $0x8a0] sm:$0xff]
          %v431 = vld [vmem:[%s0 + $0x8a8] sm:$0xff]
          %v432 = vld [vmem:[%s0 + $0x8b0] sm:$0xff]
          %v433 = vld [vmem:[%s0 + $0x8b8] sm:$0xff]
          %v434 = vld [vmem:[%s0 + $0x8c0] sm:$0xff]
          %v435 = vld [vmem:[%s0 + $0x8c8] sm:$0xff]
          %v436 = vld [vmem:[%s0 + $0x8d0] sm:$0xff]
          %v437 = vld [vmem:[%s0 + $0x8d8] sm:$0xff]
          %v438 = vld [vmem:[%s0 + $0x8e0] sm:$0xff]
          %v439 = vld [vmem:[%s0 + $0x8e8] sm:$0xff]
          %v440 = vld [vmem:[%s0 + $0x8f0] sm:$0xff]
          %v441 = vld [vmem:[%s0 + $0x8f8] sm:$0xff]
          %v442 = vld [vmem:[%s0 + $0x900] sm:$0xff]
          %v443 = vld [vmem:[%s0 + $0x908] sm:$0xff]
          %v444 = vld [vmem:[%s0 + $0x910] sm:$0xff]
          %v445 = vld [vmem:[%s0 + $0x918] sm:$0xff]
          %v446 = vld [vmem:[%s0 + $0x920] sm:$0xff]
          %v447 = vld [vmem:[%s0 + $0x928] sm:$0xff]
          %v448 = vld [vmem:[%s0 + $0x930] sm:$0xff]
          %v449 = vld [vmem:[%s0 + $0x938] sm:$0xff]
          %v450 = vld [vmem:[%s0 + $0x940] sm:$0xff]
          %v451 = vld [vmem:[%s0 + $0x948] sm:$0xff]
          %v452 = vld [vmem:[%s0 + $0x950] sm:$0xff]
          %v453 = vld [vmem:[%s0 + $0x958] sm:$0xff]
          %v454 = vld [vmem:[%s0 + $0x960] sm:$0xff]
          %v455 = vld [vmem:[%s0 + $0x968] sm:$0xff]
          %v456 = vld [vmem:[%s0 + $0x970] sm:$0xff]
          %v457 = vld [vmem:[%s0 + $0x978] sm:$0xff]
          %v458 = vld [vmem:[%s0 + $0x980] sm:$0xff]
          %v459 = vld [vmem:[%s0 + $0x988] sm:$0xff]
          %v460 = vld [vmem:[%s0 + $0x990] sm:$0xff]
          %v461 = vld [vmem:[%s0 + $0x998] sm:$0xff]
          %v462 = vld [vmem:[%s0 + $0x9a0] sm:$0xff]
          %v463 = vld [vmem:[%s0 + $0x9a8] sm:$0xff]
          %v464 = vld [vmem:[%s0 + $0x9b0] sm:$0xff]
          %v465 = vld [vmem:[%s0 + $0x9b8] sm:$0xff]
          %v466 = vld [vmem:[%s0 + $0x9c0] sm:$0xff]
          %v467 = vld [vmem:[%s0 + $0x9c8] sm:$0xff]
          %v468 = vld [vmem:[%s0 + $0x9d0] sm:$0xff]
          %v469 = vld [vmem:[%s0 + $0x9d8] sm:$0xff]
          %v470 = vld [vmem:[%s0 + $0x9e0] sm:$0xff]
          %v471 = vld [vmem:[%s0 + $0x9e8] sm:$0xff]
          %v472 = vld [vmem:[%s0 + $0x9f0] sm:$0xff]
          %v473 = vld [vmem:[%s0 + $0x9f8] sm:$0xff]
          %vm474 = vcmask 400384
          %v475 = vsel %vm474, %v154, 0.0
          %476 = vadd.xlane.f32.xlu0 %v475
          %v477 = vpop.xlane.xlu0 %476
          %v478 = vsel %vm474, %v155, 0.0
          %479 = vadd.xlane.f32.xlu0 %v478
          %v480 = vpop.xlane.xlu0 %479
          %v481 = vsel %vm474, %v156, 0.0
          %482 = vadd.xlane.f32.xlu0 %v481
          %v483 = vpop.xlane.xlu0 %482
          %v484 = vsel %vm474, %v157, 0.0
          %485 = vadd.xlane.f32.xlu0 %v484
          %v486 = vpop.xlane.xlu0 %485
          %v487 = vsel %vm474, %v158, 0.0
          %488 = vadd.xlane.f32.xlu0 %v487
          %v489 = vpop.xlane.xlu0 %488
          %v490 = vsel %vm474, %v159, 0.0
          %491 = vadd.xlane.f32.xlu0 %v490
          %v492 = vpop.xlane.xlu0 %491
          %v493 = vsel %vm474, %v160, 0.0
          %494 = vadd.xlane.f32.xlu0 %v493
          %v495 = vpop.xlane.xlu0 %494
          %v496 = vsel %vm474, %v161, 0.0
          %497 = vadd.xlane.f32.xlu0 %v496
          %v498 = vpop.xlane.xlu0 %497
          %v499 = vsel %vm474, %v162, 0.0
          %500 = vadd.xlane.f32.xlu0 %v499
          %v501 = vpop.xlane.xlu0 %500
          %v502 = vsel %vm474, %v163, 0.0
          %503 = vadd.xlane.f32.xlu0 %v502
          %v504 = vpop.xlane.xlu0 %503
          %v505 = vsel %vm474, %v164, 0.0
          %506 = vadd.xlane.f32.xlu0 %v505
          %v507 = vpop.xlane.xlu0 %506
          %v508 = vsel %vm474, %v165, 0.0
          %509 = vadd.xlane.f32.xlu0 %v508
          %v510 = vpop.xlane.xlu0 %509
          %v511 = vsel %vm474, %v166, 0.0
          %512 = vadd.xlane.f32.xlu0 %v511
          %v513 = vpop.xlane.xlu0 %512
          %v514 = vsel %vm474, %v167, 0.0
          %515 = vadd.xlane.f32.xlu0 %v514
          %v516 = vpop.xlane.xlu0 %515
          %v517 = vsel %vm474, %v168, 0.0
          %518 = vadd.xlane.f32.xlu0 %v517
          %v519 = vpop.xlane.xlu0 %518
          %v520 = vsel %vm474, %v169, 0.0
          %521 = vadd.xlane.f32.xlu0 %v520
          %v522 = vpop.xlane.xlu0 %521
          %v523 = vsel %vm474, %v170, 0.0
          %524 = vadd.xlane.f32.xlu0 %v523
          %v525 = vpop.xlane.xlu0 %524
          %v526 = vsel %vm474, %v171, 0.0
          %527 = vadd.xlane.f32.xlu0 %v526
          %v528 = vpop.xlane.xlu0 %527
          %v529 = vsel %vm474, %v172, 0.0
          %530 = vadd.xlane.f32.xlu0 %v529
          %v531 = vpop.xlane.xlu0 %530
          %v532 = vsel %vm474, %v173, 0.0
          %533 = vadd.xlane.f32.xlu0 %v532
          %v534 = vpop.xlane.xlu0 %533
          %v535 = vsel %vm474, %v174, 0.0
          %536 = vadd.xlane.f32.xlu0 %v535
          %v537 = vpop.xlane.xlu0 %536
          %v538 = vsel %vm474, %v175, 0.0
          %539 = vadd.xlane.f32.xlu0 %v538
          %v540 = vpop.xlane.xlu0 %539
          %v541 = vsel %vm474, %v176, 0.0
          %542 = vadd.xlane.f32.xlu0 %v541
          %v543 = vpop.xlane.xlu0 %542
          %v544 = vsel %vm474, %v177, 0.0
          %545 = vadd.xlane.f32.xlu0 %v544
          %v546 = vpop.xlane.xlu0 %545
          %v547 = vsel %vm474, %v178, 0.0
          %548 = vadd.xlane.f32.xlu0 %v547
          %v549 = vpop.xlane.xlu0 %548
          %v550 = vsel %vm474, %v179, 0.0
          %551 = vadd.xlane.f32.xlu0 %v550
          %v552 = vpop.xlane.xlu0 %551
          %v553 = vsel %vm474, %v180, 0.0
          %554 = vadd.xlane.f32.xlu0 %v553
          %v555 = vpop.xlane.xlu0 %554
          %v556 = vsel %vm474, %v181, 0.0
          %557 = vadd.xlane.f32.xlu0 %v556
          %v558 = vpop.xlane.xlu0 %557
          %v559 = vsel %vm474, %v182, 0.0
          %560 = vadd.xlane.f32.xlu0 %v559
          %v561 = vpop.xlane.xlu0 %560
          %v562 = vsel %vm474, %v183, 0.0
          %563 = vadd.xlane.f32.xlu0 %v562
          %v564 = vpop.xlane.xlu0 %563
          %v565 = vsel %vm474, %v184, 0.0
          %566 = vadd.xlane.f32.xlu0 %v565
          %v567 = vpop.xlane.xlu0 %566
          %v568 = vsel %vm474, %v185, 0.0
          %569 = vadd.xlane.f32.xlu0 %v568
          %v570 = vpop.xlane.xlu0 %569
          %v571 = vsel %vm474, %v186, 0.0
          %572 = vadd.xlane.f32.xlu0 %v571
          %v573 = vpop.xlane.xlu0 %572
          %v574 = vsel %vm474, %v187, 0.0
          %575 = vadd.xlane.f32.xlu0 %v574
          %v576 = vpop.xlane.xlu0 %575
          %v577 = vsel %vm474, %v188, 0.0
          %578 = vadd.xlane.f32.xlu0 %v577
          %v579 = vpop.xlane.xlu0 %578
          %v580 = vsel %vm474, %v189, 0.0
          %581 = vadd.xlane.f32.xlu0 %v580
          %v582 = vpop.xlane.xlu0 %581
          %v583 = vsel %vm474, %v190, 0.0
          %584 = vadd.xlane.f32.xlu0 %v583
          %v585 = vpop.xlane.xlu0 %584
          %v586 = vsel %vm474, %v191, 0.0
          %587 = vadd.xlane.f32.xlu0 %v586
          %v588 = vpop.xlane.xlu0 %587
          %v589 = vsel %vm474, %v192, 0.0
          %590 = vadd.xlane.f32.xlu0 %v589
          %v591 = vpop.xlane.xlu0 %590
          %v592 = vsel %vm474, %v193, 0.0
          %593 = vadd.xlane.f32.xlu0 %v592
          %v594 = vpop.xlane.xlu0 %593
          %v595 = vsel %vm474, %v194, 0.0
          %596 = vadd.xlane.f32.xlu0 %v595
          %v597 = vpop.xlane.xlu0 %596
          %v598 = vsel %vm474, %v195, 0.0
          %599 = vadd.xlane.f32.xlu0 %v598
          %v600 = vpop.xlane.xlu0 %599
          %v601 = vsel %vm474, %v196, 0.0
          %602 = vadd.xlane.f32.xlu0 %v601
          %v603 = vpop.xlane.xlu0 %602
          %v604 = vsel %vm474, %v197, 0.0
          %605 = vadd.xlane.f32.xlu0 %v604
          %v606 = vpop.xlane.xlu0 %605
          %v607 = vsel %vm474, %v198, 0.0
          %608 = vadd.xlane.f32.xlu0 %v607
          %v609 = vpop.xlane.xlu0 %608
          %v610 = vsel %vm474, %v199, 0.0
          %611 = vadd.xlane.f32.xlu0 %v610
          %v612 = vpop.xlane.xlu0 %611
          %v613 = vsel %vm474, %v200, 0.0
          %614 = vadd.xlane.f32.xlu0 %v613
          %v615 = vpop.xlane.xlu0 %614
          %v616 = vsel %vm474, %v201, 0.0
          %617 = vadd.xlane.f32.xlu0 %v616
          %v618 = vpop.xlane.xlu0 %617
          %v619 = vsel %vm474, %v202, 0.0
          %620 = vadd.xlane.f32.xlu0 %v619
          %v621 = vpop.xlane.xlu0 %620
          %v622 = vsel %vm474, %v203, 0.0
          %623 = vadd.xlane.f32.xlu0 %v622
          %v624 = vpop.xlane.xlu0 %623
          %v625 = vsel %vm474, %v204, 0.0
          %626 = vadd.xlane.f32.xlu0 %v625
          %v627 = vpop.xlane.xlu0 %626
          %v628 = vsel %vm474, %v205, 0.0
          %629 = vadd.xlane.f32.xlu0 %v628
          %v630 = vpop.xlane.xlu0 %629
          %v631 = vsel %vm474, %v206, 0.0
          %632 = vadd.xlane.f32.xlu0 %v631
          %v633 = vpop.xlane.xlu0 %632
          %v634 = vsel %vm474, %v207, 0.0
          %635 = vadd.xlane.f32.xlu0 %v634
          %v636 = vpop.xlane.xlu0 %635
          %v637 = vsel %vm474, %v208, 0.0
          %638 = vadd.xlane.f32.xlu0 %v637
          %v639 = vpop.xlane.xlu0 %638
          %v640 = vsel %vm474, %v209, 0.0
          %641 = vadd.xlane.f32.xlu0 %v640
          %v642 = vpop.xlane.xlu0 %641
          %v643 = vsel %vm474, %v210, 0.0
          %644 = vadd.xlane.f32.xlu0 %v643
          %v645 = vpop.xlane.xlu0 %644
          %v646 = vsel %vm474, %v211, 0.0
          %647 = vadd.xlane.f32.xlu0 %v646
          %v648 = vpop.xlane.xlu0 %647
          %v649 = vsel %vm474, %v212, 0.0
          %650 = vadd.xlane.f32.xlu0 %v649
          %v651 = vpop.xlane.xlu0 %650
          %v652 = vsel %vm474, %v213, 0.0
          %653 = vadd.xlane.f32.xlu0 %v652
          %v654 = vpop.xlane.xlu0 %653
          %v655 = vsel %vm474, %v214, 0.0
          %656 = vadd.xlane.f32.xlu0 %v655
          %v657 = vpop.xlane.xlu0 %656
          %v658 = vsel %vm474, %v215, 0.0
          %659 = vadd.xlane.f32.xlu0 %v658
          %v660 = vpop.xlane.xlu0 %659
          %v661 = vsel %vm474, %v216, 0.0
          %662 = vadd.xlane.f32.xlu0 %v661
          %v663 = vpop.xlane.xlu0 %662
          %v664 = vsel %vm474, %v217, 0.0
          %665 = vadd.xlane.f32.xlu0 %v664
          %v666 = vpop.xlane.xlu0 %665
          %v667 = vsel %vm474, %v218, 0.0
          %668 = vadd.xlane.f32.xlu0 %v667
          %v669 = vpop.xlane.xlu0 %668
          %v670 = vsel %vm474, %v219, 0.0
          %671 = vadd.xlane.f32.xlu0 %v670
          %v672 = vpop.xlane.xlu0 %671
          %v673 = vsel %vm474, %v220, 0.0
          %674 = vadd.xlane.f32.xlu0 %v673
          %v675 = vpop.xlane.xlu0 %674
          %v676 = vsel %vm474, %v221, 0.0
          %677 = vadd.xlane.f32.xlu0 %v676
          %v678 = vpop.xlane.xlu0 %677
          %v679 = vsel %vm474, %v222, 0.0
          %680 = vadd.xlane.f32.xlu0 %v679
          %v681 = vpop.xlane.xlu0 %680
          %v682 = vsel %vm474, %v223, 0.0
          %683 = vadd.xlane.f32.xlu0 %v682
          %v684 = vpop.xlane.xlu0 %683
          %v685 = vsel %vm474, %v224, 0.0
          %686 = vadd.xlane.f32.xlu0 %v685
          %v687 = vpop.xlane.xlu0 %686
          %v688 = vsel %vm474, %v225, 0.0
          %689 = vadd.xlane.f32.xlu0 %v688
          %v690 = vpop.xlane.xlu0 %689
          %v691 = vsel %vm474, %v226, 0.0
          %692 = vadd.xlane.f32.xlu0 %v691
          %v693 = vpop.xlane.xlu0 %692
          %v694 = vsel %vm474, %v227, 0.0
          %695 = vadd.xlane.f32.xlu0 %v694
          %v696 = vpop.xlane.xlu0 %695
          %v697 = vsel %vm474, %v228, 0.0
          %698 = vadd.xlane.f32.xlu0 %v697
          %v699 = vpop.xlane.xlu0 %698
          %v700 = vsel %vm474, %v229, 0.0
          %701 = vadd.xlane.f32.xlu0 %v700
          %v702 = vpop.xlane.xlu0 %701
          %v703 = vsel %vm474, %v230, 0.0
          %704 = vadd.xlane.f32.xlu0 %v703
          %v705 = vpop.xlane.xlu0 %704
          %v706 = vsel %vm474, %v231, 0.0
          %707 = vadd.xlane.f32.xlu0 %v706
          %v708 = vpop.xlane.xlu0 %707
          %v709 = vsel %vm474, %v232, 0.0
          %710 = vadd.xlane.f32.xlu0 %v709
          %v711 = vpop.xlane.xlu0 %710
          %v712 = vsel %vm474, %v233, 0.0
          %713 = vadd.xlane.f32.xlu0 %v712
          %v714 = vpop.xlane.xlu0 %713
          %v715 = vsel %vm474, %v234, 0.0
          %716 = vadd.xlane.f32.xlu0 %v715
          %v717 = vpop.xlane.xlu0 %716
          %v718 = vsel %vm474, %v235, 0.0
          %719 = vadd.xlane.f32.xlu0 %v718
          %v720 = vpop.xlane.xlu0 %719
          %v721 = vsel %vm474, %v236, 0.0
          %722 = vadd.xlane.f32.xlu0 %v721
          %v723 = vpop.xlane.xlu0 %722
          %v724 = vsel %vm474, %v237, 0.0
          %725 = vadd.xlane.f32.xlu0 %v724
          %v726 = vpop.xlane.xlu0 %725
          %v727 = vsel %vm474, %v238, 0.0
          %728 = vadd.xlane.f32.xlu0 %v727
          %v729 = vpop.xlane.xlu0 %728
          %v730 = vsel %vm474, %v239, 0.0
          %731 = vadd.xlane.f32.xlu0 %v730
          %v732 = vpop.xlane.xlu0 %731
          %v733 = vsel %vm474, %v240, 0.0
          %734 = vadd.xlane.f32.xlu0 %v733
          %v735 = vpop.xlane.xlu0 %734
          %v736 = vsel %vm474, %v241, 0.0
          %737 = vadd.xlane.f32.xlu0 %v736
          %v738 = vpop.xlane.xlu0 %737
          %v739 = vsel %vm474, %v242, 0.0
          %740 = vadd.xlane.f32.xlu0 %v739
          %v741 = vpop.xlane.xlu0 %740
          %v742 = vsel %vm474, %v243, 0.0
          %743 = vadd.xlane.f32.xlu0 %v742
          %v744 = vpop.xlane.xlu0 %743
          %v745 = vsel %vm474, %v244, 0.0
          %746 = vadd.xlane.f32.xlu0 %v745
          %v747 = vpop.xlane.xlu0 %746
          %v748 = vsel %vm474, %v245, 0.0
          %749 = vadd.xlane.f32.xlu0 %v748
          %v750 = vpop.xlane.xlu0 %749
          %v751 = vsel %vm474, %v246, 0.0
          %752 = vadd.xlane.f32.xlu0 %v751
          %v753 = vpop.xlane.xlu0 %752
          %v754 = vsel %vm474, %v247, 0.0
          %755 = vadd.xlane.f32.xlu0 %v754
          %v756 = vpop.xlane.xlu0 %755
          %v757 = vsel %vm474, %v248, 0.0
          %758 = vadd.xlane.f32.xlu0 %v757
          %v759 = vpop.xlane.xlu0 %758
          %v760 = vsel %vm474, %v249, 0.0
          %761 = vadd.xlane.f32.xlu0 %v760
          %v762 = vpop.xlane.xlu0 %761
          %v763 = vsel %vm474, %v250, 0.0
          %764 = vadd.xlane.f32.xlu0 %v763
          %v765 = vpop.xlane.xlu0 %764
          %v766 = vsel %vm474, %v251, 0.0
          %767 = vadd.xlane.f32.xlu0 %v766
          %v768 = vpop.xlane.xlu0 %767
          %v769 = vsel %vm474, %v252, 0.0
          %770 = vadd.xlane.f32.xlu0 %v769
          %v771 = vpop.xlane.xlu0 %770
          %v772 = vsel %vm474, %v253, 0.0
          %773 = vadd.xlane.f32.xlu0 %v772
          %v774 = vpop.xlane.xlu0 %773
          %v775 = vsel %vm474, %v254, 0.0
          %776 = vadd.xlane.f32.xlu0 %v775
          %v777 = vpop.xlane.xlu0 %776
          %v778 = vsel %vm474, %v255, 0.0
          %779 = vadd.xlane.f32.xlu0 %v778
          %v780 = vpop.xlane.xlu0 %779
          %v781 = vsel %vm474, %v256, 0.0
          %782 = vadd.xlane.f32.xlu0 %v781
          %v783 = vpop.xlane.xlu0 %782
          %v784 = vsel %vm474, %v257, 0.0
          %785 = vadd.xlane.f32.xlu0 %v784
          %v786 = vpop.xlane.xlu0 %785
          %v787 = vsel %vm474, %v258, 0.0
          %788 = vadd.xlane.f32.xlu0 %v787
          %v789 = vpop.xlane.xlu0 %788
          %v790 = vsel %vm474, %v259, 0.0
          %791 = vadd.xlane.f32.xlu0 %v790
          %v792 = vpop.xlane.xlu0 %791
          %v793 = vsel %vm474, %v260, 0.0
          %794 = vadd.xlane.f32.xlu0 %v793
          %v795 = vpop.xlane.xlu0 %794
          %v796 = vsel %vm474, %v261, 0.0
          %797 = vadd.xlane.f32.xlu0 %v796
          %v798 = vpop.xlane.xlu0 %797
          %v799 = vsel %vm474, %v262, 0.0
          %800 = vadd.xlane.f32.xlu0 %v799
          %v801 = vpop.xlane.xlu0 %800
          %v802 = vsel %vm474, %v263, 0.0
          %803 = vadd.xlane.f32.xlu0 %v802
          %v804 = vpop.xlane.xlu0 %803
          %v805 = vsel %vm474, %v264, 0.0
          %806 = vadd.xlane.f32.xlu0 %v805
          %v807 = vpop.xlane.xlu0 %806
          %v808 = vsel %vm474, %v265, 0.0
          %809 = vadd.xlane.f32.xlu0 %v808
          %v810 = vpop.xlane.xlu0 %809
          %v811 = vsel %vm474, %v266, 0.0
          %812 = vadd.xlane.f32.xlu0 %v811
          %v813 = vpop.xlane.xlu0 %812
          %v814 = vsel %vm474, %v267, 0.0
          %815 = vadd.xlane.f32.xlu0 %v814
          %v816 = vpop.xlane.xlu0 %815
          %v817 = vsel %vm474, %v268, 0.0
          %818 = vadd.xlane.f32.xlu0 %v817
          %v819 = vpop.xlane.xlu0 %818
          %v820 = vsel %vm474, %v269, 0.0
          %821 = vadd.xlane.f32.xlu0 %v820
          %v822 = vpop.xlane.xlu0 %821
          %v823 = vsel %vm474, %v270, 0.0
          %824 = vadd.xlane.f32.xlu0 %v823
          %v825 = vpop.xlane.xlu0 %824
          %v826 = vsel %vm474, %v271, 0.0
          %827 = vadd.xlane.f32.xlu0 %v826
          %v828 = vpop.xlane.xlu0 %827
          %v829 = vsel %vm474, %v272, 0.0
          %830 = vadd.xlane.f32.xlu0 %v829
          %v831 = vpop.xlane.xlu0 %830
          %v832 = vsel %vm474, %v273, 0.0
          %833 = vadd.xlane.f32.xlu0 %v832
          %v834 = vpop.xlane.xlu0 %833
          %v835 = vsel %vm474, %v274, 0.0
          %836 = vadd.xlane.f32.xlu0 %v835
          %v837 = vpop.xlane.xlu0 %836
          %v838 = vsel %vm474, %v275, 0.0
          %839 = vadd.xlane.f32.xlu0 %v838
          %v840 = vpop.xlane.xlu0 %839
          %v841 = vsel %vm474, %v276, 0.0
          %842 = vadd.xlane.f32.xlu0 %v841
          %v843 = vpop.xlane.xlu0 %842
          %v844 = vsel %vm474, %v277, 0.0
          %845 = vadd.xlane.f32.xlu0 %v844
          %v846 = vpop.xlane.xlu0 %845
          %v847 = vsel %vm474, %v278, 0.0
          %848 = vadd.xlane.f32.xlu0 %v847
          %v849 = vpop.xlane.xlu0 %848
          %v850 = vsel %vm474, %v279, 0.0
          %851 = vadd.xlane.f32.xlu0 %v850
          %v852 = vpop.xlane.xlu0 %851
          %v853 = vsel %vm474, %v280, 0.0
          %854 = vadd.xlane.f32.xlu0 %v853
          %v855 = vpop.xlane.xlu0 %854
          %v856 = vsel %vm474, %v281, 0.0
          %857 = vadd.xlane.f32.xlu0 %v856
          %v858 = vpop.xlane.xlu0 %857
          %v859 = vsel %vm474, %v282, 0.0
          %860 = vadd.xlane.f32.xlu0 %v859
          %v861 = vpop.xlane.xlu0 %860
          %v862 = vsel %vm474, %v283, 0.0
          %863 = vadd.xlane.f32.xlu0 %v862
          %v864 = vpop.xlane.xlu0 %863
          %v865 = vsel %vm474, %v284, 0.0
          %866 = vadd.xlane.f32.xlu0 %v865
          %v867 = vpop.xlane.xlu0 %866
          %v868 = vsel %vm474, %v285, 0.0
          %869 = vadd.xlane.f32.xlu0 %v868
          %v870 = vpop.xlane.xlu0 %869
          %v871 = vsel %vm474, %v286, 0.0
          %872 = vadd.xlane.f32.xlu0 %v871
          %v873 = vpop.xlane.xlu0 %872
          %v874 = vsel %vm474, %v287, 0.0
          %875 = vadd.xlane.f32.xlu0 %v874
          %v876 = vpop.xlane.xlu0 %875
          %v877 = vsel %vm474, %v288, 0.0
          %878 = vadd.xlane.f32.xlu0 %v877
          %v879 = vpop.xlane.xlu0 %878
          %v880 = vsel %vm474, %v289, 0.0
          %881 = vadd.xlane.f32.xlu0 %v880
          %v882 = vpop.xlane.xlu0 %881
          %v883 = vsel %vm474, %v290, 0.0
          %884 = vadd.xlane.f32.xlu0 %v883
          %v885 = vpop.xlane.xlu0 %884
          %v886 = vsel %vm474, %v291, 0.0
          %887 = vadd.xlane.f32.xlu0 %v886
          %v888 = vpop.xlane.xlu0 %887
          %v889 = vsel %vm474, %v292, 0.0
          %890 = vadd.xlane.f32.xlu0 %v889
          %v891 = vpop.xlane.xlu0 %890
          %v892 = vsel %vm474, %v293, 0.0
          %893 = vadd.xlane.f32.xlu0 %v892
          %v894 = vpop.xlane.xlu0 %893
          %v895 = vsel %vm474, %v294, 0.0
          %896 = vadd.xlane.f32.xlu0 %v895
          %v897 = vpop.xlane.xlu0 %896
          %v898 = vsel %vm474, %v295, 0.0
          %899 = vadd.xlane.f32.xlu0 %v898
          %v900 = vpop.xlane.xlu0 %899
          %v901 = vsel %vm474, %v296, 0.0
          %902 = vadd.xlane.f32.xlu0 %v901
          %v903 = vpop.xlane.xlu0 %902
          %v904 = vsel %vm474, %v297, 0.0
          %905 = vadd.xlane.f32.xlu0 %v904
          %v906 = vpop.xlane.xlu0 %905
          %v907 = vsel %vm474, %v298, 0.0
          %908 = vadd.xlane.f32.xlu0 %v907
          %v909 = vpop.xlane.xlu0 %908
          %v910 = vsel %vm474, %v299, 0.0
          %911 = vadd.xlane.f32.xlu0 %v910
          %v912 = vpop.xlane.xlu0 %911
          %v913 = vsel %vm474, %v300, 0.0
          %914 = vadd.xlane.f32.xlu0 %v913
          %v915 = vpop.xlane.xlu0 %914
          %v916 = vsel %vm474, %v301, 0.0
          %917 = vadd.xlane.f32.xlu0 %v916
          %v918 = vpop.xlane.xlu0 %917
          %v919 = vsel %vm474, %v302, 0.0
          %920 = vadd.xlane.f32.xlu0 %v919
          %v921 = vpop.xlane.xlu0 %920
          %v922 = vsel %vm474, %v303, 0.0
          %923 = vadd.xlane.f32.xlu0 %v922
          %v924 = vpop.xlane.xlu0 %923
          %v925 = vsel %vm474, %v304, 0.0
          %926 = vadd.xlane.f32.xlu0 %v925
          %v927 = vpop.xlane.xlu0 %926
          %v928 = vsel %vm474, %v305, 0.0
          %929 = vadd.xlane.f32.xlu0 %v928
          %v930 = vpop.xlane.xlu0 %929
          %v931 = vsel %vm474, %v306, 0.0
          %932 = vadd.xlane.f32.xlu0 %v931
          %v933 = vpop.xlane.xlu0 %932
          %v934 = vsel %vm474, %v307, 0.0
          %935 = vadd.xlane.f32.xlu0 %v934
          %v936 = vpop.xlane.xlu0 %935
          %v937 = vsel %vm474, %v308, 0.0
          %938 = vadd.xlane.f32.xlu0 %v937
          %v939 = vpop.xlane.xlu0 %938
          %v940 = vsel %vm474, %v309, 0.0
          %941 = vadd.xlane.f32.xlu0 %v940
          %v942 = vpop.xlane.xlu0 %941
          %v943 = vsel %vm474, %v310, 0.0
          %944 = vadd.xlane.f32.xlu0 %v943
          %v945 = vpop.xlane.xlu0 %944
          %v946 = vsel %vm474, %v311, 0.0
          %947 = vadd.xlane.f32.xlu0 %v946
          %v948 = vpop.xlane.xlu0 %947
          %v949 = vsel %vm474, %v312, 0.0
          %950 = vadd.xlane.f32.xlu0 %v949
          %v951 = vpop.xlane.xlu0 %950
          %v952 = vsel %vm474, %v313, 0.0
          %953 = vadd.xlane.f32.xlu0 %v952
          %v954 = vpop.xlane.xlu0 %953
          %v955 = vsel %vm474, %v314, 0.0
          %956 = vadd.xlane.f32.xlu0 %v955
          %v957 = vpop.xlane.xlu0 %956
          %v958 = vsel %vm474, %v315, 0.0
          %959 = vadd.xlane.f32.xlu0 %v958
          %v960 = vpop.xlane.xlu0 %959
          %v961 = vsel %vm474, %v316, 0.0
          %962 = vadd.xlane.f32.xlu0 %v961
          %v963 = vpop.xlane.xlu0 %962
          %v964 = vsel %vm474, %v317, 0.0
          %965 = vadd.xlane.f32.xlu0 %v964
          %v966 = vpop.xlane.xlu0 %965
          %v967 = vsel %vm474, %v318, 0.0
          %968 = vadd.xlane.f32.xlu0 %v967
          %v969 = vpop.xlane.xlu0 %968
          %v970 = vsel %vm474, %v319, 0.0
          %971 = vadd.xlane.f32.xlu0 %v970
          %v972 = vpop.xlane.xlu0 %971
          %v973 = vsel %vm474, %v320, 0.0
          %974 = vadd.xlane.f32.xlu0 %v973
          %v975 = vpop.xlane.xlu0 %974
          %v976 = vsel %vm474, %v321, 0.0
          %977 = vadd.xlane.f32.xlu0 %v976
          %v978 = vpop.xlane.xlu0 %977
          %v979 = vsel %vm474, %v322, 0.0
          %980 = vadd.xlane.f32.xlu0 %v979
          %v981 = vpop.xlane.xlu0 %980
          %v982 = vsel %vm474, %v323, 0.0
          %983 = vadd.xlane.f32.xlu0 %v982
          %v984 = vpop.xlane.xlu0 %983
          %v985 = vsel %vm474, %v324, 0.0
          %986 = vadd.xlane.f32.xlu0 %v985
          %v987 = vpop.xlane.xlu0 %986
          %v988 = vsel %vm474, %v325, 0.0
          %989 = vadd.xlane.f32.xlu0 %v988
          %v990 = vpop.xlane.xlu0 %989
          %v991 = vsel %vm474, %v326, 0.0
          %992 = vadd.xlane.f32.xlu0 %v991
          %v993 = vpop.xlane.xlu0 %992
          %v994 = vsel %vm474, %v327, 0.0
          %995 = vadd.xlane.f32.xlu0 %v994
          %v996 = vpop.xlane.xlu0 %995
          %v997 = vsel %vm474, %v328, 0.0
          %998 = vadd.xlane.f32.xlu0 %v997
          %v999 = vpop.xlane.xlu0 %998
          %v1000 = vsel %vm474, %v329, 0.0
          %1001 = vadd.xlane.f32.xlu0 %v1000
          %v1002 = vpop.xlane.xlu0 %1001
          %v1003 = vsel %vm474, %v330, 0.0
          %1004 = vadd.xlane.f32.xlu0 %v1003
          %v1005 = vpop.xlane.xlu0 %1004
          %v1006 = vsel %vm474, %v331, 0.0
          %1007 = vadd.xlane.f32.xlu0 %v1006
          %v1008 = vpop.xlane.xlu0 %1007
          %v1009 = vsel %vm474, %v332, 0.0
          %1010 = vadd.xlane.f32.xlu0 %v1009
          %v1011 = vpop.xlane.xlu0 %1010
          %v1012 = vsel %vm474, %v333, 0.0
          %1013 = vadd.xlane.f32.xlu0 %v1012
          %v1014 = vpop.xlane.xlu0 %1013
          %v1015 = vsel %vm474, %v334, 0.0
          %1016 = vadd.xlane.f32.xlu0 %v1015
          %v1017 = vpop.xlane.xlu0 %1016
          %v1018 = vsel %vm474, %v335, 0.0
          %1019 = vadd.xlane.f32.xlu0 %v1018
          %v1020 = vpop.xlane.xlu0 %1019
          %v1021 = vsel %vm474, %v336, 0.0
          %1022 = vadd.xlane.f32.xlu0 %v1021
          %v1023 = vpop.xlane.xlu0 %1022
          %v1024 = vsel %vm474, %v337, 0.0
          %1025 = vadd.xlane.f32.xlu0 %v1024
          %v1026 = vpop.xlane.xlu0 %1025
          %v1027 = vsel %vm474, %v338, 0.0
          %1028 = vadd.xlane.f32.xlu0 %v1027
          %v1029 = vpop.xlane.xlu0 %1028
          %v1030 = vsel %vm474, %v339, 0.0
          %1031 = vadd.xlane.f32.xlu0 %v1030
          %v1032 = vpop.xlane.xlu0 %1031
          %v1033 = vsel %vm474, %v340, 0.0
          %1034 = vadd.xlane.f32.xlu0 %v1033
          %v1035 = vpop.xlane.xlu0 %1034
          %v1036 = vsel %vm474, %v341, 0.0
          %1037 = vadd.xlane.f32.xlu0 %v1036
          %v1038 = vpop.xlane.xlu0 %1037
          %v1039 = vsel %vm474, %v342, 0.0
          %1040 = vadd.xlane.f32.xlu0 %v1039
          %v1041 = vpop.xlane.xlu0 %1040
          %v1042 = vsel %vm474, %v343, 0.0
          %1043 = vadd.xlane.f32.xlu0 %v1042
          %v1044 = vpop.xlane.xlu0 %1043
          %v1045 = vsel %vm474, %v344, 0.0
          %1046 = vadd.xlane.f32.xlu0 %v1045
          %v1047 = vpop.xlane.xlu0 %1046
          %v1048 = vsel %vm474, %v345, 0.0
          %1049 = vadd.xlane.f32.xlu0 %v1048
          %v1050 = vpop.xlane.xlu0 %1049
          %v1051 = vsel %vm474, %v346, 0.0
          %1052 = vadd.xlane.f32.xlu0 %v1051
          %v1053 = vpop.xlane.xlu0 %1052
          %v1054 = vsel %vm474, %v347, 0.0
          %1055 = vadd.xlane.f32.xlu0 %v1054
          %v1056 = vpop.xlane.xlu0 %1055
          %v1057 = vsel %vm474, %v348, 0.0
          %1058 = vadd.xlane.f32.xlu0 %v1057
          %v1059 = vpop.xlane.xlu0 %1058
          %v1060 = vsel %vm474, %v349, 0.0
          %1061 = vadd.xlane.f32.xlu0 %v1060
          %v1062 = vpop.xlane.xlu0 %1061
          %v1063 = vsel %vm474, %v350, 0.0
          %1064 = vadd.xlane.f32.xlu0 %v1063
          %v1065 = vpop.xlane.xlu0 %1064
          %v1066 = vsel %vm474, %v351, 0.0
          %1067 = vadd.xlane.f32.xlu0 %v1066
          %v1068 = vpop.xlane.xlu0 %1067
          %v1069 = vsel %vm474, %v352, 0.0
          %1070 = vadd.xlane.f32.xlu0 %v1069
          %v1071 = vpop.xlane.xlu0 %1070
          %v1072 = vsel %vm474, %v353, 0.0
          %1073 = vadd.xlane.f32.xlu0 %v1072
          %v1074 = vpop.xlane.xlu0 %1073
          %v1075 = vsel %vm474, %v354, 0.0
          %1076 = vadd.xlane.f32.xlu0 %v1075
          %v1077 = vpop.xlane.xlu0 %1076
          %v1078 = vsel %vm474, %v355, 0.0
          %1079 = vadd.xlane.f32.xlu0 %v1078
          %v1080 = vpop.xlane.xlu0 %1079
          %v1081 = vsel %vm474, %v356, 0.0
          %1082 = vadd.xlane.f32.xlu0 %v1081
          %v1083 = vpop.xlane.xlu0 %1082
          %v1084 = vsel %vm474, %v357, 0.0
          %1085 = vadd.xlane.f32.xlu0 %v1084
          %v1086 = vpop.xlane.xlu0 %1085
          %v1087 = vsel %vm474, %v358, 0.0
          %1088 = vadd.xlane.f32.xlu0 %v1087
          %v1089 = vpop.xlane.xlu0 %1088
          %v1090 = vsel %vm474, %v359, 0.0
          %1091 = vadd.xlane.f32.xlu0 %v1090
          %v1092 = vpop.xlane.xlu0 %1091
          %v1093 = vsel %vm474, %v360, 0.0
          %1094 = vadd.xlane.f32.xlu0 %v1093
          %v1095 = vpop.xlane.xlu0 %1094
          %v1096 = vsel %vm474, %v361, 0.0
          %1097 = vadd.xlane.f32.xlu0 %v1096
          %v1098 = vpop.xlane.xlu0 %1097
          %v1099 = vsel %vm474, %v362, 0.0
          %1100 = vadd.xlane.f32.xlu0 %v1099
          %v1101 = vpop.xlane.xlu0 %1100
          %v1102 = vsel %vm474, %v363, 0.0
          %1103 = vadd.xlane.f32.xlu0 %v1102
          %v1104 = vpop.xlane.xlu0 %1103
          %v1105 = vsel %vm474, %v364, 0.0
          %1106 = vadd.xlane.f32.xlu0 %v1105
          %v1107 = vpop.xlane.xlu0 %1106
          %v1108 = vsel %vm474, %v365, 0.0
          %1109 = vadd.xlane.f32.xlu0 %v1108
          %v1110 = vpop.xlane.xlu0 %1109
          %v1111 = vsel %vm474, %v366, 0.0
          %1112 = vadd.xlane.f32.xlu0 %v1111
          %v1113 = vpop.xlane.xlu0 %1112
          %v1114 = vsel %vm474, %v367, 0.0
          %1115 = vadd.xlane.f32.xlu0 %v1114
          %v1116 = vpop.xlane.xlu0 %1115
          %v1117 = vsel %vm474, %v368, 0.0
          %1118 = vadd.xlane.f32.xlu0 %v1117
          %v1119 = vpop.xlane.xlu0 %1118
          %v1120 = vsel %vm474, %v369, 0.0
          %1121 = vadd.xlane.f32.xlu0 %v1120
          %v1122 = vpop.xlane.xlu0 %1121
          %v1123 = vsel %vm474, %v370, 0.0
          %1124 = vadd.xlane.f32.xlu0 %v1123
          %v1125 = vpop.xlane.xlu0 %1124
          %v1126 = vsel %vm474, %v371, 0.0
          %1127 = vadd.xlane.f32.xlu0 %v1126
          %v1128 = vpop.xlane.xlu0 %1127
          %v1129 = vsel %vm474, %v372, 0.0
          %1130 = vadd.xlane.f32.xlu0 %v1129
          %v1131 = vpop.xlane.xlu0 %1130
          %v1132 = vsel %vm474, %v373, 0.0
          %1133 = vadd.xlane.f32.xlu0 %v1132
          %v1134 = vpop.xlane.xlu0 %1133
          %v1135 = vsel %vm474, %v374, 0.0
          %1136 = vadd.xlane.f32.xlu0 %v1135
          %v1137 = vpop.xlane.xlu0 %1136
          %v1138 = vsel %vm474, %v375, 0.0
          %1139 = vadd.xlane.f32.xlu0 %v1138
          %v1140 = vpop.xlane.xlu0 %1139
          %v1141 = vsel %vm474, %v376, 0.0
          %1142 = vadd.xlane.f32.xlu0 %v1141
          %v1143 = vpop.xlane.xlu0 %1142
          %v1144 = vsel %vm474, %v377, 0.0
          %1145 = vadd.xlane.f32.xlu0 %v1144
          %v1146 = vpop.xlane.xlu0 %1145
          %v1147 = vsel %vm474, %v378, 0.0
          %1148 = vadd.xlane.f32.xlu0 %v1147
          %v1149 = vpop.xlane.xlu0 %1148
          %v1150 = vsel %vm474, %v379, 0.0
          %1151 = vadd.xlane.f32.xlu0 %v1150
          %v1152 = vpop.xlane.xlu0 %1151
          %v1153 = vsel %vm474, %v380, 0.0
          %1154 = vadd.xlane.f32.xlu0 %v1153
          %v1155 = vpop.xlane.xlu0 %1154
          %v1156 = vsel %vm474, %v381, 0.0
          %1157 = vadd.xlane.f32.xlu0 %v1156
          %v1158 = vpop.xlane.xlu0 %1157
          %v1159 = vsel %vm474, %v382, 0.0
          %1160 = vadd.xlane.f32.xlu0 %v1159
          %v1161 = vpop.xlane.xlu0 %1160
          %v1162 = vsel %vm474, %v383, 0.0
          %1163 = vadd.xlane.f32.xlu0 %v1162
          %v1164 = vpop.xlane.xlu0 %1163
          %v1165 = vsel %vm474, %v384, 0.0
          %1166 = vadd.xlane.f32.xlu0 %v1165
          %v1167 = vpop.xlane.xlu0 %1166
          %v1168 = vsel %vm474, %v385, 0.0
          %1169 = vadd.xlane.f32.xlu0 %v1168
          %v1170 = vpop.xlane.xlu0 %1169
          %v1171 = vsel %vm474, %v386, 0.0
          %1172 = vadd.xlane.f32.xlu0 %v1171
          %v1173 = vpop.xlane.xlu0 %1172
          %v1174 = vsel %vm474, %v387, 0.0
          %1175 = vadd.xlane.f32.xlu0 %v1174
          %v1176 = vpop.xlane.xlu0 %1175
          %v1177 = vsel %vm474, %v388, 0.0
          %1178 = vadd.xlane.f32.xlu0 %v1177
          %v1179 = vpop.xlane.xlu0 %1178
          %v1180 = vsel %vm474, %v389, 0.0
          %1181 = vadd.xlane.f32.xlu0 %v1180
          %v1182 = vpop.xlane.xlu0 %1181
          %v1183 = vsel %vm474, %v390, 0.0
          %1184 = vadd.xlane.f32.xlu0 %v1183
          %v1185 = vpop.xlane.xlu0 %1184
          %v1186 = vsel %vm474, %v391, 0.0
          %1187 = vadd.xlane.f32.xlu0 %v1186
          %v1188 = vpop.xlane.xlu0 %1187
          %v1189 = vsel %vm474, %v392, 0.0
          %1190 = vadd.xlane.f32.xlu0 %v1189
          %v1191 = vpop.xlane.xlu0 %1190
          %v1192 = vsel %vm474, %v393, 0.0
          %1193 = vadd.xlane.f32.xlu0 %v1192
          %v1194 = vpop.xlane.xlu0 %1193
          %v1195 = vsel %vm474, %v394, 0.0
          %1196 = vadd.xlane.f32.xlu0 %v1195
          %v1197 = vpop.xlane.xlu0 %1196
          %v1198 = vsel %vm474, %v395, 0.0
          %1199 = vadd.xlane.f32.xlu0 %v1198
          %v1200 = vpop.xlane.xlu0 %1199
          %v1201 = vsel %vm474, %v396, 0.0
          %1202 = vadd.xlane.f32.xlu0 %v1201
          %v1203 = vpop.xlane.xlu0 %1202
          %v1204 = vsel %vm474, %v397, 0.0
          %1205 = vadd.xlane.f32.xlu0 %v1204
          %v1206 = vpop.xlane.xlu0 %1205
          %v1207 = vsel %vm474, %v398, 0.0
          %1208 = vadd.xlane.f32.xlu0 %v1207
          %v1209 = vpop.xlane.xlu0 %1208
          %v1210 = vsel %vm474, %v399, 0.0
          %1211 = vadd.xlane.f32.xlu0 %v1210
          %v1212 = vpop.xlane.xlu0 %1211
          %v1213 = vsel %vm474, %v400, 0.0
          %1214 = vadd.xlane.f32.xlu0 %v1213
          %v1215 = vpop.xlane.xlu0 %1214
          %v1216 = vsel %vm474, %v401, 0.0
          %1217 = vadd.xlane.f32.xlu0 %v1216
          %v1218 = vpop.xlane.xlu0 %1217
          %v1219 = vsel %vm474, %v402, 0.0
          %1220 = vadd.xlane.f32.xlu0 %v1219
          %v1221 = vpop.xlane.xlu0 %1220
          %v1222 = vsel %vm474, %v403, 0.0
          %1223 = vadd.xlane.f32.xlu0 %v1222
          %v1224 = vpop.xlane.xlu0 %1223
          %v1225 = vsel %vm474, %v404, 0.0
          %1226 = vadd.xlane.f32.xlu0 %v1225
          %v1227 = vpop.xlane.xlu0 %1226
          %v1228 = vsel %vm474, %v405, 0.0
          %1229 = vadd.xlane.f32.xlu0 %v1228
          %v1230 = vpop.xlane.xlu0 %1229
          %v1231 = vsel %vm474, %v406, 0.0
          %1232 = vadd.xlane.f32.xlu0 %v1231
          %v1233 = vpop.xlane.xlu0 %1232
          %v1234 = vsel %vm474, %v407, 0.0
          %1235 = vadd.xlane.f32.xlu0 %v1234
          %v1236 = vpop.xlane.xlu0 %1235
          %v1237 = vsel %vm474, %v408, 0.0
          %1238 = vadd.xlane.f32.xlu0 %v1237
          %v1239 = vpop.xlane.xlu0 %1238
          %v1240 = vsel %vm474, %v409, 0.0
          %1241 = vadd.xlane.f32.xlu0 %v1240
          %v1242 = vpop.xlane.xlu0 %1241
          %v1243 = vsel %vm474, %v410, 0.0
          %1244 = vadd.xlane.f32.xlu0 %v1243
          %v1245 = vpop.xlane.xlu0 %1244
          %v1246 = vsel %vm474, %v411, 0.0
          %1247 = vadd.xlane.f32.xlu0 %v1246
          %v1248 = vpop.xlane.xlu0 %1247
          %v1249 = vsel %vm474, %v412, 0.0
          %1250 = vadd.xlane.f32.xlu0 %v1249
          %v1251 = vpop.xlane.xlu0 %1250
          %v1252 = vsel %vm474, %v413, 0.0
          %1253 = vadd.xlane.f32.xlu0 %v1252
          %v1254 = vpop.xlane.xlu0 %1253
          %v1255 = vsel %vm474, %v414, 0.0
          %1256 = vadd.xlane.f32.xlu0 %v1255
          %v1257 = vpop.xlane.xlu0 %1256
          %v1258 = vsel %vm474, %v415, 0.0
          %1259 = vadd.xlane.f32.xlu0 %v1258
          %v1260 = vpop.xlane.xlu0 %1259
          %v1261 = vsel %vm474, %v416, 0.0
          %1262 = vadd.xlane.f32.xlu0 %v1261
          %v1263 = vpop.xlane.xlu0 %1262
          %v1264 = vsel %vm474, %v417, 0.0
          %1265 = vadd.xlane.f32.xlu0 %v1264
          %v1266 = vpop.xlane.xlu0 %1265
          %v1267 = vsel %vm474, %v418, 0.0
          %1268 = vadd.xlane.f32.xlu0 %v1267
          %v1269 = vpop.xlane.xlu0 %1268
          %v1270 = vsel %vm474, %v419, 0.0
          %1271 = vadd.xlane.f32.xlu0 %v1270
          %v1272 = vpop.xlane.xlu0 %1271
          %v1273 = vsel %vm474, %v420, 0.0
          %1274 = vadd.xlane.f32.xlu0 %v1273
          %v1275 = vpop.xlane.xlu0 %1274
          %v1276 = vsel %vm474, %v421, 0.0
          %1277 = vadd.xlane.f32.xlu0 %v1276
          %v1278 = vpop.xlane.xlu0 %1277
          %v1279 = vsel %vm474, %v422, 0.0
          %1280 = vadd.xlane.f32.xlu0 %v1279
          %v1281 = vpop.xlane.xlu0 %1280
          %v1282 = vsel %vm474, %v423, 0.0
          %1283 = vadd.xlane.f32.xlu0 %v1282
          %v1284 = vpop.xlane.xlu0 %1283
          %v1285 = vsel %vm474, %v424, 0.0
          %1286 = vadd.xlane.f32.xlu0 %v1285
          %v1287 = vpop.xlane.xlu0 %1286
          %v1288 = vsel %vm474, %v425, 0.0
          %1289 = vadd.xlane.f32.xlu0 %v1288
          %v1290 = vpop.xlane.xlu0 %1289
          %v1291 = vsel %vm474, %v426, 0.0
          %1292 = vadd.xlane.f32.xlu0 %v1291
          %v1293 = vpop.xlane.xlu0 %1292
          %v1294 = vsel %vm474, %v427, 0.0
          %1295 = vadd.xlane.f32.xlu0 %v1294
          %v1296 = vpop.xlane.xlu0 %1295
          %v1297 = vsel %vm474, %v428, 0.0
          %1298 = vadd.xlane.f32.xlu0 %v1297
          %v1299 = vpop.xlane.xlu0 %1298
          %v1300 = vsel %vm474, %v429, 0.0
          %1301 = vadd.xlane.f32.xlu0 %v1300
          %v1302 = vpop.xlane.xlu0 %1301
          %v1303 = vsel %vm474, %v430, 0.0
          %1304 = vadd.xlane.f32.xlu0 %v1303
          %v1305 = vpop.xlane.xlu0 %1304
          %v1306 = vsel %vm474, %v431, 0.0
          %1307 = vadd.xlane.f32.xlu0 %v1306
          %v1308 = vpop.xlane.xlu0 %1307
          %v1309 = vsel %vm474, %v432, 0.0
          %1310 = vadd.xlane.f32.xlu0 %v1309
          %v1311 = vpop.xlane.xlu0 %1310
          %v1312 = vsel %vm474, %v433, 0.0
          %1313 = vadd.xlane.f32.xlu0 %v1312
          %v1314 = vpop.xlane.xlu0 %1313
          %v1315 = vsel %vm474, %v434, 0.0
          %1316 = vadd.xlane.f32.xlu0 %v1315
          %v1317 = vpop.xlane.xlu0 %1316
          %v1318 = vsel %vm474, %v435, 0.0
          %1319 = vadd.xlane.f32.xlu0 %v1318
          %v1320 = vpop.xlane.xlu0 %1319
          %v1321 = vsel %vm474, %v436, 0.0
          %1322 = vadd.xlane.f32.xlu0 %v1321
          %v1323 = vpop.xlane.xlu0 %1322
          %v1324 = vsel %vm474, %v437, 0.0
          %1325 = vadd.xlane.f32.xlu0 %v1324
          %v1326 = vpop.xlane.xlu0 %1325
          %v1327 = vsel %vm474, %v438, 0.0
          %1328 = vadd.xlane.f32.xlu0 %v1327
          %v1329 = vpop.xlane.xlu0 %1328
          %v1330 = vsel %vm474, %v439, 0.0
          %1331 = vadd.xlane.f32.xlu0 %v1330
          %v1332 = vpop.xlane.xlu0 %1331
          %v1333 = vsel %vm474, %v440, 0.0
          %1334 = vadd.xlane.f32.xlu0 %v1333
          %v1335 = vpop.xlane.xlu0 %1334
          %v1336 = vsel %vm474, %v441, 0.0
          %1337 = vadd.xlane.f32.xlu0 %v1336
          %v1338 = vpop.xlane.xlu0 %1337
          %v1339 = vsel %vm474, %v442, 0.0
          %1340 = vadd.xlane.f32.xlu0 %v1339
          %v1341 = vpop.xlane.xlu0 %1340
          %v1342 = vsel %vm474, %v443, 0.0
          %1343 = vadd.xlane.f32.xlu0 %v1342
          %v1344 = vpop.xlane.xlu0 %1343
          %v1345 = vsel %vm474, %v444, 0.0
          %1346 = vadd.xlane.f32.xlu0 %v1345
          %v1347 = vpop.xlane.xlu0 %1346
          %v1348 = vsel %vm474, %v445, 0.0
          %1349 = vadd.xlane.f32.xlu0 %v1348
          %v1350 = vpop.xlane.xlu0 %1349
          %v1351 = vsel %vm474, %v446, 0.0
          %1352 = vadd.xlane.f32.xlu0 %v1351
          %v1353 = vpop.xlane.xlu0 %1352
          %v1354 = vsel %vm474, %v447, 0.0
          %1355 = vadd.xlane.f32.xlu0 %v1354
          %v1356 = vpop.xlane.xlu0 %1355
          %v1357 = vsel %vm474, %v448, 0.0
          %1358 = vadd.xlane.f32.xlu0 %v1357
          %v1359 = vpop.xlane.xlu0 %1358
          %v1360 = vsel %vm474, %v449, 0.0
          %1361 = vadd.xlane.f32.xlu0 %v1360
          %v1362 = vpop.xlane.xlu0 %1361
          %v1363 = vsel %vm474, %v450, 0.0
          %1364 = vadd.xlane.f32.xlu0 %v1363
          %v1365 = vpop.xlane.xlu0 %1364
          %v1366 = vsel %vm474, %v451, 0.0
          %1367 = vadd.xlane.f32.xlu0 %v1366
          %v1368 = vpop.xlane.xlu0 %1367
          %v1369 = vsel %vm474, %v452, 0.0
          %1370 = vadd.xlane.f32.xlu0 %v1369
          %v1371 = vpop.xlane.xlu0 %1370
          %v1372 = vsel %vm474, %v453, 0.0
          %1373 = vadd.xlane.f32.xlu0 %v1372
          %v1374 = vpop.xlane.xlu0 %1373
          %v1375 = vsel %vm474, %v454, 0.0
          %1376 = vadd.xlane.f32.xlu0 %v1375
          %v1377 = vpop.xlane.xlu0 %1376
          %v1378 = vsel %vm474, %v455, 0.0
          %1379 = vadd.xlane.f32.xlu0 %v1378
          %v1380 = vpop.xlane.xlu0 %1379
          %v1381 = vsel %vm474, %v456, 0.0
          %1382 = vadd.xlane.f32.xlu0 %v1381
          %v1383 = vpop.xlane.xlu0 %1382
          %v1384 = vsel %vm474, %v457, 0.0
          %1385 = vadd.xlane.f32.xlu0 %v1384
          %v1386 = vpop.xlane.xlu0 %1385
          %v1387 = vsel %vm474, %v458, 0.0
          %1388 = vadd.xlane.f32.xlu0 %v1387
          %v1389 = vpop.xlane.xlu0 %1388
          %v1390 = vsel %vm474, %v459, 0.0
          %1391 = vadd.xlane.f32.xlu0 %v1390
          %v1392 = vpop.xlane.xlu0 %1391
          %v1393 = vsel %vm474, %v460, 0.0
          %1394 = vadd.xlane.f32.xlu0 %v1393
          %v1395 = vpop.xlane.xlu0 %1394
          %v1396 = vsel %vm474, %v461, 0.0
          %1397 = vadd.xlane.f32.xlu0 %v1396
          %v1398 = vpop.xlane.xlu0 %1397
          %v1399 = vsel %vm474, %v462, 0.0
          %1400 = vadd.xlane.f32.xlu0 %v1399
          %v1401 = vpop.xlane.xlu0 %1400
          %v1402 = vsel %vm474, %v463, 0.0
          %1403 = vadd.xlane.f32.xlu0 %v1402
          %v1404 = vpop.xlane.xlu0 %1403
          %v1405 = vsel %vm474, %v464, 0.0
          %1406 = vadd.xlane.f32.xlu0 %v1405
          %v1407 = vpop.xlane.xlu0 %1406
          %v1408 = vsel %vm474, %v465, 0.0
          %1409 = vadd.xlane.f32.xlu0 %v1408
          %v1410 = vpop.xlane.xlu0 %1409
          %v1411 = vsel %vm474, %v466, 0.0
          %1412 = vadd.xlane.f32.xlu0 %v1411
          %v1413 = vpop.xlane.xlu0 %1412
          %v1414 = vsel %vm474, %v467, 0.0
          %1415 = vadd.xlane.f32.xlu0 %v1414
          %v1416 = vpop.xlane.xlu0 %1415
          %v1417 = vsel %vm474, %v468, 0.0
          %1418 = vadd.xlane.f32.xlu0 %v1417
          %v1419 = vpop.xlane.xlu0 %1418
          %v1420 = vsel %vm474, %v469, 0.0
          %1421 = vadd.xlane.f32.xlu0 %v1420
          %v1422 = vpop.xlane.xlu0 %1421
          %v1423 = vsel %vm474, %v470, 0.0
          %1424 = vadd.xlane.f32.xlu0 %v1423
          %v1425 = vpop.xlane.xlu0 %1424
          %v1426 = vsel %vm474, %v471, 0.0
          %1427 = vadd.xlane.f32.xlu0 %v1426
          %v1428 = vpop.xlane.xlu0 %1427
          %v1429 = vsel %vm474, %v472, 0.0
          %1430 = vadd.xlane.f32.xlu0 %v1429
          %v1431 = vpop.xlane.xlu0 %1430
          %v1432 = vsel %vm474, %v473, 0.0
          %1433 = vadd.xlane.f32.xlu0 %v1432
          %v1434 = vpop.xlane.xlu0 %1433
          %v1435 = vmax.f32 %v477, %v573
          %v1436 = vmax.f32 %v1435, %v669
          %v1437 = vmax.f32 %v1436, %v765
          %v1438 = vmax.f32 %v1437, %v861
          %v1439 = vmax.f32 %v1438, %v957
          %v1440 = vmax.f32 %v1439, %v1053
          %v1441 = vmax.f32 %v1440, %v1149
          %v1442 = vmax.f32 %v1441, %v1245
          %v1443 = vmax.f32 %v1442, %v1341
          %v1444 = vmax.f32 %v480, %v576
          %v1445 = vmax.f32 %v1444, %v672
          %v1446 = vmax.f32 %v1445, %v768
          %v1447 = vmax.f32 %v1446, %v864
          %v1448 = vmax.f32 %v1447, %v960
          %v1449 = vmax.f32 %v1448, %v1056
          %v1450 = vmax.f32 %v1449, %v1152
          %v1451 = vmax.f32 %v1450, %v1248
          %v1452 = vmax.f32 %v1451, %v1344
          %v1453 = vmax.f32 %v483, %v579
          %v1454 = vmax.f32 %v1453, %v675
          %v1455 = vmax.f32 %v1454, %v771
          %v1456 = vmax.f32 %v1455, %v867
          %v1457 = vmax.f32 %v1456, %v963
          %v1458 = vmax.f32 %v1457, %v1059
          %v1459 = vmax.f32 %v1458, %v1155
          %v1460 = vmax.f32 %v1459, %v1251
          %v1461 = vmax.f32 %v1460, %v1347
          %v1462 = vmax.f32 %v486, %v582
          %v1463 = vmax.f32 %v1462, %v678
          %v1464 = vmax.f32 %v1463, %v774
          %v1465 = vmax.f32 %v1464, %v870
          %v1466 = vmax.f32 %v1465, %v966
          %v1467 = vmax.f32 %v1466, %v1062
          %v1468 = vmax.f32 %v1467, %v1158
          %v1469 = vmax.f32 %v1468, %v1254
          %v1470 = vmax.f32 %v1469, %v1350
          %v1471 = vmax.f32 %v489, %v585
          %v1472 = vmax.f32 %v1471, %v681
          %v1473 = vmax.f32 %v1472, %v777
          %v1474 = vmax.f32 %v1473, %v873
          %v1475 = vmax.f32 %v1474, %v969
          %v1476 = vmax.f32 %v1475, %v1065
          %v1477 = vmax.f32 %v1476, %v1161
          %v1478 = vmax.f32 %v1477, %v1257
          %v1479 = vmax.f32 %v1478, %v1353
          %v1480 = vmax.f32 %v492, %v588
          %v1481 = vmax.f32 %v1480, %v684
          %v1482 = vmax.f32 %v1481, %v780
          %v1483 = vmax.f32 %v1482, %v876
          %v1484 = vmax.f32 %v1483, %v972
          %v1485 = vmax.f32 %v1484, %v1068
          %v1486 = vmax.f32 %v1485, %v1164
          %v1487 = vmax.f32 %v1486, %v1260
          %v1488 = vmax.f32 %v1487, %v1356
          %v1489 = vmax.f32 %v495, %v591
          %v1490 = vmax.f32 %v1489, %v687
          %v1491 = vmax.f32 %v1490, %v783
          %v1492 = vmax.f32 %v1491, %v879
          %v1493 = vmax.f32 %v1492, %v975
          %v1494 = vmax.f32 %v1493, %v1071
          %v1495 = vmax.f32 %v1494, %v1167
          %v1496 = vmax.f32 %v1495, %v1263
          %v1497 = vmax.f32 %v1496, %v1359
          %v1498 = vmax.f32 %v498, %v594
          %v1499 = vmax.f32 %v1498, %v690
          %v1500 = vmax.f32 %v1499, %v786
          %v1501 = vmax.f32 %v1500, %v882
          %v1502 = vmax.f32 %v1501, %v978
          %v1503 = vmax.f32 %v1502, %v1074
          %v1504 = vmax.f32 %v1503, %v1170
          %v1505 = vmax.f32 %v1504, %v1266
          %v1506 = vmax.f32 %v1505, %v1362
          %v1507 = vmax.f32 %v501, %v597
          %v1508 = vmax.f32 %v1507, %v693
          %v1509 = vmax.f32 %v1508, %v789
          %v1510 = vmax.f32 %v1509, %v885
          %v1511 = vmax.f32 %v1510, %v981
          %v1512 = vmax.f32 %v1511, %v1077
          %v1513 = vmax.f32 %v1512, %v1173
          %v1514 = vmax.f32 %v1513, %v1269
          %v1515 = vmax.f32 %v1514, %v1365
          %v1516 = vmax.f32 %v504, %v600
          %v1517 = vmax.f32 %v1516, %v696
          %v1518 = vmax.f32 %v1517, %v792
          %v1519 = vmax.f32 %v1518, %v888
          %v1520 = vmax.f32 %v1519, %v984
          %v1521 = vmax.f32 %v1520, %v1080
          %v1522 = vmax.f32 %v1521, %v1176
          %v1523 = vmax.f32 %v1522, %v1272
          %v1524 = vmax.f32 %v1523, %v1368
          %v1525 = vmax.f32 %v507, %v603
          %v1526 = vmax.f32 %v1525, %v699
          %v1527 = vmax.f32 %v1526, %v795
          %v1528 = vmax.f32 %v1527, %v891
          %v1529 = vmax.f32 %v1528, %v987
          %v1530 = vmax.f32 %v1529, %v1083
          %v1531 = vmax.f32 %v1530, %v1179
          %v1532 = vmax.f32 %v1531, %v1275
          %v1533 = vmax.f32 %v1532, %v1371
          %v1534 = vmax.f32 %v510, %v606
          %v1535 = vmax.f32 %v1534, %v702
          %v1536 = vmax.f32 %v1535, %v798
          %v1537 = vmax.f32 %v1536, %v894
          %v1538 = vmax.f32 %v1537, %v990
          %v1539 = vmax.f32 %v1538, %v1086
          %v1540 = vmax.f32 %v1539, %v1182
          %v1541 = vmax.f32 %v1540, %v1278
          %v1542 = vmax.f32 %v1541, %v1374
          %v1543 = vmax.f32 %v513, %v609
          %v1544 = vmax.f32 %v1543, %v705
          %v1545 = vmax.f32 %v1544, %v801
          %v1546 = vmax.f32 %v1545, %v897
          %v1547 = vmax.f32 %v1546, %v993
          %v1548 = vmax.f32 %v1547, %v1089
          %v1549 = vmax.f32 %v1548, %v1185
          %v1550 = vmax.f32 %v1549, %v1281
          %v1551 = vmax.f32 %v1550, %v1377
          %v1552 = vmax.f32 %v516, %v612
          %v1553 = vmax.f32 %v1552, %v708
          %v1554 = vmax.f32 %v1553, %v804
          %v1555 = vmax.f32 %v1554, %v900
          %v1556 = vmax.f32 %v1555, %v996
          %v1557 = vmax.f32 %v1556, %v1092
          %v1558 = vmax.f32 %v1557, %v1188
          %v1559 = vmax.f32 %v1558, %v1284
          %v1560 = vmax.f32 %v1559, %v1380
          %v1561 = vmax.f32 %v519, %v615
          %v1562 = vmax.f32 %v1561, %v711
          %v1563 = vmax.f32 %v1562, %v807
          %v1564 = vmax.f32 %v1563, %v903
          %v1565 = vmax.f32 %v1564, %v999
          %v1566 = vmax.f32 %v1565, %v1095
          %v1567 = vmax.f32 %v1566, %v1191
          %v1568 = vmax.f32 %v1567, %v1287
          %v1569 = vmax.f32 %v1568, %v1383
          %v1570 = vmax.f32 %v522, %v618
          %v1571 = vmax.f32 %v1570, %v714
          %v1572 = vmax.f32 %v1571, %v810
          %v1573 = vmax.f32 %v1572, %v906
          %v1574 = vmax.f32 %v1573, %v1002
          %v1575 = vmax.f32 %v1574, %v1098
          %v1576 = vmax.f32 %v1575, %v1194
          %v1577 = vmax.f32 %v1576, %v1290
          %v1578 = vmax.f32 %v1577, %v1386
          %v1579 = vmax.f32 %v525, %v621
          %v1580 = vmax.f32 %v1579, %v717
          %v1581 = vmax.f32 %v1580, %v813
          %v1582 = vmax.f32 %v1581, %v909
          %v1583 = vmax.f32 %v1582, %v1005
          %v1584 = vmax.f32 %v1583, %v1101
          %v1585 = vmax.f32 %v1584, %v1197
          %v1586 = vmax.f32 %v1585, %v1293
          %v1587 = vmax.f32 %v1586, %v1389
          %v1588 = vmax.f32 %v528, %v624
          %v1589 = vmax.f32 %v1588, %v720
          %v1590 = vmax.f32 %v1589, %v816
          %v1591 = vmax.f32 %v1590, %v912
          %v1592 = vmax.f32 %v1591, %v1008
          %v1593 = vmax.f32 %v1592, %v1104
          %v1594 = vmax.f32 %v1593, %v1200
          %v1595 = vmax.f32 %v1594, %v1296
          %v1596 = vmax.f32 %v1595, %v1392
          %v1597 = vmax.f32 %v531, %v627
          %v1598 = vmax.f32 %v1597, %v723
          %v1599 = vmax.f32 %v1598, %v819
          %v1600 = vmax.f32 %v1599, %v915
          %v1601 = vmax.f32 %v1600, %v1011
          %v1602 = vmax.f32 %v1601, %v1107
          %v1603 = vmax.f32 %v1602, %v1203
          %v1604 = vmax.f32 %v1603, %v1299
          %v1605 = vmax.f32 %v1604, %v1395
          %v1606 = vmax.f32 %v534, %v630
          %v1607 = vmax.f32 %v1606, %v726
          %v1608 = vmax.f32 %v1607, %v822
          %v1609 = vmax.f32 %v1608, %v918
          %v1610 = vmax.f32 %v1609, %v1014
          %v1611 = vmax.f32 %v1610, %v1110
          %v1612 = vmax.f32 %v1611, %v1206
          %v1613 = vmax.f32 %v1612, %v1302
          %v1614 = vmax.f32 %v1613, %v1398
          %v1615 = vmax.f32 %v537, %v633
          %v1616 = vmax.f32 %v1615, %v729
          %v1617 = vmax.f32 %v1616, %v825
          %v1618 = vmax.f32 %v1617, %v921
          %v1619 = vmax.f32 %v1618, %v1017
          %v1620 = vmax.f32 %v1619, %v1113
          %v1621 = vmax.f32 %v1620, %v1209
          %v1622 = vmax.f32 %v1621, %v1305
          %v1623 = vmax.f32 %v1622, %v1401
          %v1624 = vmax.f32 %v540, %v636
          %v1625 = vmax.f32 %v1624, %v732
          %v1626 = vmax.f32 %v1625, %v828
          %v1627 = vmax.f32 %v1626, %v924
          %v1628 = vmax.f32 %v1627, %v1020
          %v1629 = vmax.f32 %v1628, %v1116
          %v1630 = vmax.f32 %v1629, %v1212
          %v1631 = vmax.f32 %v1630, %v1308
          %v1632 = vmax.f32 %v1631, %v1404
          %v1633 = vmax.f32 %v543, %v639
          %v1634 = vmax.f32 %v1633, %v735
          %v1635 = vmax.f32 %v1634, %v831
          %v1636 = vmax.f32 %v1635, %v927
          %v1637 = vmax.f32 %v1636, %v1023
          %v1638 = vmax.f32 %v1637, %v1119
          %v1639 = vmax.f32 %v1638, %v1215
          %v1640 = vmax.f32 %v1639, %v1311
          %v1641 = vmax.f32 %v1640, %v1407
          %v1642 = vmax.f32 %v546, %v642
          %v1643 = vmax.f32 %v1642, %v738
          %v1644 = vmax.f32 %v1643, %v834
          %v1645 = vmax.f32 %v1644, %v930
          %v1646 = vmax.f32 %v1645, %v1026
          %v1647 = vmax.f32 %v1646, %v1122
          %v1648 = vmax.f32 %v1647, %v1218
          %v1649 = vmax.f32 %v1648, %v1314
          %v1650 = vmax.f32 %v1649, %v1410
          %v1651 = vmax.f32 %v549, %v645
          %v1652 = vmax.f32 %v1651, %v741
          %v1653 = vmax.f32 %v1652, %v837
          %v1654 = vmax.f32 %v1653, %v933
          %v1655 = vmax.f32 %v1654, %v1029
          %v1656 = vmax.f32 %v1655, %v1125
          %v1657 = vmax.f32 %v1656, %v1221
          %v1658 = vmax.f32 %v1657, %v1317
          %v1659 = vmax.f32 %v1658, %v1413
          %v1660 = vmax.f32 %v552, %v648
          %v1661 = vmax.f32 %v1660, %v744
          %v1662 = vmax.f32 %v1661, %v840
          %v1663 = vmax.f32 %v1662, %v936
          %v1664 = vmax.f32 %v1663, %v1032
          %v1665 = vmax.f32 %v1664, %v1128
          %v1666 = vmax.f32 %v1665, %v1224
          %v1667 = vmax.f32 %v1666, %v1320
          %v1668 = vmax.f32 %v1667, %v1416
          %v1669 = vmax.f32 %v555, %v651
          %v1670 = vmax.f32 %v1669, %v747
          %v1671 = vmax.f32 %v1670, %v843
          %v1672 = vmax.f32 %v1671, %v939
          %v1673 = vmax.f32 %v1672, %v1035
          %v1674 = vmax.f32 %v1673, %v1131
          %v1675 = vmax.f32 %v1674, %v1227
          %v1676 = vmax.f32 %v1675, %v1323
          %v1677 = vmax.f32 %v1676, %v1419
          %v1678 = vmax.f32 %v558, %v654
          %v1679 = vmax.f32 %v1678, %v750
          %v1680 = vmax.f32 %v1679, %v846
          %v1681 = vmax.f32 %v1680, %v942
          %v1682 = vmax.f32 %v1681, %v1038
          %v1683 = vmax.f32 %v1682, %v1134
          %v1684 = vmax.f32 %v1683, %v1230
          %v1685 = vmax.f32 %v1684, %v1326
          %v1686 = vmax.f32 %v1685, %v1422
          %v1687 = vmax.f32 %v561, %v657
          %v1688 = vmax.f32 %v1687, %v753
          %v1689 = vmax.f32 %v1688, %v849
          %v1690 = vmax.f32 %v1689, %v945
          %v1691 = vmax.f32 %v1690, %v1041
          %v1692 = vmax.f32 %v1691, %v1137
          %v1693 = vmax.f32 %v1692, %v1233
          %v1694 = vmax.f32 %v1693, %v1329
          %v1695 = vmax.f32 %v1694, %v1425
          %v1696 = vmax.f32 %v564, %v660
          %v1697 = vmax.f32 %v1696, %v756
          %v1698 = vmax.f32 %v1697, %v852
          %v1699 = vmax.f32 %v1698, %v948
          %v1700 = vmax.f32 %v1699, %v1044
          %v1701 = vmax.f32 %v1700, %v1140
          %v1702 = vmax.f32 %v1701, %v1236
          %v1703 = vmax.f32 %v1702, %v1332
          %v1704 = vmax.f32 %v1703, %v1428
          %v1705 = vmax.f32 %v567, %v663
          %v1706 = vmax.f32 %v1705, %v759
          %v1707 = vmax.f32 %v1706, %v855
          %v1708 = vmax.f32 %v1707, %v951
          %v1709 = vmax.f32 %v1708, %v1047
          %v1710 = vmax.f32 %v1709, %v1143
          %v1711 = vmax.f32 %v1710, %v1239
          %v1712 = vmax.f32 %v1711, %v1335
          %v1713 = vmax.f32 %v1712, %v1431
          %v1714 = vmax.f32 %v570, %v666
          %v1715 = vmax.f32 %v1714, %v762
          %v1716 = vmax.f32 %v1715, %v858
          %v1717 = vmax.f32 %v1716, %v954
          %v1718 = vmax.f32 %v1717, %v1050
          %v1719 = vmax.f32 %v1718, %v1146
          %v1720 = vmax.f32 %v1719, %v1242
          %v1721 = vmax.f32 %v1720, %v1338
          %v1722 = vmax.f32 %v1721, %v1434
          %v1723 = vmul.f32 %v1443, 0.020408163
          %v1724 = vmul.f32 %v1452, 0.020408163
          %v1725 = vmul.f32 %v1461, 0.020408163
          %v1726 = vmul.f32 %v1470, 0.020408163
          %v1727 = vmul.f32 %v1479, 0.020408163
          %v1728 = vmul.f32 %v1488, 0.020408163
          %v1729 = vmul.f32 %v1497, 0.020408163
          %v1730 = vmul.f32 %v1506, 0.020408163
          %v1731 = vmul.f32 %v1515, 0.020408163
          %v1732 = vmul.f32 %v1524, 0.020408163
          %v1733 = vmul.f32 %v1533, 0.020408163
          %v1734 = vmul.f32 %v1542, 0.020408163
          %v1735 = vmul.f32 %v1551, 0.020408163
          %v1736 = vmul.f32 %v1560, 0.020408163
          %v1737 = vmul.f32 %v1569, 0.020408163
          %v1738 = vmul.f32 %v1578, 0.020408163
          %v1739 = vmul.f32 %v1587, 0.020408163
          %v1740 = vmul.f32 %v1596, 0.020408163
          %v1741 = vmul.f32 %v1605, 0.020408163
          %v1742 = vmul.f32 %v1614, 0.020408163
          %v1743 = vmul.f32 %v1623, 0.020408163
          %v1744 = vmul.f32 %v1632, 0.020408163
          %v1745 = vmul.f32 %v1641, 0.020408163
          %v1746 = vmul.f32 %v1650, 0.020408163
          %v1747 = vmul.f32 %v1659, 0.020408163
          %v1748 = vmul.f32 %v1668, 0.020408163
          %v1749 = vmul.f32 %v1677, 0.020408163
          %v1750 = vmul.f32 %v1686, 0.020408163
          %v1751 = vmul.f32 %v1695, 0.020408163
          %v1752 = vmul.f32 %v1704, 0.020408163
          %v1753 = vmul.f32 %v1713, 0.020408163
          %v1754 = vmul.f32 %v1722, 0.020408163
          %v1787 = vlaneseq
          %v1788 = vand.u32 %v1787, 127
          %v1789 = vlaneseq
          %v1790 = vshrl.u32 %v1789, 7
          %v1791 = vsub.s32 %v1788, %v1790
          %v1792 = vrot.slane %v1723, %v1791
          %v1793 = vadd.s32 %v1788, 4294967288
          %v1794 = vlaneseq
          %v1795 = vshrl.u32 %v1794, 7
          %v1796 = vsub.s32 %v1793, %v1795
          %v1797 = vrot.slane %v1724, %v1796
          %vm1798 = vcmask 130112
          %v1799 = vsel %vm1798, %v1797, %v1792
          %v1800 = vadd.s32 %v1788, 4294967280
          %v1801 = vlaneseq
          %v1802 = vshrl.u32 %v1801, 7
          %v1803 = vsub.s32 %v1800, %v1802
          %v1804 = vrot.slane %v1725, %v1803
          %vm1805 = vcmask 195712
          %v1806 = vsel %vm1805, %v1804, %v1799
          %v1807 = vadd.s32 %v1788, 4294967272
          %v1808 = vlaneseq
          %v1809 = vshrl.u32 %v1808, 7
          %v1810 = vsub.s32 %v1807, %v1809
          %v1811 = vrot.slane %v1726, %v1810
          %vm1812 = vcmask 261312
          %v1813 = vsel %vm1812, %v1811, %v1806
          %v1814 = vadd.s32 %v1788, 4294967264
          %v1815 = vlaneseq
          %v1816 = vshrl.u32 %v1815, 7
          %v1817 = vsub.s32 %v1814, %v1816
          %v1818 = vrot.slane %v1727, %v1817
          %vm1819 = vcmask 326912
          %v1820 = vsel %vm1819, %v1818, %v1813
          %v1821 = vadd.s32 %v1788, 4294967256
          %v1822 = vlaneseq
          %v1823 = vshrl.u32 %v1822, 7
          %v1824 = vsub.s32 %v1821, %v1823
          %v1825 = vrot.slane %v1728, %v1824
          %vm1826 = vcmask 392512
          %v1827 = vsel %vm1826, %v1825, %v1820
          %v1828 = vadd.s32 %v1788, 4294967248
          %v1829 = vlaneseq
          %v1830 = vshrl.u32 %v1829, 7
          %v1831 = vsub.s32 %v1828, %v1830
          %v1832 = vrot.slane %v1729, %v1831
          %vm1833 = vcmask 458112
          %v1834 = vsel %vm1833, %v1832, %v1827
          %v1835 = vadd.s32 %v1788, 4294967240
          %v1836 = vlaneseq
          %v1837 = vshrl.u32 %v1836, 7
          %v1838 = vsub.s32 %v1835, %v1837
          %v1839 = vrot.slane %v1730, %v1838
          %vm1840 = vcmask 523712
          %v1841 = vsel %vm1840, %v1839, %v1834
          %v1842 = vadd.s32 %v1788, 4294967232
          %v1843 = vlaneseq
          %v1844 = vshrl.u32 %v1843, 7
          %v1845 = vsub.s32 %v1842, %v1844
          %v1846 = vrot.slane %v1731, %v1845
          %vm1847 = vcmask 589312
          %v1848 = vsel %vm1847, %v1846, %v1841
          %v1849 = vadd.s32 %v1788, 4294967224
          %v1850 = vlaneseq
          %v1851 = vshrl.u32 %v1850, 7
          %v1852 = vsub.s32 %v1849, %v1851
          %v1853 = vrot.slane %v1732, %v1852
          %vm1854 = vcmask 654912
          %v1855 = vsel %vm1854, %v1853, %v1848
          %v1856 = vadd.s32 %v1788, 4294967216
          %v1857 = vlaneseq
          %v1858 = vshrl.u32 %v1857, 7
          %v1859 = vsub.s32 %v1856, %v1858
          %v1860 = vrot.slane %v1733, %v1859
          %vm1861 = vcmask 720512
          %v1862 = vsel %vm1861, %v1860, %v1855
          %v1863 = vadd.s32 %v1788, 4294967208
          %v1864 = vlaneseq
          %v1865 = vshrl.u32 %v1864, 7
          %v1866 = vsub.s32 %v1863, %v1865
          %v1867 = vrot.slane %v1734, %v1866
          %vm1868 = vcmask 786112
          %v1869 = vsel %vm1868, %v1867, %v1862
          %v1870 = vadd.s32 %v1788, 4294967200
          %v1871 = vlaneseq
          %v1872 = vshrl.u32 %v1871, 7
          %v1873 = vsub.s32 %v1870, %v1872
          %v1874 = vrot.slane %v1735, %v1873
          %vm1875 = vcmask 851712
          %v1876 = vsel %vm1875, %v1874, %v1869
          %v1877 = vadd.s32 %v1788, 4294967192
          %v1878 = vlaneseq
          %v1879 = vshrl.u32 %v1878, 7
          %v1880 = vsub.s32 %v1877, %v1879
          %v1881 = vrot.slane %v1736, %v1880
          %vm1882 = vcmask 917312
          %v1883 = vsel %vm1882, %v1881, %v1876
          %v1884 = vadd.s32 %v1788, 4294967184
          %v1885 = vlaneseq
          %v1886 = vshrl.u32 %v1885, 7
          %v1887 = vsub.s32 %v1884, %v1886
          %v1888 = vrot.slane %v1737, %v1887
          %vm1889 = vcmask 982912
          %v1890 = vsel %vm1889, %v1888, %v1883
          %v1891 = vadd.s32 %v1788, 4294967176
          %v1892 = vlaneseq
          %v1893 = vshrl.u32 %v1892, 7
          %v1894 = vsub.s32 %v1891, %v1893
          %v1895 = vrot.slane %v1738, %v1894
          %vm1896 = vcmask 1048512
          %v1897 = vsel %vm1896, %v1895, %v1890
          %v1898 = vlaneseq
          %v1899 = vshrl.u32 %v1898, 7
          %v1900 = vsub.s32 %v1788, %v1899
          %v1901 = vrot.slane %v1739, %v1900
          %v1902 = vlaneseq
          %v1903 = vshrl.u32 %v1902, 7
          %v1904 = vsub.s32 %v1793, %v1903
          %v1905 = vrot.slane %v1740, %v1904
          %v1906 = vsel %vm1798, %v1905, %v1901
          %v1907 = vlaneseq
          %v1908 = vshrl.u32 %v1907, 7
          %v1909 = vsub.s32 %v1800, %v1908
          %v1910 = vrot.slane %v1741, %v1909
          %v1911 = vsel %vm1805, %v1910, %v1906
          %v1912 = vlaneseq
          %v1913 = vshrl.u32 %v1912, 7
          %v1914 = vsub.s32 %v1807, %v1913
          %v1915 = vrot.slane %v1742, %v1914
          %v1916 = vsel %vm1812, %v1915, %v1911
          %v1917 = vlaneseq
          %v1918 = vshrl.u32 %v1917, 7
          %v1919 = vsub.s32 %v1814, %v1918
          %v1920 = vrot.slane %v1743, %v1919
          %v1921 = vsel %vm1819, %v1920, %v1916
          %v1922 = vlaneseq
          %v1923 = vshrl.u32 %v1922, 7
          %v1924 = vsub.s32 %v1821, %v1923
          %v1925 = vrot.slane %v1744, %v1924
          %v1926 = vsel %vm1826, %v1925, %v1921
          %v1927 = vlaneseq
          %v1928 = vshrl.u32 %v1927, 7
          %v1929 = vsub.s32 %v1828, %v1928
          %v1930 = vrot.slane %v1745, %v1929
          %v1931 = vsel %vm1833, %v1930, %v1926
          %v1932 = vlaneseq
          %v1933 = vshrl.u32 %v1932, 7
          %v1934 = vsub.s32 %v1835, %v1933
          %v1935 = vrot.slane %v1746, %v1934
          %v1936 = vsel %vm1840, %v1935, %v1931
          %v1937 = vlaneseq
          %v1938 = vshrl.u32 %v1937, 7
          %v1939 = vsub.s32 %v1842, %v1938
          %v1940 = vrot.slane %v1747, %v1939
          %v1941 = vsel %vm1847, %v1940, %v1936
          %v1942 = vlaneseq
          %v1943 = vshrl.u32 %v1942, 7
          %v1944 = vsub.s32 %v1849, %v1943
          %v1945 = vrot.slane %v1748, %v1944
          %v1946 = vsel %vm1854, %v1945, %v1941
          %v1947 = vlaneseq
          %v1948 = vshrl.u32 %v1947, 7
          %v1949 = vsub.s32 %v1856, %v1948
          %v1950 = vrot.slane %v1749, %v1949
          %v1951 = vsel %vm1861, %v1950, %v1946
          %v1952 = vlaneseq
          %v1953 = vshrl.u32 %v1952, 7
          %v1954 = vsub.s32 %v1863, %v1953
          %v1955 = vrot.slane %v1750, %v1954
          %v1956 = vsel %vm1868, %v1955, %v1951
          %v1957 = vlaneseq
          %v1958 = vshrl.u32 %v1957, 7
          %v1959 = vsub.s32 %v1870, %v1958
          %v1960 = vrot.slane %v1751, %v1959
          %v1961 = vsel %vm1875, %v1960, %v1956
          %v1962 = vlaneseq
          %v1963 = vshrl.u32 %v1962, 7
          %v1964 = vsub.s32 %v1877, %v1963
          %v1965 = vrot.slane %v1752, %v1964
          %v1966 = vsel %vm1882, %v1965, %v1961
          %v1967 = vlaneseq
          %v1968 = vshrl.u32 %v1967, 7
          %v1969 = vsub.s32 %v1884, %v1968
          %v1970 = vrot.slane %v1753, %v1969
          %v1971 = vsel %vm1889, %v1970, %v1966
          %v1972 = vlaneseq
          %v1973 = vshrl.u32 %v1972, 7
          %v1974 = vsub.s32 %v1891, %v1973
          %v1975 = vrot.slane %v1754, %v1974
          %v1976 = vsel %vm1896, %v1975, %v1971
          %vm1977 = vcmask 1042434
          %v1978 = vsel %vm1977, %v1897, %v1897
          %vm1979 = vcmask 1043459
          %v1980 = vsel %vm1979, %v1897, %v1978
          %vm1981 = vcmask 1044484
          %v1982 = vsel %vm1981, %v1897, %v1980
          %vm1983 = vcmask 1045509
          %v1984 = vsel %vm1983, %v1897, %v1982
          %vm1985 = vcmask 1046534
          %v1986 = vsel %vm1985, %v1897, %v1984
          %vm1987 = vcmask 1047559
          %v1988 = vsel %vm1987, %v1897, %v1986
          %v1989 = vsel %vm1977, %v1976, %v1976
          %v1990 = vsel %vm1979, %v1976, %v1989
          %v1991 = vsel %vm1981, %v1976, %v1990
          %v1992 = vsel %vm1983, %v1976, %v1991
          %v1993 = vsel %vm1985, %v1976, %v1992
          %v1994 = vsel %vm1987, %v1976, %v1993
          %1997 = vst [vmem:[%s148] sm:$0xff] %v1988
          %1998 = vst [vmem:[%s148 + $0x8] sm:$0xff] %v1994
        $region36: #{tpu_custom_call.1} parent=31 // pred_fallthru
          _
        %p1999 = scmp.eq.s32.totalorder %s17, 1
        // Predicated region
        $region37: #{tpu_custom_call.1} parent=31 // pred_check
          %p2000 = pneg %p1999
        $region38: #{tpu_custom_call.1} parent=31 // pred_check_branch
          %2002 = sbr.rel (%p2000) target = $region40
        $region39: #{tpu_custom_call.1} parent=31 // pred_region
          %v2003 = vld [vmem:[%s1] sm:$0xff]
          %v2004 = vld [vmem:[%s1 + $0x8] sm:$0xff]
          %v2005 = vld [vmem:[%s1 + $0x10] sm:$0xff]
          %v2006 = vld [vmem:[%s1 + $0x18] sm:$0xff]
          %v2007 = vld [vmem:[%s1 + $0x20] sm:$0xff]
          %v2008 = vld [vmem:[%s1 + $0x28] sm:$0xff]
          %v2009 = vld [vmem:[%s1 + $0x30] sm:$0xff]
          %v2010 = vld [vmem:[%s1 + $0x38] sm:$0xff]
          %v2011 = vld [vmem:[%s1 + $0x40] sm:$0xff]
          %v2012 = vld [vmem:[%s1 + $0x48] sm:$0xff]
          %v2013 = vld [vmem:[%s1 + $0x50] sm:$0xff]
          %v2014 = vld [vmem:[%s1 + $0x58] sm:$0xff]
          %v2015 = vld [vmem:[%s1 + $0x60] sm:$0xff]
          %v2016 = vld [vmem:[%s1 + $0x68] sm:$0xff]
          %v2017 = vld [vmem:[%s1 + $0x70] sm:$0xff]
          %v2018 = vld [vmem:[%s1 + $0x78] sm:$0xff]
          %v2019 = vld [vmem:[%s1 + $0x80] sm:$0xff]
          %v2020 = vld [vmem:[%s1 + $0x88] sm:$0xff]
          %v2021 = vld [vmem:[%s1 + $0x90] sm:$0xff]
          %v2022 = vld [vmem:[%s1 + $0x98] sm:$0xff]
          %v2023 = vld [vmem:[%s1 + $0xa0] sm:$0xff]
          %v2024 = vld [vmem:[%s1 + $0xa8] sm:$0xff]
          %v2025 = vld [vmem:[%s1 + $0xb0] sm:$0xff]
          %v2026 = vld [vmem:[%s1 + $0xb8] sm:$0xff]
          %v2027 = vld [vmem:[%s1 + $0xc0] sm:$0xff]
          %v2028 = vld [vmem:[%s1 + $0xc8] sm:$0xff]
          %v2029 = vld [vmem:[%s1 + $0xd0] sm:$0xff]
          %v2030 = vld [vmem:[%s1 + $0xd8] sm:$0xff]
          %v2031 = vld [vmem:[%s1 + $0xe0] sm:$0xff]
          %v2032 = vld [vmem:[%s1 + $0xe8] sm:$0xff]
          %v2033 = vld [vmem:[%s1 + $0xf0] sm:$0xff]
          %v2034 = vld [vmem:[%s1 + $0xf8] sm:$0xff]
          %v2035 = vld [vmem:[%s1 + $0x100] sm:$0xff]
          %v2036 = vld [vmem:[%s1 + $0x108] sm:$0xff]
          %v2037 = vld [vmem:[%s1 + $0x110] sm:$0xff]
          %v2038 = vld [vmem:[%s1 + $0x118] sm:$0xff]
          %v2039 = vld [vmem:[%s1 + $0x120] sm:$0xff]
          %v2040 = vld [vmem:[%s1 + $0x128] sm:$0xff]
          %v2041 = vld [vmem:[%s1 + $0x130] sm:$0xff]
          %v2042 = vld [vmem:[%s1 + $0x138] sm:$0xff]
          %v2043 = vld [vmem:[%s1 + $0x140] sm:$0xff]
          %v2044 = vld [vmem:[%s1 + $0x148] sm:$0xff]
          %v2045 = vld [vmem:[%s1 + $0x150] sm:$0xff]
          %v2046 = vld [vmem:[%s1 + $0x158] sm:$0xff]
          %v2047 = vld [vmem:[%s1 + $0x160] sm:$0xff]
          %v2048 = vld [vmem:[%s1 + $0x168] sm:$0xff]
          %v2049 = vld [vmem:[%s1 + $0x170] sm:$0xff]
          %v2050 = vld [vmem:[%s1 + $0x178] sm:$0xff]
          %v2051 = vld [vmem:[%s1 + $0x180] sm:$0xff]
          %v2052 = vld [vmem:[%s1 + $0x188] sm:$0xff]
          %v2053 = vld [vmem:[%s1 + $0x190] sm:$0xff]
          %v2054 = vld [vmem:[%s1 + $0x198] sm:$0xff]
          %v2055 = vld [vmem:[%s1 + $0x1a0] sm:$0xff]
          %v2056 = vld [vmem:[%s1 + $0x1a8] sm:$0xff]
          %v2057 = vld [vmem:[%s1 + $0x1b0] sm:$0xff]
          %v2058 = vld [vmem:[%s1 + $0x1b8] sm:$0xff]
          %v2059 = vld [vmem:[%s1 + $0x1c0] sm:$0xff]
          %v2060 = vld [vmem:[%s1 + $0x1c8] sm:$0xff]
          %v2061 = vld [vmem:[%s1 + $0x1d0] sm:$0xff]
          %v2062 = vld [vmem:[%s1 + $0x1d8] sm:$0xff]
          %v2063 = vld [vmem:[%s1 + $0x1e0] sm:$0xff]
          %v2064 = vld [vmem:[%s1 + $0x1e8] sm:$0xff]
          %v2065 = vld [vmem:[%s1 + $0x1f0] sm:$0xff]
          %v2066 = vld [vmem:[%s1 + $0x1f8] sm:$0xff]
          %v2067 = vld [vmem:[%s1 + $0x200] sm:$0xff]
          %v2068 = vld [vmem:[%s1 + $0x208] sm:$0xff]
          %v2069 = vld [vmem:[%s1 + $0x210] sm:$0xff]
          %v2070 = vld [vmem:[%s1 + $0x218] sm:$0xff]
          %v2071 = vld [vmem:[%s1 + $0x220] sm:$0xff]
          %v2072 = vld [vmem:[%s1 + $0x228] sm:$0xff]
          %v2073 = vld [vmem:[%s1 + $0x230] sm:$0xff]
          %v2074 = vld [vmem:[%s1 + $0x238] sm:$0xff]
          %v2075 = vld [vmem:[%s1 + $0x240] sm:$0xff]
          %v2076 = vld [vmem:[%s1 + $0x248] sm:$0xff]
          %v2077 = vld [vmem:[%s1 + $0x250] sm:$0xff]
          %v2078 = vld [vmem:[%s1 + $0x258] sm:$0xff]
          %v2079 = vld [vmem:[%s1 + $0x260] sm:$0xff]
          %v2080 = vld [vmem:[%s1 + $0x268] sm:$0xff]
          %v2081 = vld [vmem:[%s1 + $0x270] sm:$0xff]
          %v2082 = vld [vmem:[%s1 + $0x278] sm:$0xff]
          %v2083 = vld [vmem:[%s1 + $0x280] sm:$0xff]
          %v2084 = vld [vmem:[%s1 + $0x288] sm:$0xff]
          %v2085 = vld [vmem:[%s1 + $0x290] sm:$0xff]
          %v2086 = vld [vmem:[%s1 + $0x298] sm:$0xff]
          %v2087 = vld [vmem:[%s1 + $0x2a0] sm:$0xff]
          %v2088 = vld [vmem:[%s1 + $0x2a8] sm:$0xff]
          %v2089 = vld [vmem:[%s1 + $0x2b0] sm:$0xff]
          %v2090 = vld [vmem:[%s1 + $0x2b8] sm:$0xff]
          %v2091 = vld [vmem:[%s1 + $0x2c0] sm:$0xff]
          %v2092 = vld [vmem:[%s1 + $0x2c8] sm:$0xff]
          %v2093 = vld [vmem:[%s1 + $0x2d0] sm:$0xff]
          %v2094 = vld [vmem:[%s1 + $0x2d8] sm:$0xff]
          %v2095 = vld [vmem:[%s1 + $0x2e0] sm:$0xff]
          %v2096 = vld [vmem:[%s1 + $0x2e8] sm:$0xff]
          %v2097 = vld [vmem:[%s1 + $0x2f0] sm:$0xff]
          %v2098 = vld [vmem:[%s1 + $0x2f8] sm:$0xff]
          %v2099 = vld [vmem:[%s1 + $0x300] sm:$0xff]
          %v2100 = vld [vmem:[%s1 + $0x308] sm:$0xff]
          %v2101 = vld [vmem:[%s1 + $0x310] sm:$0xff]
          %v2102 = vld [vmem:[%s1 + $0x318] sm:$0xff]
          %v2103 = vld [vmem:[%s1 + $0x320] sm:$0xff]
          %v2104 = vld [vmem:[%s1 + $0x328] sm:$0xff]
          %v2105 = vld [vmem:[%s1 + $0x330] sm:$0xff]
          %v2106 = vld [vmem:[%s1 + $0x338] sm:$0xff]
          %v2107 = vld [vmem:[%s1 + $0x340] sm:$0xff]
          %v2108 = vld [vmem:[%s1 + $0x348] sm:$0xff]
          %v2109 = vld [vmem:[%s1 + $0x350] sm:$0xff]
          %v2110 = vld [vmem:[%s1 + $0x358] sm:$0xff]
          %v2111 = vld [vmem:[%s1 + $0x360] sm:$0xff]
          %v2112 = vld [vmem:[%s1 + $0x368] sm:$0xff]
          %v2113 = vld [vmem:[%s1 + $0x370] sm:$0xff]
          %v2114 = vld [vmem:[%s1 + $0x378] sm:$0xff]
          %v2115 = vld [vmem:[%s1 + $0x380] sm:$0xff]
          %v2116 = vld [vmem:[%s1 + $0x388] sm:$0xff]
          %v2117 = vld [vmem:[%s1 + $0x390] sm:$0xff]
          %v2118 = vld [vmem:[%s1 + $0x398] sm:$0xff]
          %v2119 = vld [vmem:[%s1 + $0x3a0] sm:$0xff]
          %v2120 = vld [vmem:[%s1 + $0x3a8] sm:$0xff]
          %v2121 = vld [vmem:[%s1 + $0x3b0] sm:$0xff]
          %v2122 = vld [vmem:[%s1 + $0x3b8] sm:$0xff]
          %v2123 = vld [vmem:[%s1 + $0x3c0] sm:$0xff]
          %v2124 = vld [vmem:[%s1 + $0x3c8] sm:$0xff]
          %v2125 = vld [vmem:[%s1 + $0x3d0] sm:$0xff]
          %v2126 = vld [vmem:[%s1 + $0x3d8] sm:$0xff]
          %v2127 = vld [vmem:[%s1 + $0x3e0] sm:$0xff]
          %v2128 = vld [vmem:[%s1 + $0x3e8] sm:$0xff]
          %v2129 = vld [vmem:[%s1 + $0x3f0] sm:$0xff]
          %v2130 = vld [vmem:[%s1 + $0x3f8] sm:$0xff]
          %v2131 = vld [vmem:[%s1 + $0x400] sm:$0xff]
          %v2132 = vld [vmem:[%s1 + $0x408] sm:$0xff]
          %v2133 = vld [vmem:[%s1 + $0x410] sm:$0xff]
          %v2134 = vld [vmem:[%s1 + $0x418] sm:$0xff]
          %v2135 = vld [vmem:[%s1 + $0x420] sm:$0xff]
          %v2136 = vld [vmem:[%s1 + $0x428] sm:$0xff]
          %v2137 = vld [vmem:[%s1 + $0x430] sm:$0xff]
          %v2138 = vld [vmem:[%s1 + $0x438] sm:$0xff]
          %v2139 = vld [vmem:[%s1 + $0x440] sm:$0xff]
          %v2140 = vld [vmem:[%s1 + $0x448] sm:$0xff]
          %v2141 = vld [vmem:[%s1 + $0x450] sm:$0xff]
          %v2142 = vld [vmem:[%s1 + $0x458] sm:$0xff]
          %v2143 = vld [vmem:[%s1 + $0x460] sm:$0xff]
          %v2144 = vld [vmem:[%s1 + $0x468] sm:$0xff]
          %v2145 = vld [vmem:[%s1 + $0x470] sm:$0xff]
          %v2146 = vld [vmem:[%s1 + $0x478] sm:$0xff]
          %v2147 = vld [vmem:[%s1 + $0x480] sm:$0xff]
          %v2148 = vld [vmem:[%s1 + $0x488] sm:$0xff]
          %v2149 = vld [vmem:[%s1 + $0x490] sm:$0xff]
          %v2150 = vld [vmem:[%s1 + $0x498] sm:$0xff]
          %v2151 = vld [vmem:[%s1 + $0x4a0] sm:$0xff]
          %v2152 = vld [vmem:[%s1 + $0x4a8] sm:$0xff]
          %v2153 = vld [vmem:[%s1 + $0x4b0] sm:$0xff]
          %v2154 = vld [vmem:[%s1 + $0x4b8] sm:$0xff]
          %v2155 = vld [vmem:[%s1 + $0x4c0] sm:$0xff]
          %v2156 = vld [vmem:[%s1 + $0x4c8] sm:$0xff]
          %v2157 = vld [vmem:[%s1 + $0x4d0] sm:$0xff]
          %v2158 = vld [vmem:[%s1 + $0x4d8] sm:$0xff]
          %v2159 = vld [vmem:[%s1 + $0x4e0] sm:$0xff]
          %v2160 = vld [vmem:[%s1 + $0x4e8] sm:$0xff]
          %v2161 = vld [vmem:[%s1 + $0x4f0] sm:$0xff]
          %v2162 = vld [vmem:[%s1 + $0x4f8] sm:$0xff]
          %v2163 = vld [vmem:[%s1 + $0x500] sm:$0xff]
          %v2164 = vld [vmem:[%s1 + $0x508] sm:$0xff]
          %v2165 = vld [vmem:[%s1 + $0x510] sm:$0xff]
          %v2166 = vld [vmem:[%s1 + $0x518] sm:$0xff]
          %v2167 = vld [vmem:[%s1 + $0x520] sm:$0xff]
          %v2168 = vld [vmem:[%s1 + $0x528] sm:$0xff]
          %v2169 = vld [vmem:[%s1 + $0x530] sm:$0xff]
          %v2170 = vld [vmem:[%s1 + $0x538] sm:$0xff]
          %v2171 = vld [vmem:[%s1 + $0x540] sm:$0xff]
          %v2172 = vld [vmem:[%s1 + $0x548] sm:$0xff]
          %v2173 = vld [vmem:[%s1 + $0x550] sm:$0xff]
          %v2174 = vld [vmem:[%s1 + $0x558] sm:$0xff]
          %v2175 = vld [vmem:[%s1 + $0x560] sm:$0xff]
          %v2176 = vld [vmem:[%s1 + $0x568] sm:$0xff]
          %v2177 = vld [vmem:[%s1 + $0x570] sm:$0xff]
          %v2178 = vld [vmem:[%s1 + $0x578] sm:$0xff]
          %v2179 = vld [vmem:[%s1 + $0x580] sm:$0xff]
          %v2180 = vld [vmem:[%s1 + $0x588] sm:$0xff]
          %v2181 = vld [vmem:[%s1 + $0x590] sm:$0xff]
          %v2182 = vld [vmem:[%s1 + $0x598] sm:$0xff]
          %v2183 = vld [vmem:[%s1 + $0x5a0] sm:$0xff]
          %v2184 = vld [vmem:[%s1 + $0x5a8] sm:$0xff]
          %v2185 = vld [vmem:[%s1 + $0x5b0] sm:$0xff]
          %v2186 = vld [vmem:[%s1 + $0x5b8] sm:$0xff]
          %v2187 = vld [vmem:[%s1 + $0x5c0] sm:$0xff]
          %v2188 = vld [vmem:[%s1 + $0x5c8] sm:$0xff]
          %v2189 = vld [vmem:[%s1 + $0x5d0] sm:$0xff]
          %v2190 = vld [vmem:[%s1 + $0x5d8] sm:$0xff]
          %v2191 = vld [vmem:[%s1 + $0x5e0] sm:$0xff]
          %v2192 = vld [vmem:[%s1 + $0x5e8] sm:$0xff]
          %v2193 = vld [vmem:[%s1 + $0x5f0] sm:$0xff]
          %v2194 = vld [vmem:[%s1 + $0x5f8] sm:$0xff]
          %v2195 = vld [vmem:[%s1 + $0x600] sm:$0xff]
          %v2196 = vld [vmem:[%s1 + $0x608] sm:$0xff]
          %v2197 = vld [vmem:[%s1 + $0x610] sm:$0xff]
          %v2198 = vld [vmem:[%s1 + $0x618] sm:$0xff]
          %v2199 = vld [vmem:[%s1 + $0x620] sm:$0xff]
          %v2200 = vld [vmem:[%s1 + $0x628] sm:$0xff]
          %v2201 = vld [vmem:[%s1 + $0x630] sm:$0xff]
          %v2202 = vld [vmem:[%s1 + $0x638] sm:$0xff]
          %v2203 = vld [vmem:[%s1 + $0x640] sm:$0xff]
          %v2204 = vld [vmem:[%s1 + $0x648] sm:$0xff]
          %v2205 = vld [vmem:[%s1 + $0x650] sm:$0xff]
          %v2206 = vld [vmem:[%s1 + $0x658] sm:$0xff]
          %v2207 = vld [vmem:[%s1 + $0x660] sm:$0xff]
          %v2208 = vld [vmem:[%s1 + $0x668] sm:$0xff]
          %v2209 = vld [vmem:[%s1 + $0x670] sm:$0xff]
          %v2210 = vld [vmem:[%s1 + $0x678] sm:$0xff]
          %v2211 = vld [vmem:[%s1 + $0x680] sm:$0xff]
          %v2212 = vld [vmem:[%s1 + $0x688] sm:$0xff]
          %v2213 = vld [vmem:[%s1 + $0x690] sm:$0xff]
          %v2214 = vld [vmem:[%s1 + $0x698] sm:$0xff]
          %v2215 = vld [vmem:[%s1 + $0x6a0] sm:$0xff]
          %v2216 = vld [vmem:[%s1 + $0x6a8] sm:$0xff]
          %v2217 = vld [vmem:[%s1 + $0x6b0] sm:$0xff]
          %v2218 = vld [vmem:[%s1 + $0x6b8] sm:$0xff]
          %v2219 = vld [vmem:[%s1 + $0x6c0] sm:$0xff]
          %v2220 = vld [vmem:[%s1 + $0x6c8] sm:$0xff]
          %v2221 = vld [vmem:[%s1 + $0x6d0] sm:$0xff]
          %v2222 = vld [vmem:[%s1 + $0x6d8] sm:$0xff]
          %v2223 = vld [vmem:[%s1 + $0x6e0] sm:$0xff]
          %v2224 = vld [vmem:[%s1 + $0x6e8] sm:$0xff]
          %v2225 = vld [vmem:[%s1 + $0x6f0] sm:$0xff]
          %v2226 = vld [vmem:[%s1 + $0x6f8] sm:$0xff]
          %v2227 = vld [vmem:[%s1 + $0x700] sm:$0xff]
          %v2228 = vld [vmem:[%s1 + $0x708] sm:$0xff]
          %v2229 = vld [vmem:[%s1 + $0x710] sm:$0xff]
          %v2230 = vld [vmem:[%s1 + $0x718] sm:$0xff]
          %v2231 = vld [vmem:[%s1 + $0x720] sm:$0xff]
          %v2232 = vld [vmem:[%s1 + $0x728] sm:$0xff]
          %v2233 = vld [vmem:[%s1 + $0x730] sm:$0xff]
          %v2234 = vld [vmem:[%s1 + $0x738] sm:$0xff]
          %v2235 = vld [vmem:[%s1 + $0x740] sm:$0xff]
          %v2236 = vld [vmem:[%s1 + $0x748] sm:$0xff]
          %v2237 = vld [vmem:[%s1 + $0x750] sm:$0xff]
          %v2238 = vld [vmem:[%s1 + $0x758] sm:$0xff]
          %v2239 = vld [vmem:[%s1 + $0x760] sm:$0xff]
          %v2240 = vld [vmem:[%s1 + $0x768] sm:$0xff]
          %v2241 = vld [vmem:[%s1 + $0x770] sm:$0xff]
          %v2242 = vld [vmem:[%s1 + $0x778] sm:$0xff]
          %v2243 = vld [vmem:[%s1 + $0x780] sm:$0xff]
          %v2244 = vld [vmem:[%s1 + $0x788] sm:$0xff]
          %v2245 = vld [vmem:[%s1 + $0x790] sm:$0xff]
          %v2246 = vld [vmem:[%s1 + $0x798] sm:$0xff]
          %v2247 = vld [vmem:[%s1 + $0x7a0] sm:$0xff]
          %v2248 = vld [vmem:[%s1 + $0x7a8] sm:$0xff]
          %v2249 = vld [vmem:[%s1 + $0x7b0] sm:$0xff]
          %v2250 = vld [vmem:[%s1 + $0x7b8] sm:$0xff]
          %v2251 = vld [vmem:[%s1 + $0x7c0] sm:$0xff]
          %v2252 = vld [vmem:[%s1 + $0x7c8] sm:$0xff]
          %v2253 = vld [vmem:[%s1 + $0x7d0] sm:$0xff]
          %v2254 = vld [vmem:[%s1 + $0x7d8] sm:$0xff]
          %v2255 = vld [vmem:[%s1 + $0x7e0] sm:$0xff]
          %v2256 = vld [vmem:[%s1 + $0x7e8] sm:$0xff]
          %v2257 = vld [vmem:[%s1 + $0x7f0] sm:$0xff]
          %v2258 = vld [vmem:[%s1 + $0x7f8] sm:$0xff]
          %vm2259 = vcmask 400384
          %v2260 = vsel %vm2259, %v2003, 0.0
          %2261 = vadd.xlane.f32.xlu0 %v2260
          %v2262 = vpop.xlane.xlu0 %2261
          %v2263 = vsel %vm2259, %v2004, 0.0
          %2264 = vadd.xlane.f32.xlu0 %v2263
          %v2265 = vpop.xlane.xlu0 %2264
          %v2266 = vsel %vm2259, %v2005, 0.0
          %2267 = vadd.xlane.f32.xlu0 %v2266
          %v2268 = vpop.xlane.xlu0 %2267
          %v2269 = vsel %vm2259, %v2006, 0.0
          %2270 = vadd.xlane.f32.xlu0 %v2269
          %v2271 = vpop.xlane.xlu0 %2270
          %v2272 = vsel %vm2259, %v2007, 0.0
          %2273 = vadd.xlane.f32.xlu0 %v2272
          %v2274 = vpop.xlane.xlu0 %2273
          %v2275 = vsel %vm2259, %v2008, 0.0
          %2276 = vadd.xlane.f32.xlu0 %v2275
          %v2277 = vpop.xlane.xlu0 %2276
          %v2278 = vsel %vm2259, %v2009, 0.0
          %2279 = vadd.xlane.f32.xlu0 %v2278
          %v2280 = vpop.xlane.xlu0 %2279
          %v2281 = vsel %vm2259, %v2010, 0.0
          %2282 = vadd.xlane.f32.xlu0 %v2281
          %v2283 = vpop.xlane.xlu0 %2282
          %v2284 = vsel %vm2259, %v2011, 0.0
          %2285 = vadd.xlane.f32.xlu0 %v2284
          %v2286 = vpop.xlane.xlu0 %2285
          %v2287 = vsel %vm2259, %v2012, 0.0
          %2288 = vadd.xlane.f32.xlu0 %v2287
          %v2289 = vpop.xlane.xlu0 %2288
          %v2290 = vsel %vm2259, %v2013, 0.0
          %2291 = vadd.xlane.f32.xlu0 %v2290
          %v2292 = vpop.xlane.xlu0 %2291
          %v2293 = vsel %vm2259, %v2014, 0.0
          %2294 = vadd.xlane.f32.xlu0 %v2293
          %v2295 = vpop.xlane.xlu0 %2294
          %v2296 = vsel %vm2259, %v2015, 0.0
          %2297 = vadd.xlane.f32.xlu0 %v2296
          %v2298 = vpop.xlane.xlu0 %2297
          %v2299 = vsel %vm2259, %v2016, 0.0
          %2300 = vadd.xlane.f32.xlu0 %v2299
          %v2301 = vpop.xlane.xlu0 %2300
          %v2302 = vsel %vm2259, %v2017, 0.0
          %2303 = vadd.xlane.f32.xlu0 %v2302
          %v2304 = vpop.xlane.xlu0 %2303
          %v2305 = vsel %vm2259, %v2018, 0.0
          %2306 = vadd.xlane.f32.xlu0 %v2305
          %v2307 = vpop.xlane.xlu0 %2306
          %v2308 = vsel %vm2259, %v2019, 0.0
          %2309 = vadd.xlane.f32.xlu0 %v2308
          %v2310 = vpop.xlane.xlu0 %2309
          %v2311 = vsel %vm2259, %v2020, 0.0
          %2312 = vadd.xlane.f32.xlu0 %v2311
          %v2313 = vpop.xlane.xlu0 %2312
          %v2314 = vsel %vm2259, %v2021, 0.0
          %2315 = vadd.xlane.f32.xlu0 %v2314
          %v2316 = vpop.xlane.xlu0 %2315
          %v2317 = vsel %vm2259, %v2022, 0.0
          %2318 = vadd.xlane.f32.xlu0 %v2317
          %v2319 = vpop.xlane.xlu0 %2318
          %v2320 = vsel %vm2259, %v2023, 0.0
          %2321 = vadd.xlane.f32.xlu0 %v2320
          %v2322 = vpop.xlane.xlu0 %2321
          %v2323 = vsel %vm2259, %v2024, 0.0
          %2324 = vadd.xlane.f32.xlu0 %v2323
          %v2325 = vpop.xlane.xlu0 %2324
          %v2326 = vsel %vm2259, %v2025, 0.0
          %2327 = vadd.xlane.f32.xlu0 %v2326
          %v2328 = vpop.xlane.xlu0 %2327
          %v2329 = vsel %vm2259, %v2026, 0.0
          %2330 = vadd.xlane.f32.xlu0 %v2329
          %v2331 = vpop.xlane.xlu0 %2330
          %v2332 = vsel %vm2259, %v2027, 0.0
          %2333 = vadd.xlane.f32.xlu0 %v2332
          %v2334 = vpop.xlane.xlu0 %2333
          %v2335 = vsel %vm2259, %v2028, 0.0
          %2336 = vadd.xlane.f32.xlu0 %v2335
          %v2337 = vpop.xlane.xlu0 %2336
          %v2338 = vsel %vm2259, %v2029, 0.0
          %2339 = vadd.xlane.f32.xlu0 %v2338
          %v2340 = vpop.xlane.xlu0 %2339
          %v2341 = vsel %vm2259, %v2030, 0.0
          %2342 = vadd.xlane.f32.xlu0 %v2341
          %v2343 = vpop.xlane.xlu0 %2342
          %v2344 = vsel %vm2259, %v2031, 0.0
          %2345 = vadd.xlane.f32.xlu0 %v2344
          %v2346 = vpop.xlane.xlu0 %2345
          %v2347 = vsel %vm2259, %v2032, 0.0
          %2348 = vadd.xlane.f32.xlu0 %v2347
          %v2349 = vpop.xlane.xlu0 %2348
          %v2350 = vsel %vm2259, %v2033, 0.0
          %2351 = vadd.xlane.f32.xlu0 %v2350
          %v2352 = vpop.xlane.xlu0 %2351
          %v2353 = vsel %vm2259, %v2034, 0.0
          %2354 = vadd.xlane.f32.xlu0 %v2353
          %v2355 = vpop.xlane.xlu0 %2354
          %v2356 = vsel %vm2259, %v2035, 0.0
          %2357 = vadd.xlane.f32.xlu0 %v2356
          %v2358 = vpop.xlane.xlu0 %2357
          %v2359 = vsel %vm2259, %v2036, 0.0
          %2360 = vadd.xlane.f32.xlu0 %v2359
          %v2361 = vpop.xlane.xlu0 %2360
          %v2362 = vsel %vm2259, %v2037, 0.0
          %2363 = vadd.xlane.f32.xlu0 %v2362
          %v2364 = vpop.xlane.xlu0 %2363
          %v2365 = vsel %vm2259, %v2038, 0.0
          %2366 = vadd.xlane.f32.xlu0 %v2365
          %v2367 = vpop.xlane.xlu0 %2366
          %v2368 = vsel %vm2259, %v2039, 0.0
          %2369 = vadd.xlane.f32.xlu0 %v2368
          %v2370 = vpop.xlane.xlu0 %2369
          %v2371 = vsel %vm2259, %v2040, 0.0
          %2372 = vadd.xlane.f32.xlu0 %v2371
          %v2373 = vpop.xlane.xlu0 %2372
          %v2374 = vsel %vm2259, %v2041, 0.0
          %2375 = vadd.xlane.f32.xlu0 %v2374
          %v2376 = vpop.xlane.xlu0 %2375
          %v2377 = vsel %vm2259, %v2042, 0.0
          %2378 = vadd.xlane.f32.xlu0 %v2377
          %v2379 = vpop.xlane.xlu0 %2378
          %v2380 = vsel %vm2259, %v2043, 0.0
          %2381 = vadd.xlane.f32.xlu0 %v2380
          %v2382 = vpop.xlane.xlu0 %2381
          %v2383 = vsel %vm2259, %v2044, 0.0
          %2384 = vadd.xlane.f32.xlu0 %v2383
          %v2385 = vpop.xlane.xlu0 %2384
          %v2386 = vsel %vm2259, %v2045, 0.0
          %2387 = vadd.xlane.f32.xlu0 %v2386
          %v2388 = vpop.xlane.xlu0 %2387
          %v2389 = vsel %vm2259, %v2046, 0.0
          %2390 = vadd.xlane.f32.xlu0 %v2389
          %v2391 = vpop.xlane.xlu0 %2390
          %v2392 = vsel %vm2259, %v2047, 0.0
          %2393 = vadd.xlane.f32.xlu0 %v2392
          %v2394 = vpop.xlane.xlu0 %2393
          %v2395 = vsel %vm2259, %v2048, 0.0
          %2396 = vadd.xlane.f32.xlu0 %v2395
          %v2397 = vpop.xlane.xlu0 %2396
          %v2398 = vsel %vm2259, %v2049, 0.0
          %2399 = vadd.xlane.f32.xlu0 %v2398
          %v2400 = vpop.xlane.xlu0 %2399
          %v2401 = vsel %vm2259, %v2050, 0.0
          %2402 = vadd.xlane.f32.xlu0 %v2401
          %v2403 = vpop.xlane.xlu0 %2402
          %v2404 = vsel %vm2259, %v2051, 0.0
          %2405 = vadd.xlane.f32.xlu0 %v2404
          %v2406 = vpop.xlane.xlu0 %2405
          %v2407 = vsel %vm2259, %v2052, 0.0
          %2408 = vadd.xlane.f32.xlu0 %v2407
          %v2409 = vpop.xlane.xlu0 %2408
          %v2410 = vsel %vm2259, %v2053, 0.0
          %2411 = vadd.xlane.f32.xlu0 %v2410
          %v2412 = vpop.xlane.xlu0 %2411
          %v2413 = vsel %vm2259, %v2054, 0.0
          %2414 = vadd.xlane.f32.xlu0 %v2413
          %v2415 = vpop.xlane.xlu0 %2414
          %v2416 = vsel %vm2259, %v2055, 0.0
          %2417 = vadd.xlane.f32.xlu0 %v2416
          %v2418 = vpop.xlane.xlu0 %2417
          %v2419 = vsel %vm2259, %v2056, 0.0
          %2420 = vadd.xlane.f32.xlu0 %v2419
          %v2421 = vpop.xlane.xlu0 %2420
          %v2422 = vsel %vm2259, %v2057, 0.0
          %2423 = vadd.xlane.f32.xlu0 %v2422
          %v2424 = vpop.xlane.xlu0 %2423
          %v2425 = vsel %vm2259, %v2058, 0.0
          %2426 = vadd.xlane.f32.xlu0 %v2425
          %v2427 = vpop.xlane.xlu0 %2426
          %v2428 = vsel %vm2259, %v2059, 0.0
          %2429 = vadd.xlane.f32.xlu0 %v2428
          %v2430 = vpop.xlane.xlu0 %2429
          %v2431 = vsel %vm2259, %v2060, 0.0
          %2432 = vadd.xlane.f32.xlu0 %v2431
          %v2433 = vpop.xlane.xlu0 %2432
          %v2434 = vsel %vm2259, %v2061, 0.0
          %2435 = vadd.xlane.f32.xlu0 %v2434
          %v2436 = vpop.xlane.xlu0 %2435
          %v2437 = vsel %vm2259, %v2062, 0.0
          %2438 = vadd.xlane.f32.xlu0 %v2437
          %v2439 = vpop.xlane.xlu0 %2438
          %v2440 = vsel %vm2259, %v2063, 0.0
          %2441 = vadd.xlane.f32.xlu0 %v2440
          %v2442 = vpop.xlane.xlu0 %2441
          %v2443 = vsel %vm2259, %v2064, 0.0
          %2444 = vadd.xlane.f32.xlu0 %v2443
          %v2445 = vpop.xlane.xlu0 %2444
          %v2446 = vsel %vm2259, %v2065, 0.0
          %2447 = vadd.xlane.f32.xlu0 %v2446
          %v2448 = vpop.xlane.xlu0 %2447
          %v2449 = vsel %vm2259, %v2066, 0.0
          %2450 = vadd.xlane.f32.xlu0 %v2449
          %v2451 = vpop.xlane.xlu0 %2450
          %v2452 = vsel %vm2259, %v2067, 0.0
          %2453 = vadd.xlane.f32.xlu0 %v2452
          %v2454 = vpop.xlane.xlu0 %2453
          %v2455 = vsel %vm2259, %v2068, 0.0
          %2456 = vadd.xlane.f32.xlu0 %v2455
          %v2457 = vpop.xlane.xlu0 %2456
          %v2458 = vsel %vm2259, %v2069, 0.0
          %2459 = vadd.xlane.f32.xlu0 %v2458
          %v2460 = vpop.xlane.xlu0 %2459
          %v2461 = vsel %vm2259, %v2070, 0.0
          %2462 = vadd.xlane.f32.xlu0 %v2461
          %v2463 = vpop.xlane.xlu0 %2462
          %v2464 = vsel %vm2259, %v2071, 0.0
          %2465 = vadd.xlane.f32.xlu0 %v2464
          %v2466 = vpop.xlane.xlu0 %2465
          %v2467 = vsel %vm2259, %v2072, 0.0
          %2468 = vadd.xlane.f32.xlu0 %v2467
          %v2469 = vpop.xlane.xlu0 %2468
          %v2470 = vsel %vm2259, %v2073, 0.0
          %2471 = vadd.xlane.f32.xlu0 %v2470
          %v2472 = vpop.xlane.xlu0 %2471
          %v2473 = vsel %vm2259, %v2074, 0.0
          %2474 = vadd.xlane.f32.xlu0 %v2473
          %v2475 = vpop.xlane.xlu0 %2474
          %v2476 = vsel %vm2259, %v2075, 0.0
          %2477 = vadd.xlane.f32.xlu0 %v2476
          %v2478 = vpop.xlane.xlu0 %2477
          %v2479 = vsel %vm2259, %v2076, 0.0
          %2480 = vadd.xlane.f32.xlu0 %v2479
          %v2481 = vpop.xlane.xlu0 %2480
          %v2482 = vsel %vm2259, %v2077, 0.0
          %2483 = vadd.xlane.f32.xlu0 %v2482
          %v2484 = vpop.xlane.xlu0 %2483
          %v2485 = vsel %vm2259, %v2078, 0.0
          %2486 = vadd.xlane.f32.xlu0 %v2485
          %v2487 = vpop.xlane.xlu0 %2486
          %v2488 = vsel %vm2259, %v2079, 0.0
          %2489 = vadd.xlane.f32.xlu0 %v2488
          %v2490 = vpop.xlane.xlu0 %2489
          %v2491 = vsel %vm2259, %v2080, 0.0
          %2492 = vadd.xlane.f32.xlu0 %v2491
          %v2493 = vpop.xlane.xlu0 %2492
          %v2494 = vsel %vm2259, %v2081, 0.0
          %2495 = vadd.xlane.f32.xlu0 %v2494
          %v2496 = vpop.xlane.xlu0 %2495
          %v2497 = vsel %vm2259, %v2082, 0.0
          %2498 = vadd.xlane.f32.xlu0 %v2497
          %v2499 = vpop.xlane.xlu0 %2498
          %v2500 = vsel %vm2259, %v2083, 0.0
          %2501 = vadd.xlane.f32.xlu0 %v2500
          %v2502 = vpop.xlane.xlu0 %2501
          %v2503 = vsel %vm2259, %v2084, 0.0
          %2504 = vadd.xlane.f32.xlu0 %v2503
          %v2505 = vpop.xlane.xlu0 %2504
          %v2506 = vsel %vm2259, %v2085, 0.0
          %2507 = vadd.xlane.f32.xlu0 %v2506
          %v2508 = vpop.xlane.xlu0 %2507
          %v2509 = vsel %vm2259, %v2086, 0.0
          %2510 = vadd.xlane.f32.xlu0 %v2509
          %v2511 = vpop.xlane.xlu0 %2510
          %v2512 = vsel %vm2259, %v2087, 0.0
          %2513 = vadd.xlane.f32.xlu0 %v2512
          %v2514 = vpop.xlane.xlu0 %2513
          %v2515 = vsel %vm2259, %v2088, 0.0
          %2516 = vadd.xlane.f32.xlu0 %v2515
          %v2517 = vpop.xlane.xlu0 %2516
          %v2518 = vsel %vm2259, %v2089, 0.0
          %2519 = vadd.xlane.f32.xlu0 %v2518
          %v2520 = vpop.xlane.xlu0 %2519
          %v2521 = vsel %vm2259, %v2090, 0.0
          %2522 = vadd.xlane.f32.xlu0 %v2521
          %v2523 = vpop.xlane.xlu0 %2522
          %v2524 = vsel %vm2259, %v2091, 0.0
          %2525 = vadd.xlane.f32.xlu0 %v2524
          %v2526 = vpop.xlane.xlu0 %2525
          %v2527 = vsel %vm2259, %v2092, 0.0
          %2528 = vadd.xlane.f32.xlu0 %v2527
          %v2529 = vpop.xlane.xlu0 %2528
          %v2530 = vsel %vm2259, %v2093, 0.0
          %2531 = vadd.xlane.f32.xlu0 %v2530
          %v2532 = vpop.xlane.xlu0 %2531
          %v2533 = vsel %vm2259, %v2094, 0.0
          %2534 = vadd.xlane.f32.xlu0 %v2533
          %v2535 = vpop.xlane.xlu0 %2534
          %v2536 = vsel %vm2259, %v2095, 0.0
          %2537 = vadd.xlane.f32.xlu0 %v2536
          %v2538 = vpop.xlane.xlu0 %2537
          %v2539 = vsel %vm2259, %v2096, 0.0
          %2540 = vadd.xlane.f32.xlu0 %v2539
          %v2541 = vpop.xlane.xlu0 %2540
          %v2542 = vsel %vm2259, %v2097, 0.0
          %2543 = vadd.xlane.f32.xlu0 %v2542
          %v2544 = vpop.xlane.xlu0 %2543
          %v2545 = vsel %vm2259, %v2098, 0.0
          %2546 = vadd.xlane.f32.xlu0 %v2545
          %v2547 = vpop.xlane.xlu0 %2546
          %v2548 = vsel %vm2259, %v2099, 0.0
          %2549 = vadd.xlane.f32.xlu0 %v2548
          %v2550 = vpop.xlane.xlu0 %2549
          %v2551 = vsel %vm2259, %v2100, 0.0
          %2552 = vadd.xlane.f32.xlu0 %v2551
          %v2553 = vpop.xlane.xlu0 %2552
          %v2554 = vsel %vm2259, %v2101, 0.0
          %2555 = vadd.xlane.f32.xlu0 %v2554
          %v2556 = vpop.xlane.xlu0 %2555
          %v2557 = vsel %vm2259, %v2102, 0.0
          %2558 = vadd.xlane.f32.xlu0 %v2557
          %v2559 = vpop.xlane.xlu0 %2558
          %v2560 = vsel %vm2259, %v2103, 0.0
          %2561 = vadd.xlane.f32.xlu0 %v2560
          %v2562 = vpop.xlane.xlu0 %2561
          %v2563 = vsel %vm2259, %v2104, 0.0
          %2564 = vadd.xlane.f32.xlu0 %v2563
          %v2565 = vpop.xlane.xlu0 %2564
          %v2566 = vsel %vm2259, %v2105, 0.0
          %2567 = vadd.xlane.f32.xlu0 %v2566
          %v2568 = vpop.xlane.xlu0 %2567
          %v2569 = vsel %vm2259, %v2106, 0.0
          %2570 = vadd.xlane.f32.xlu0 %v2569
          %v2571 = vpop.xlane.xlu0 %2570
          %v2572 = vsel %vm2259, %v2107, 0.0
          %2573 = vadd.xlane.f32.xlu0 %v2572
          %v2574 = vpop.xlane.xlu0 %2573
          %v2575 = vsel %vm2259, %v2108, 0.0
          %2576 = vadd.xlane.f32.xlu0 %v2575
          %v2577 = vpop.xlane.xlu0 %2576
          %v2578 = vsel %vm2259, %v2109, 0.0
          %2579 = vadd.xlane.f32.xlu0 %v2578
          %v2580 = vpop.xlane.xlu0 %2579
          %v2581 = vsel %vm2259, %v2110, 0.0
          %2582 = vadd.xlane.f32.xlu0 %v2581
          %v2583 = vpop.xlane.xlu0 %2582
          %v2584 = vsel %vm2259, %v2111, 0.0
          %2585 = vadd.xlane.f32.xlu0 %v2584
          %v2586 = vpop.xlane.xlu0 %2585
          %v2587 = vsel %vm2259, %v2112, 0.0
          %2588 = vadd.xlane.f32.xlu0 %v2587
          %v2589 = vpop.xlane.xlu0 %2588
          %v2590 = vsel %vm2259, %v2113, 0.0
          %2591 = vadd.xlane.f32.xlu0 %v2590
          %v2592 = vpop.xlane.xlu0 %2591
          %v2593 = vsel %vm2259, %v2114, 0.0
          %2594 = vadd.xlane.f32.xlu0 %v2593
          %v2595 = vpop.xlane.xlu0 %2594
          %v2596 = vsel %vm2259, %v2115, 0.0
          %2597 = vadd.xlane.f32.xlu0 %v2596
          %v2598 = vpop.xlane.xlu0 %2597
          %v2599 = vsel %vm2259, %v2116, 0.0
          %2600 = vadd.xlane.f32.xlu0 %v2599
          %v2601 = vpop.xlane.xlu0 %2600
          %v2602 = vsel %vm2259, %v2117, 0.0
          %2603 = vadd.xlane.f32.xlu0 %v2602
          %v2604 = vpop.xlane.xlu0 %2603
          %v2605 = vsel %vm2259, %v2118, 0.0
          %2606 = vadd.xlane.f32.xlu0 %v2605
          %v2607 = vpop.xlane.xlu0 %2606
          %v2608 = vsel %vm2259, %v2119, 0.0
          %2609 = vadd.xlane.f32.xlu0 %v2608
          %v2610 = vpop.xlane.xlu0 %2609
          %v2611 = vsel %vm2259, %v2120, 0.0
          %2612 = vadd.xlane.f32.xlu0 %v2611
          %v2613 = vpop.xlane.xlu0 %2612
          %v2614 = vsel %vm2259, %v2121, 0.0
          %2615 = vadd.xlane.f32.xlu0 %v2614
          %v2616 = vpop.xlane.xlu0 %2615
          %v2617 = vsel %vm2259, %v2122, 0.0
          %2618 = vadd.xlane.f32.xlu0 %v2617
          %v2619 = vpop.xlane.xlu0 %2618
          %v2620 = vsel %vm2259, %v2123, 0.0
          %2621 = vadd.xlane.f32.xlu0 %v2620
          %v2622 = vpop.xlane.xlu0 %2621
          %v2623 = vsel %vm2259, %v2124, 0.0
          %2624 = vadd.xlane.f32.xlu0 %v2623
          %v2625 = vpop.xlane.xlu0 %2624
          %v2626 = vsel %vm2259, %v2125, 0.0
          %2627 = vadd.xlane.f32.xlu0 %v2626
          %v2628 = vpop.xlane.xlu0 %2627
          %v2629 = vsel %vm2259, %v2126, 0.0
          %2630 = vadd.xlane.f32.xlu0 %v2629
          %v2631 = vpop.xlane.xlu0 %2630
          %v2632 = vsel %vm2259, %v2127, 0.0
          %2633 = vadd.xlane.f32.xlu0 %v2632
          %v2634 = vpop.xlane.xlu0 %2633
          %v2635 = vsel %vm2259, %v2128, 0.0
          %2636 = vadd.xlane.f32.xlu0 %v2635
          %v2637 = vpop.xlane.xlu0 %2636
          %v2638 = vsel %vm2259, %v2129, 0.0
          %2639 = vadd.xlane.f32.xlu0 %v2638
          %v2640 = vpop.xlane.xlu0 %2639
          %v2641 = vsel %vm2259, %v2130, 0.0
          %2642 = vadd.xlane.f32.xlu0 %v2641
          %v2643 = vpop.xlane.xlu0 %2642
          %v2644 = vsel %vm2259, %v2131, 0.0
          %2645 = vadd.xlane.f32.xlu0 %v2644
          %v2646 = vpop.xlane.xlu0 %2645
          %v2647 = vsel %vm2259, %v2132, 0.0
          %2648 = vadd.xlane.f32.xlu0 %v2647
          %v2649 = vpop.xlane.xlu0 %2648
          %v2650 = vsel %vm2259, %v2133, 0.0
          %2651 = vadd.xlane.f32.xlu0 %v2650
          %v2652 = vpop.xlane.xlu0 %2651
          %v2653 = vsel %vm2259, %v2134, 0.0
          %2654 = vadd.xlane.f32.xlu0 %v2653
          %v2655 = vpop.xlane.xlu0 %2654
          %v2656 = vsel %vm2259, %v2135, 0.0
          %2657 = vadd.xlane.f32.xlu0 %v2656
          %v2658 = vpop.xlane.xlu0 %2657
          %v2659 = vsel %vm2259, %v2136, 0.0
          %2660 = vadd.xlane.f32.xlu0 %v2659
          %v2661 = vpop.xlane.xlu0 %2660
          %v2662 = vsel %vm2259, %v2137, 0.0
          %2663 = vadd.xlane.f32.xlu0 %v2662
          %v2664 = vpop.xlane.xlu0 %2663
          %v2665 = vsel %vm2259, %v2138, 0.0
          %2666 = vadd.xlane.f32.xlu0 %v2665
          %v2667 = vpop.xlane.xlu0 %2666
          %v2668 = vsel %vm2259, %v2139, 0.0
          %2669 = vadd.xlane.f32.xlu0 %v2668
          %v2670 = vpop.xlane.xlu0 %2669
          %v2671 = vsel %vm2259, %v2140, 0.0
          %2672 = vadd.xlane.f32.xlu0 %v2671
          %v2673 = vpop.xlane.xlu0 %2672
          %v2674 = vsel %vm2259, %v2141, 0.0
          %2675 = vadd.xlane.f32.xlu0 %v2674
          %v2676 = vpop.xlane.xlu0 %2675
          %v2677 = vsel %vm2259, %v2142, 0.0
          %2678 = vadd.xlane.f32.xlu0 %v2677
          %v2679 = vpop.xlane.xlu0 %2678
          %v2680 = vsel %vm2259, %v2143, 0.0
          %2681 = vadd.xlane.f32.xlu0 %v2680
          %v2682 = vpop.xlane.xlu0 %2681
          %v2683 = vsel %vm2259, %v2144, 0.0
          %2684 = vadd.xlane.f32.xlu0 %v2683
          %v2685 = vpop.xlane.xlu0 %2684
          %v2686 = vsel %vm2259, %v2145, 0.0
          %2687 = vadd.xlane.f32.xlu0 %v2686
          %v2688 = vpop.xlane.xlu0 %2687
          %v2689 = vsel %vm2259, %v2146, 0.0
          %2690 = vadd.xlane.f32.xlu0 %v2689
          %v2691 = vpop.xlane.xlu0 %2690
          %v2692 = vsel %vm2259, %v2147, 0.0
          %2693 = vadd.xlane.f32.xlu0 %v2692
          %v2694 = vpop.xlane.xlu0 %2693
          %v2695 = vsel %vm2259, %v2148, 0.0
          %2696 = vadd.xlane.f32.xlu0 %v2695
          %v2697 = vpop.xlane.xlu0 %2696
          %v2698 = vsel %vm2259, %v2149, 0.0
          %2699 = vadd.xlane.f32.xlu0 %v2698
          %v2700 = vpop.xlane.xlu0 %2699
          %v2701 = vsel %vm2259, %v2150, 0.0
          %2702 = vadd.xlane.f32.xlu0 %v2701
          %v2703 = vpop.xlane.xlu0 %2702
          %v2704 = vsel %vm2259, %v2151, 0.0
          %2705 = vadd.xlane.f32.xlu0 %v2704
          %v2706 = vpop.xlane.xlu0 %2705
          %v2707 = vsel %vm2259, %v2152, 0.0
          %2708 = vadd.xlane.f32.xlu0 %v2707
          %v2709 = vpop.xlane.xlu0 %2708
          %v2710 = vsel %vm2259, %v2153, 0.0
          %2711 = vadd.xlane.f32.xlu0 %v2710
          %v2712 = vpop.xlane.xlu0 %2711
          %v2713 = vsel %vm2259, %v2154, 0.0
          %2714 = vadd.xlane.f32.xlu0 %v2713
          %v2715 = vpop.xlane.xlu0 %2714
          %v2716 = vsel %vm2259, %v2155, 0.0
          %2717 = vadd.xlane.f32.xlu0 %v2716
          %v2718 = vpop.xlane.xlu0 %2717
          %v2719 = vsel %vm2259, %v2156, 0.0
          %2720 = vadd.xlane.f32.xlu0 %v2719
          %v2721 = vpop.xlane.xlu0 %2720
          %v2722 = vsel %vm2259, %v2157, 0.0
          %2723 = vadd.xlane.f32.xlu0 %v2722
          %v2724 = vpop.xlane.xlu0 %2723
          %v2725 = vsel %vm2259, %v2158, 0.0
          %2726 = vadd.xlane.f32.xlu0 %v2725
          %v2727 = vpop.xlane.xlu0 %2726
          %v2728 = vsel %vm2259, %v2159, 0.0
          %2729 = vadd.xlane.f32.xlu0 %v2728
          %v2730 = vpop.xlane.xlu0 %2729
          %v2731 = vsel %vm2259, %v2160, 0.0
          %2732 = vadd.xlane.f32.xlu0 %v2731
          %v2733 = vpop.xlane.xlu0 %2732
          %v2734 = vsel %vm2259, %v2161, 0.0
          %2735 = vadd.xlane.f32.xlu0 %v2734
          %v2736 = vpop.xlane.xlu0 %2735
          %v2737 = vsel %vm2259, %v2162, 0.0
          %2738 = vadd.xlane.f32.xlu0 %v2737
          %v2739 = vpop.xlane.xlu0 %2738
          %v2740 = vsel %vm2259, %v2163, 0.0
          %2741 = vadd.xlane.f32.xlu0 %v2740
          %v2742 = vpop.xlane.xlu0 %2741
          %v2743 = vsel %vm2259, %v2164, 0.0
          %2744 = vadd.xlane.f32.xlu0 %v2743
          %v2745 = vpop.xlane.xlu0 %2744
          %v2746 = vsel %vm2259, %v2165, 0.0
          %2747 = vadd.xlane.f32.xlu0 %v2746
          %v2748 = vpop.xlane.xlu0 %2747
          %v2749 = vsel %vm2259, %v2166, 0.0
          %2750 = vadd.xlane.f32.xlu0 %v2749
          %v2751 = vpop.xlane.xlu0 %2750
          %v2752 = vsel %vm2259, %v2167, 0.0
          %2753 = vadd.xlane.f32.xlu0 %v2752
          %v2754 = vpop.xlane.xlu0 %2753
          %v2755 = vsel %vm2259, %v2168, 0.0
          %2756 = vadd.xlane.f32.xlu0 %v2755
          %v2757 = vpop.xlane.xlu0 %2756
          %v2758 = vsel %vm2259, %v2169, 0.0
          %2759 = vadd.xlane.f32.xlu0 %v2758
          %v2760 = vpop.xlane.xlu0 %2759
          %v2761 = vsel %vm2259, %v2170, 0.0
          %2762 = vadd.xlane.f32.xlu0 %v2761
          %v2763 = vpop.xlane.xlu0 %2762
          %v2764 = vsel %vm2259, %v2171, 0.0
          %2765 = vadd.xlane.f32.xlu0 %v2764
          %v2766 = vpop.xlane.xlu0 %2765
          %v2767 = vsel %vm2259, %v2172, 0.0
          %2768 = vadd.xlane.f32.xlu0 %v2767
          %v2769 = vpop.xlane.xlu0 %2768
          %v2770 = vsel %vm2259, %v2173, 0.0
          %2771 = vadd.xlane.f32.xlu0 %v2770
          %v2772 = vpop.xlane.xlu0 %2771
          %v2773 = vsel %vm2259, %v2174, 0.0
          %2774 = vadd.xlane.f32.xlu0 %v2773
          %v2775 = vpop.xlane.xlu0 %2774
          %v2776 = vsel %vm2259, %v2175, 0.0
          %2777 = vadd.xlane.f32.xlu0 %v2776
          %v2778 = vpop.xlane.xlu0 %2777
          %v2779 = vsel %vm2259, %v2176, 0.0
          %2780 = vadd.xlane.f32.xlu0 %v2779
          %v2781 = vpop.xlane.xlu0 %2780
          %v2782 = vsel %vm2259, %v2177, 0.0
          %2783 = vadd.xlane.f32.xlu0 %v2782
          %v2784 = vpop.xlane.xlu0 %2783
          %v2785 = vsel %vm2259, %v2178, 0.0
          %2786 = vadd.xlane.f32.xlu0 %v2785
          %v2787 = vpop.xlane.xlu0 %2786
          %v2788 = vsel %vm2259, %v2179, 0.0
          %2789 = vadd.xlane.f32.xlu0 %v2788
          %v2790 = vpop.xlane.xlu0 %2789
          %v2791 = vsel %vm2259, %v2180, 0.0
          %2792 = vadd.xlane.f32.xlu0 %v2791
          %v2793 = vpop.xlane.xlu0 %2792
          %v2794 = vsel %vm2259, %v2181, 0.0
          %2795 = vadd.xlane.f32.xlu0 %v2794
          %v2796 = vpop.xlane.xlu0 %2795
          %v2797 = vsel %vm2259, %v2182, 0.0
          %2798 = vadd.xlane.f32.xlu0 %v2797
          %v2799 = vpop.xlane.xlu0 %2798
          %v2800 = vsel %vm2259, %v2183, 0.0
          %2801 = vadd.xlane.f32.xlu0 %v2800
          %v2802 = vpop.xlane.xlu0 %2801
          %v2803 = vsel %vm2259, %v2184, 0.0
          %2804 = vadd.xlane.f32.xlu0 %v2803
          %v2805 = vpop.xlane.xlu0 %2804
          %v2806 = vsel %vm2259, %v2185, 0.0
          %2807 = vadd.xlane.f32.xlu0 %v2806
          %v2808 = vpop.xlane.xlu0 %2807
          %v2809 = vsel %vm2259, %v2186, 0.0
          %2810 = vadd.xlane.f32.xlu0 %v2809
          %v2811 = vpop.xlane.xlu0 %2810
          %v2812 = vsel %vm2259, %v2187, 0.0
          %2813 = vadd.xlane.f32.xlu0 %v2812
          %v2814 = vpop.xlane.xlu0 %2813
          %v2815 = vsel %vm2259, %v2188, 0.0
          %2816 = vadd.xlane.f32.xlu0 %v2815
          %v2817 = vpop.xlane.xlu0 %2816
          %v2818 = vsel %vm2259, %v2189, 0.0
          %2819 = vadd.xlane.f32.xlu0 %v2818
          %v2820 = vpop.xlane.xlu0 %2819
          %v2821 = vsel %vm2259, %v2190, 0.0
          %2822 = vadd.xlane.f32.xlu0 %v2821
          %v2823 = vpop.xlane.xlu0 %2822
          %v2824 = vsel %vm2259, %v2191, 0.0
          %2825 = vadd.xlane.f32.xlu0 %v2824
          %v2826 = vpop.xlane.xlu0 %2825
          %v2827 = vsel %vm2259, %v2192, 0.0
          %2828 = vadd.xlane.f32.xlu0 %v2827
          %v2829 = vpop.xlane.xlu0 %2828
          %v2830 = vsel %vm2259, %v2193, 0.0
          %2831 = vadd.xlane.f32.xlu0 %v2830
          %v2832 = vpop.xlane.xlu0 %2831
          %v2833 = vsel %vm2259, %v2194, 0.0
          %2834 = vadd.xlane.f32.xlu0 %v2833
          %v2835 = vpop.xlane.xlu0 %2834
          %v2836 = vsel %vm2259, %v2195, 0.0
          %2837 = vadd.xlane.f32.xlu0 %v2836
          %v2838 = vpop.xlane.xlu0 %2837
          %v2839 = vsel %vm2259, %v2196, 0.0
          %2840 = vadd.xlane.f32.xlu0 %v2839
          %v2841 = vpop.xlane.xlu0 %2840
          %v2842 = vsel %vm2259, %v2197, 0.0
          %2843 = vadd.xlane.f32.xlu0 %v2842
          %v2844 = vpop.xlane.xlu0 %2843
          %v2845 = vsel %vm2259, %v2198, 0.0
          %2846 = vadd.xlane.f32.xlu0 %v2845
          %v2847 = vpop.xlane.xlu0 %2846
          %v2848 = vsel %vm2259, %v2199, 0.0
          %2849 = vadd.xlane.f32.xlu0 %v2848
          %v2850 = vpop.xlane.xlu0 %2849
          %v2851 = vsel %vm2259, %v2200, 0.0
          %2852 = vadd.xlane.f32.xlu0 %v2851
          %v2853 = vpop.xlane.xlu0 %2852
          %v2854 = vsel %vm2259, %v2201, 0.0
          %2855 = vadd.xlane.f32.xlu0 %v2854
          %v2856 = vpop.xlane.xlu0 %2855
          %v2857 = vsel %vm2259, %v2202, 0.0
          %2858 = vadd.xlane.f32.xlu0 %v2857
          %v2859 = vpop.xlane.xlu0 %2858
          %v2860 = vsel %vm2259, %v2203, 0.0
          %2861 = vadd.xlane.f32.xlu0 %v2860
          %v2862 = vpop.xlane.xlu0 %2861
          %v2863 = vsel %vm2259, %v2204, 0.0
          %2864 = vadd.xlane.f32.xlu0 %v2863
          %v2865 = vpop.xlane.xlu0 %2864
          %v2866 = vsel %vm2259, %v2205, 0.0
          %2867 = vadd.xlane.f32.xlu0 %v2866
          %v2868 = vpop.xlane.xlu0 %2867
          %v2869 = vsel %vm2259, %v2206, 0.0
          %2870 = vadd.xlane.f32.xlu0 %v2869
          %v2871 = vpop.xlane.xlu0 %2870
          %v2872 = vsel %vm2259, %v2207, 0.0
          %2873 = vadd.xlane.f32.xlu0 %v2872
          %v2874 = vpop.xlane.xlu0 %2873
          %v2875 = vsel %vm2259, %v2208, 0.0
          %2876 = vadd.xlane.f32.xlu0 %v2875
          %v2877 = vpop.xlane.xlu0 %2876
          %v2878 = vsel %vm2259, %v2209, 0.0
          %2879 = vadd.xlane.f32.xlu0 %v2878
          %v2880 = vpop.xlane.xlu0 %2879
          %v2881 = vsel %vm2259, %v2210, 0.0
          %2882 = vadd.xlane.f32.xlu0 %v2881
          %v2883 = vpop.xlane.xlu0 %2882
          %v2884 = vsel %vm2259, %v2211, 0.0
          %2885 = vadd.xlane.f32.xlu0 %v2884
          %v2886 = vpop.xlane.xlu0 %2885
          %v2887 = vsel %vm2259, %v2212, 0.0
          %2888 = vadd.xlane.f32.xlu0 %v2887
          %v2889 = vpop.xlane.xlu0 %2888
          %v2890 = vsel %vm2259, %v2213, 0.0
          %2891 = vadd.xlane.f32.xlu0 %v2890
          %v2892 = vpop.xlane.xlu0 %2891
          %v2893 = vsel %vm2259, %v2214, 0.0
          %2894 = vadd.xlane.f32.xlu0 %v2893
          %v2895 = vpop.xlane.xlu0 %2894
          %v2896 = vsel %vm2259, %v2215, 0.0
          %2897 = vadd.xlane.f32.xlu0 %v2896
          %v2898 = vpop.xlane.xlu0 %2897
          %v2899 = vsel %vm2259, %v2216, 0.0
          %2900 = vadd.xlane.f32.xlu0 %v2899
          %v2901 = vpop.xlane.xlu0 %2900
          %v2902 = vsel %vm2259, %v2217, 0.0
          %2903 = vadd.xlane.f32.xlu0 %v2902
          %v2904 = vpop.xlane.xlu0 %2903
          %v2905 = vsel %vm2259, %v2218, 0.0
          %2906 = vadd.xlane.f32.xlu0 %v2905
          %v2907 = vpop.xlane.xlu0 %2906
          %v2908 = vsel %vm2259, %v2219, 0.0
          %2909 = vadd.xlane.f32.xlu0 %v2908
          %v2910 = vpop.xlane.xlu0 %2909
          %v2911 = vsel %vm2259, %v2220, 0.0
          %2912 = vadd.xlane.f32.xlu0 %v2911
          %v2913 = vpop.xlane.xlu0 %2912
          %v2914 = vsel %vm2259, %v2221, 0.0
          %2915 = vadd.xlane.f32.xlu0 %v2914
          %v2916 = vpop.xlane.xlu0 %2915
          %v2917 = vsel %vm2259, %v2222, 0.0
          %2918 = vadd.xlane.f32.xlu0 %v2917
          %v2919 = vpop.xlane.xlu0 %2918
          %v2920 = vsel %vm2259, %v2223, 0.0
          %2921 = vadd.xlane.f32.xlu0 %v2920
          %v2922 = vpop.xlane.xlu0 %2921
          %v2923 = vsel %vm2259, %v2224, 0.0
          %2924 = vadd.xlane.f32.xlu0 %v2923
          %v2925 = vpop.xlane.xlu0 %2924
          %v2926 = vsel %vm2259, %v2225, 0.0
          %2927 = vadd.xlane.f32.xlu0 %v2926
          %v2928 = vpop.xlane.xlu0 %2927
          %v2929 = vsel %vm2259, %v2226, 0.0
          %2930 = vadd.xlane.f32.xlu0 %v2929
          %v2931 = vpop.xlane.xlu0 %2930
          %v2932 = vsel %vm2259, %v2227, 0.0
          %2933 = vadd.xlane.f32.xlu0 %v2932
          %v2934 = vpop.xlane.xlu0 %2933
          %v2935 = vsel %vm2259, %v2228, 0.0
          %2936 = vadd.xlane.f32.xlu0 %v2935
          %v2937 = vpop.xlane.xlu0 %2936
          %v2938 = vsel %vm2259, %v2229, 0.0
          %2939 = vadd.xlane.f32.xlu0 %v2938
          %v2940 = vpop.xlane.xlu0 %2939
          %v2941 = vsel %vm2259, %v2230, 0.0
          %2942 = vadd.xlane.f32.xlu0 %v2941
          %v2943 = vpop.xlane.xlu0 %2942
          %v2944 = vsel %vm2259, %v2231, 0.0
          %2945 = vadd.xlane.f32.xlu0 %v2944
          %v2946 = vpop.xlane.xlu0 %2945
          %v2947 = vsel %vm2259, %v2232, 0.0
          %2948 = vadd.xlane.f32.xlu0 %v2947
          %v2949 = vpop.xlane.xlu0 %2948
          %v2950 = vsel %vm2259, %v2233, 0.0
          %2951 = vadd.xlane.f32.xlu0 %v2950
          %v2952 = vpop.xlane.xlu0 %2951
          %v2953 = vsel %vm2259, %v2234, 0.0
          %2954 = vadd.xlane.f32.xlu0 %v2953
          %v2955 = vpop.xlane.xlu0 %2954
          %v2956 = vsel %vm2259, %v2235, 0.0
          %2957 = vadd.xlane.f32.xlu0 %v2956
          %v2958 = vpop.xlane.xlu0 %2957
          %v2959 = vsel %vm2259, %v2236, 0.0
          %2960 = vadd.xlane.f32.xlu0 %v2959
          %v2961 = vpop.xlane.xlu0 %2960
          %v2962 = vsel %vm2259, %v2237, 0.0
          %2963 = vadd.xlane.f32.xlu0 %v2962
          %v2964 = vpop.xlane.xlu0 %2963
          %v2965 = vsel %vm2259, %v2238, 0.0
          %2966 = vadd.xlane.f32.xlu0 %v2965
          %v2967 = vpop.xlane.xlu0 %2966
          %v2968 = vsel %vm2259, %v2239, 0.0
          %2969 = vadd.xlane.f32.xlu0 %v2968
          %v2970 = vpop.xlane.xlu0 %2969
          %v2971 = vsel %vm2259, %v2240, 0.0
          %2972 = vadd.xlane.f32.xlu0 %v2971
          %v2973 = vpop.xlane.xlu0 %2972
          %v2974 = vsel %vm2259, %v2241, 0.0
          %2975 = vadd.xlane.f32.xlu0 %v2974
          %v2976 = vpop.xlane.xlu0 %2975
          %v2977 = vsel %vm2259, %v2242, 0.0
          %2978 = vadd.xlane.f32.xlu0 %v2977
          %v2979 = vpop.xlane.xlu0 %2978
          %v2980 = vsel %vm2259, %v2243, 0.0
          %2981 = vadd.xlane.f32.xlu0 %v2980
          %v2982 = vpop.xlane.xlu0 %2981
          %v2983 = vsel %vm2259, %v2244, 0.0
          %2984 = vadd.xlane.f32.xlu0 %v2983
          %v2985 = vpop.xlane.xlu0 %2984
          %v2986 = vsel %vm2259, %v2245, 0.0
          %2987 = vadd.xlane.f32.xlu0 %v2986
          %v2988 = vpop.xlane.xlu0 %2987
          %v2989 = vsel %vm2259, %v2246, 0.0
          %2990 = vadd.xlane.f32.xlu0 %v2989
          %v2991 = vpop.xlane.xlu0 %2990
          %v2992 = vsel %vm2259, %v2247, 0.0
          %2993 = vadd.xlane.f32.xlu0 %v2992
          %v2994 = vpop.xlane.xlu0 %2993
          %v2995 = vsel %vm2259, %v2248, 0.0
          %2996 = vadd.xlane.f32.xlu0 %v2995
          %v2997 = vpop.xlane.xlu0 %2996
          %v2998 = vsel %vm2259, %v2249, 0.0
          %2999 = vadd.xlane.f32.xlu0 %v2998
          %v3000 = vpop.xlane.xlu0 %2999
          %v3001 = vsel %vm2259, %v2250, 0.0
          %3002 = vadd.xlane.f32.xlu0 %v3001
          %v3003 = vpop.xlane.xlu0 %3002
          %v3004 = vsel %vm2259, %v2251, 0.0
          %3005 = vadd.xlane.f32.xlu0 %v3004
          %v3006 = vpop.xlane.xlu0 %3005
          %v3007 = vsel %vm2259, %v2252, 0.0
          %3008 = vadd.xlane.f32.xlu0 %v3007
          %v3009 = vpop.xlane.xlu0 %3008
          %v3010 = vsel %vm2259, %v2253, 0.0
          %3011 = vadd.xlane.f32.xlu0 %v3010
          %v3012 = vpop.xlane.xlu0 %3011
          %v3013 = vsel %vm2259, %v2254, 0.0
          %3014 = vadd.xlane.f32.xlu0 %v3013
          %v3015 = vpop.xlane.xlu0 %3014
          %v3016 = vsel %vm2259, %v2255, 0.0
          %3017 = vadd.xlane.f32.xlu0 %v3016
          %v3018 = vpop.xlane.xlu0 %3017
          %v3019 = vsel %vm2259, %v2256, 0.0
          %3020 = vadd.xlane.f32.xlu0 %v3019
          %v3021 = vpop.xlane.xlu0 %3020
          %v3022 = vsel %vm2259, %v2257, 0.0
          %3023 = vadd.xlane.f32.xlu0 %v3022
          %v3024 = vpop.xlane.xlu0 %3023
          %v3025 = vsel %vm2259, %v2258, 0.0
          %3026 = vadd.xlane.f32.xlu0 %v3025
          %v3027 = vpop.xlane.xlu0 %3026
          %v3028 = vmax.f32 %v2262, %v2358
          %v3029 = vmax.f32 %v3028, %v2454
          %v3030 = vmax.f32 %v3029, %v2550
          %v3031 = vmax.f32 %v3030, %v2646
          %v3032 = vmax.f32 %v3031, %v2742
          %v3033 = vmax.f32 %v3032, %v2838
          %v3034 = vmax.f32 %v3033, %v2934
          %v3035 = vmax.f32 %v2265, %v2361
          %v3036 = vmax.f32 %v3035, %v2457
          %v3037 = vmax.f32 %v3036, %v2553
          %v3038 = vmax.f32 %v3037, %v2649
          %v3039 = vmax.f32 %v3038, %v2745
          %v3040 = vmax.f32 %v3039, %v2841
          %v3041 = vmax.f32 %v3040, %v2937
          %v3042 = vmax.f32 %v2268, %v2364
          %v3043 = vmax.f32 %v3042, %v2460
          %v3044 = vmax.f32 %v3043, %v2556
          %v3045 = vmax.f32 %v3044, %v2652
          %v3046 = vmax.f32 %v3045, %v2748
          %v3047 = vmax.f32 %v3046, %v2844
          %v3048 = vmax.f32 %v3047, %v2940
          %v3049 = vmax.f32 %v2271, %v2367
          %v3050 = vmax.f32 %v3049, %v2463
          %v3051 = vmax.f32 %v3050, %v2559
          %v3052 = vmax.f32 %v3051, %v2655
          %v3053 = vmax.f32 %v3052, %v2751
          %v3054 = vmax.f32 %v3053, %v2847
          %v3055 = vmax.f32 %v3054, %v2943
          %v3056 = vmax.f32 %v2274, %v2370
          %v3057 = vmax.f32 %v3056, %v2466
          %v3058 = vmax.f32 %v3057, %v2562
          %v3059 = vmax.f32 %v3058, %v2658
          %v3060 = vmax.f32 %v3059, %v2754
          %v3061 = vmax.f32 %v3060, %v2850
          %v3062 = vmax.f32 %v3061, %v2946
          %v3063 = vmax.f32 %v2277, %v2373
          %v3064 = vmax.f32 %v3063, %v2469
          %v3065 = vmax.f32 %v3064, %v2565
          %v3066 = vmax.f32 %v3065, %v2661
          %v3067 = vmax.f32 %v3066, %v2757
          %v3068 = vmax.f32 %v3067, %v2853
          %v3069 = vmax.f32 %v3068, %v2949
          %v3070 = vmax.f32 %v2280, %v2376
          %v3071 = vmax.f32 %v3070, %v2472
          %v3072 = vmax.f32 %v3071, %v2568
          %v3073 = vmax.f32 %v3072, %v2664
          %v3074 = vmax.f32 %v3073, %v2760
          %v3075 = vmax.f32 %v3074, %v2856
          %v3076 = vmax.f32 %v3075, %v2952
          %v3077 = vmax.f32 %v2283, %v2379
          %v3078 = vmax.f32 %v3077, %v2475
          %v3079 = vmax.f32 %v3078, %v2571
          %v3080 = vmax.f32 %v3079, %v2667
          %v3081 = vmax.f32 %v3080, %v2763
          %v3082 = vmax.f32 %v3081, %v2859
          %v3083 = vmax.f32 %v3082, %v2955
          %v3084 = vmax.f32 %v2286, %v2382
          %v3085 = vmax.f32 %v3084, %v2478
          %v3086 = vmax.f32 %v3085, %v2574
          %v3087 = vmax.f32 %v3086, %v2670
          %v3088 = vmax.f32 %v3087, %v2766
          %v3089 = vmax.f32 %v3088, %v2862
          %v3090 = vmax.f32 %v3089, %v2958
          %v3091 = vmax.f32 %v2289, %v2385
          %v3092 = vmax.f32 %v3091, %v2481
          %v3093 = vmax.f32 %v3092, %v2577
          %v3094 = vmax.f32 %v3093, %v2673
          %v3095 = vmax.f32 %v3094, %v2769
          %v3096 = vmax.f32 %v3095, %v2865
          %v3097 = vmax.f32 %v3096, %v2961
          %v3098 = vmax.f32 %v2292, %v2388
          %v3099 = vmax.f32 %v3098, %v2484
          %v3100 = vmax.f32 %v3099, %v2580
          %v3101 = vmax.f32 %v3100, %v2676
          %v3102 = vmax.f32 %v3101, %v2772
          %v3103 = vmax.f32 %v3102, %v2868
          %v3104 = vmax.f32 %v3103, %v2964
          %v3105 = vmax.f32 %v2295, %v2391
          %v3106 = vmax.f32 %v3105, %v2487
          %v3107 = vmax.f32 %v3106, %v2583
          %v3108 = vmax.f32 %v3107, %v2679
          %v3109 = vmax.f32 %v3108, %v2775
          %v3110 = vmax.f32 %v3109, %v2871
          %v3111 = vmax.f32 %v3110, %v2967
          %v3112 = vmax.f32 %v2298, %v2394
          %v3113 = vmax.f32 %v3112, %v2490
          %v3114 = vmax.f32 %v3113, %v2586
          %v3115 = vmax.f32 %v3114, %v2682
          %v3116 = vmax.f32 %v3115, %v2778
          %v3117 = vmax.f32 %v3116, %v2874
          %v3118 = vmax.f32 %v3117, %v2970
          %v3119 = vmax.f32 %v2301, %v2397
          %v3120 = vmax.f32 %v3119, %v2493
          %v3121 = vmax.f32 %v3120, %v2589
          %v3122 = vmax.f32 %v3121, %v2685
          %v3123 = vmax.f32 %v3122, %v2781
          %v3124 = vmax.f32 %v3123, %v2877
          %v3125 = vmax.f32 %v3124, %v2973
          %v3126 = vmax.f32 %v2304, %v2400
          %v3127 = vmax.f32 %v3126, %v2496
          %v3128 = vmax.f32 %v3127, %v2592
          %v3129 = vmax.f32 %v3128, %v2688
          %v3130 = vmax.f32 %v3129, %v2784
          %v3131 = vmax.f32 %v3130, %v2880
          %v3132 = vmax.f32 %v3131, %v2976
          %v3133 = vmax.f32 %v2307, %v2403
          %v3134 = vmax.f32 %v3133, %v2499
          %v3135 = vmax.f32 %v3134, %v2595
          %v3136 = vmax.f32 %v3135, %v2691
          %v3137 = vmax.f32 %v3136, %v2787
          %v3138 = vmax.f32 %v3137, %v2883
          %v3139 = vmax.f32 %v3138, %v2979
          %v3140 = vmax.f32 %v2310, %v2406
          %v3141 = vmax.f32 %v3140, %v2502
          %v3142 = vmax.f32 %v3141, %v2598
          %v3143 = vmax.f32 %v3142, %v2694
          %v3144 = vmax.f32 %v3143, %v2790
          %v3145 = vmax.f32 %v3144, %v2886
          %v3146 = vmax.f32 %v3145, %v2982
          %v3147 = vmax.f32 %v2313, %v2409
          %v3148 = vmax.f32 %v3147, %v2505
          %v3149 = vmax.f32 %v3148, %v2601
          %v3150 = vmax.f32 %v3149, %v2697
          %v3151 = vmax.f32 %v3150, %v2793
          %v3152 = vmax.f32 %v3151, %v2889
          %v3153 = vmax.f32 %v3152, %v2985
          %v3154 = vmax.f32 %v2316, %v2412
          %v3155 = vmax.f32 %v3154, %v2508
          %v3156 = vmax.f32 %v3155, %v2604
          %v3157 = vmax.f32 %v3156, %v2700
          %v3158 = vmax.f32 %v3157, %v2796
          %v3159 = vmax.f32 %v3158, %v2892
          %v3160 = vmax.f32 %v3159, %v2988
          %v3161 = vmax.f32 %v2319, %v2415
          %v3162 = vmax.f32 %v3161, %v2511
          %v3163 = vmax.f32 %v3162, %v2607
          %v3164 = vmax.f32 %v3163, %v2703
          %v3165 = vmax.f32 %v3164, %v2799
          %v3166 = vmax.f32 %v3165, %v2895
          %v3167 = vmax.f32 %v3166, %v2991
          %v3168 = vmax.f32 %v2322, %v2418
          %v3169 = vmax.f32 %v3168, %v2514
          %v3170 = vmax.f32 %v3169, %v2610
          %v3171 = vmax.f32 %v3170, %v2706
          %v3172 = vmax.f32 %v3171, %v2802
          %v3173 = vmax.f32 %v3172, %v2898
          %v3174 = vmax.f32 %v3173, %v2994
          %v3175 = vmax.f32 %v2325, %v2421
          %v3176 = vmax.f32 %v3175, %v2517
          %v3177 = vmax.f32 %v3176, %v2613
          %v3178 = vmax.f32 %v3177, %v2709
          %v3179 = vmax.f32 %v3178, %v2805
          %v3180 = vmax.f32 %v3179, %v2901
          %v3181 = vmax.f32 %v3180, %v2997
          %v3182 = vmax.f32 %v2328, %v2424
          %v3183 = vmax.f32 %v3182, %v2520
          %v3184 = vmax.f32 %v3183, %v2616
          %v3185 = vmax.f32 %v3184, %v2712
          %v3186 = vmax.f32 %v3185, %v2808
          %v3187 = vmax.f32 %v3186, %v2904
          %v3188 = vmax.f32 %v3187, %v3000
          %v3189 = vmax.f32 %v2331, %v2427
          %v3190 = vmax.f32 %v3189, %v2523
          %v3191 = vmax.f32 %v3190, %v2619
          %v3192 = vmax.f32 %v3191, %v2715
          %v3193 = vmax.f32 %v3192, %v2811
          %v3194 = vmax.f32 %v3193, %v2907
          %v3195 = vmax.f32 %v3194, %v3003
          %v3196 = vmax.f32 %v2334, %v2430
          %v3197 = vmax.f32 %v3196, %v2526
          %v3198 = vmax.f32 %v3197, %v2622
          %v3199 = vmax.f32 %v3198, %v2718
          %v3200 = vmax.f32 %v3199, %v2814
          %v3201 = vmax.f32 %v3200, %v2910
          %v3202 = vmax.f32 %v3201, %v3006
          %v3203 = vmax.f32 %v2337, %v2433
          %v3204 = vmax.f32 %v3203, %v2529
          %v3205 = vmax.f32 %v3204, %v2625
          %v3206 = vmax.f32 %v3205, %v2721
          %v3207 = vmax.f32 %v3206, %v2817
          %v3208 = vmax.f32 %v3207, %v2913
          %v3209 = vmax.f32 %v3208, %v3009
          %v3210 = vmax.f32 %v2340, %v2436
          %v3211 = vmax.f32 %v3210, %v2532
          %v3212 = vmax.f32 %v3211, %v2628
          %v3213 = vmax.f32 %v3212, %v2724
          %v3214 = vmax.f32 %v3213, %v2820
          %v3215 = vmax.f32 %v3214, %v2916
          %v3216 = vmax.f32 %v3215, %v3012
          %v3217 = vmax.f32 %v2343, %v2439
          %v3218 = vmax.f32 %v3217, %v2535
          %v3219 = vmax.f32 %v3218, %v2631
          %v3220 = vmax.f32 %v3219, %v2727
          %v3221 = vmax.f32 %v3220, %v2823
          %v3222 = vmax.f32 %v3221, %v2919
          %v3223 = vmax.f32 %v3222, %v3015
          %v3224 = vmax.f32 %v2346, %v2442
          %v3225 = vmax.f32 %v3224, %v2538
          %v3226 = vmax.f32 %v3225, %v2634
          %v3227 = vmax.f32 %v3226, %v2730
          %v3228 = vmax.f32 %v3227, %v2826
          %v3229 = vmax.f32 %v3228, %v2922
          %v3230 = vmax.f32 %v3229, %v3018
          %v3231 = vmax.f32 %v2349, %v2445
          %v3232 = vmax.f32 %v3231, %v2541
          %v3233 = vmax.f32 %v3232, %v2637
          %v3234 = vmax.f32 %v3233, %v2733
          %v3235 = vmax.f32 %v3234, %v2829
          %v3236 = vmax.f32 %v3235, %v2925
          %v3237 = vmax.f32 %v3236, %v3021
          %v3238 = vmax.f32 %v2352, %v2448
          %v3239 = vmax.f32 %v3238, %v2544
          %v3240 = vmax.f32 %v3239, %v2640
          %v3241 = vmax.f32 %v3240, %v2736
          %v3242 = vmax.f32 %v3241, %v2832
          %v3243 = vmax.f32 %v3242, %v2928
          %v3244 = vmax.f32 %v3243, %v3024
          %v3245 = vmax.f32 %v2355, %v2451
          %v3246 = vmax.f32 %v3245, %v2547
          %v3247 = vmax.f32 %v3246, %v2643
          %v3248 = vmax.f32 %v3247, %v2739
          %v3249 = vmax.f32 %v3248, %v2835
          %v3250 = vmax.f32 %v3249, %v2931
          %v3251 = vmax.f32 %v3250, %v3027
          %v3252 = vmul.f32 %v3034, 0.020408163
          %v3253 = vmul.f32 %v3041, 0.020408163
          %v3254 = vmul.f32 %v3048, 0.020408163
          %v3255 = vmul.f32 %v3055, 0.020408163
          %v3256 = vmul.f32 %v3062, 0.020408163
          %v3257 = vmul.f32 %v3069, 0.020408163
          %v3258 = vmul.f32 %v3076, 0.020408163
          %v3259 = vmul.f32 %v3083, 0.020408163
          %v3260 = vmul.f32 %v3090, 0.020408163
          %v3261 = vmul.f32 %v3097, 0.020408163
          %v3262 = vmul.f32 %v3104, 0.020408163
          %v3263 = vmul.f32 %v3111, 0.020408163
          %v3264 = vmul.f32 %v3118, 0.020408163
          %v3265 = vmul.f32 %v3125, 0.020408163
          %v3266 = vmul.f32 %v3132, 0.020408163
          %v3267 = vmul.f32 %v3139, 0.020408163
          %v3268 = vmul.f32 %v3146, 0.020408163
          %v3269 = vmul.f32 %v3153, 0.020408163
          %v3270 = vmul.f32 %v3160, 0.020408163
          %v3271 = vmul.f32 %v3167, 0.020408163
          %v3272 = vmul.f32 %v3174, 0.020408163
          %v3273 = vmul.f32 %v3181, 0.020408163
          %v3274 = vmul.f32 %v3188, 0.020408163
          %v3275 = vmul.f32 %v3195, 0.020408163
          %v3276 = vmul.f32 %v3202, 0.020408163
          %v3277 = vmul.f32 %v3209, 0.020408163
          %v3278 = vmul.f32 %v3216, 0.020408163
          %v3279 = vmul.f32 %v3223, 0.020408163
          %v3280 = vmul.f32 %v3230, 0.020408163
          %v3281 = vmul.f32 %v3237, 0.020408163
          %v3282 = vmul.f32 %v3244, 0.020408163
          %v3283 = vmul.f32 %v3251, 0.020408163
          %v3316 = vlaneseq
          %v3317 = vand.u32 %v3316, 127
          %v3318 = vlaneseq
          %v3319 = vshrl.u32 %v3318, 7
          %v3320 = vsub.s32 %v3317, %v3319
          %v3321 = vrot.slane %v3252, %v3320
          %v3322 = vadd.s32 %v3317, 4294967288
          %v3323 = vlaneseq
          %v3324 = vshrl.u32 %v3323, 7
          %v3325 = vsub.s32 %v3322, %v3324
          %v3326 = vrot.slane %v3253, %v3325
          %vm3327 = vcmask 130112
          %v3328 = vsel %vm3327, %v3326, %v3321
          %v3329 = vadd.s32 %v3317, 4294967280
          %v3330 = vlaneseq
          %v3331 = vshrl.u32 %v3330, 7
          %v3332 = vsub.s32 %v3329, %v3331
          %v3333 = vrot.slane %v3254, %v3332
          %vm3334 = vcmask 195712
          %v3335 = vsel %vm3334, %v3333, %v3328
          %v3336 = vadd.s32 %v3317, 4294967272
          %v3337 = vlaneseq
          %v3338 = vshrl.u32 %v3337, 7
          %v3339 = vsub.s32 %v3336, %v3338
          %v3340 = vrot.slane %v3255, %v3339
          %vm3341 = vcmask 261312
          %v3342 = vsel %vm3341, %v3340, %v3335
          %v3343 = vadd.s32 %v3317, 4294967264
          %v3344 = vlaneseq
          %v3345 = vshrl.u32 %v3344, 7
          %v3346 = vsub.s32 %v3343, %v3345
          %v3347 = vrot.slane %v3256, %v3346
          %vm3348 = vcmask 326912
          %v3349 = vsel %vm3348, %v3347, %v3342
          %v3350 = vadd.s32 %v3317, 4294967256
          %v3351 = vlaneseq
          %v3352 = vshrl.u32 %v3351, 7
          %v3353 = vsub.s32 %v3350, %v3352
          %v3354 = vrot.slane %v3257, %v3353
          %vm3355 = vcmask 392512
          %v3356 = vsel %vm3355, %v3354, %v3349
          %v3357 = vadd.s32 %v3317, 4294967248
          %v3358 = vlaneseq
          %v3359 = vshrl.u32 %v3358, 7
          %v3360 = vsub.s32 %v3357, %v3359
          %v3361 = vrot.slane %v3258, %v3360
          %vm3362 = vcmask 458112
          %v3363 = vsel %vm3362, %v3361, %v3356
          %v3364 = vadd.s32 %v3317, 4294967240
          %v3365 = vlaneseq
          %v3366 = vshrl.u32 %v3365, 7
          %v3367 = vsub.s32 %v3364, %v3366
          %v3368 = vrot.slane %v3259, %v3367
          %vm3369 = vcmask 523712
          %v3370 = vsel %vm3369, %v3368, %v3363
          %v3371 = vadd.s32 %v3317, 4294967232
          %v3372 = vlaneseq
          %v3373 = vshrl.u32 %v3372, 7
          %v3374 = vsub.s32 %v3371, %v3373
          %v3375 = vrot.slane %v3260, %v3374
          %vm3376 = vcmask 589312
          %v3377 = vsel %vm3376, %v3375, %v3370
          %v3378 = vadd.s32 %v3317, 4294967224
          %v3379 = vlaneseq
          %v3380 = vshrl.u32 %v3379, 7
          %v3381 = vsub.s32 %v3378, %v3380
          %v3382 = vrot.slane %v3261, %v3381
          %vm3383 = vcmask 654912
          %v3384 = vsel %vm3383, %v3382, %v3377
          %v3385 = vadd.s32 %v3317, 4294967216
          %v3386 = vlaneseq
          %v3387 = vshrl.u32 %v3386, 7
          %v3388 = vsub.s32 %v3385, %v3387
          %v3389 = vrot.slane %v3262, %v3388
          %vm3390 = vcmask 720512
          %v3391 = vsel %vm3390, %v3389, %v3384
          %v3392 = vadd.s32 %v3317, 4294967208
          %v3393 = vlaneseq
          %v3394 = vshrl.u32 %v3393, 7
          %v3395 = vsub.s32 %v3392, %v3394
          %v3396 = vrot.slane %v3263, %v3395
          %vm3397 = vcmask 786112
          %v3398 = vsel %vm3397, %v3396, %v3391
          %v3399 = vadd.s32 %v3317, 4294967200
          %v3400 = vlaneseq
          %v3401 = vshrl.u32 %v3400, 7
          %v3402 = vsub.s32 %v3399, %v3401
          %v3403 = vrot.slane %v3264, %v3402
          %vm3404 = vcmask 851712
          %v3405 = vsel %vm3404, %v3403, %v3398
          %v3406 = vadd.s32 %v3317, 4294967192
          %v3407 = vlaneseq
          %v3408 = vshrl.u32 %v3407, 7
          %v3409 = vsub.s32 %v3406, %v3408
          %v3410 = vrot.slane %v3265, %v3409
          %vm3411 = vcmask 917312
          %v3412 = vsel %vm3411, %v3410, %v3405
          %v3413 = vadd.s32 %v3317, 4294967184
          %v3414 = vlaneseq
          %v3415 = vshrl.u32 %v3414, 7
          %v3416 = vsub.s32 %v3413, %v3415
          %v3417 = vrot.slane %v3266, %v3416
          %vm3418 = vcmask 982912
          %v3419 = vsel %vm3418, %v3417, %v3412
          %v3420 = vadd.s32 %v3317, 4294967176
          %v3421 = vlaneseq
          %v3422 = vshrl.u32 %v3421, 7
          %v3423 = vsub.s32 %v3420, %v3422
          %v3424 = vrot.slane %v3267, %v3423
          %vm3425 = vcmask 1048512
          %v3426 = vsel %vm3425, %v3424, %v3419
          %v3427 = vlaneseq
          %v3428 = vshrl.u32 %v3427, 7
          %v3429 = vsub.s32 %v3317, %v3428
          %v3430 = vrot.slane %v3268, %v3429
          %v3431 = vlaneseq
          %v3432 = vshrl.u32 %v3431, 7
          %v3433 = vsub.s32 %v3322, %v3432
          %v3434 = vrot.slane %v3269, %v3433
          %v3435 = vsel %vm3327, %v3434, %v3430
          %v3436 = vlaneseq
          %v3437 = vshrl.u32 %v3436, 7
          %v3438 = vsub.s32 %v3329, %v3437
          %v3439 = vrot.slane %v3270, %v3438
          %v3440 = vsel %vm3334, %v3439, %v3435
          %v3441 = vlaneseq
          %v3442 = vshrl.u32 %v3441, 7
          %v3443 = vsub.s32 %v3336, %v3442
          %v3444 = vrot.slane %v3271, %v3443
          %v3445 = vsel %vm3341, %v3444, %v3440
          %v3446 = vlaneseq
          %v3447 = vshrl.u32 %v3446, 7
          %v3448 = vsub.s32 %v3343, %v3447
          %v3449 = vrot.slane %v3272, %v3448
          %v3450 = vsel %vm3348, %v3449, %v3445
          %v3451 = vlaneseq
          %v3452 = vshrl.u32 %v3451, 7
          %v3453 = vsub.s32 %v3350, %v3452
          %v3454 = vrot.slane %v3273, %v3453
          %v3455 = vsel %vm3355, %v3454, %v3450
          %v3456 = vlaneseq
          %v3457 = vshrl.u32 %v3456, 7
          %v3458 = vsub.s32 %v3357, %v3457
          %v3459 = vrot.slane %v3274, %v3458
          %v3460 = vsel %vm3362, %v3459, %v3455
          %v3461 = vlaneseq
          %v3462 = vshrl.u32 %v3461, 7
          %v3463 = vsub.s32 %v3364, %v3462
          %v3464 = vrot.slane %v3275, %v3463
          %v3465 = vsel %vm3369, %v3464, %v3460
          %v3466 = vlaneseq
          %v3467 = vshrl.u32 %v3466, 7
          %v3468 = vsub.s32 %v3371, %v3467
          %v3469 = vrot.slane %v3276, %v3468
          %v3470 = vsel %vm3376, %v3469, %v3465
          %v3471 = vlaneseq
          %v3472 = vshrl.u32 %v3471, 7
          %v3473 = vsub.s32 %v3378, %v3472
          %v3474 = vrot.slane %v3277, %v3473
          %v3475 = vsel %vm3383, %v3474, %v3470
          %v3476 = vlaneseq
          %v3477 = vshrl.u32 %v3476, 7
          %v3478 = vsub.s32 %v3385, %v3477
          %v3479 = vrot.slane %v3278, %v3478
          %v3480 = vsel %vm3390, %v3479, %v3475
          %v3481 = vlaneseq
          %v3482 = vshrl.u32 %v3481, 7
          %v3483 = vsub.s32 %v3392, %v3482
          %v3484 = vrot.slane %v3279, %v3483
          %v3485 = vsel %vm3397, %v3484, %v3480
          %v3486 = vlaneseq
          %v3487 = vshrl.u32 %v3486, 7
          %v3488 = vsub.s32 %v3399, %v3487
          %v3489 = vrot.slane %v3280, %v3488
          %v3490 = vsel %vm3404, %v3489, %v3485
          %v3491 = vlaneseq
          %v3492 = vshrl.u32 %v3491, 7
          %v3493 = vsub.s32 %v3406, %v3492
          %v3494 = vrot.slane %v3281, %v3493
          %v3495 = vsel %vm3411, %v3494, %v3490
          %v3496 = vlaneseq
          %v3497 = vshrl.u32 %v3496, 7
          %v3498 = vsub.s32 %v3413, %v3497
          %v3499 = vrot.slane %v3282, %v3498
          %v3500 = vsel %vm3418, %v3499, %v3495
          %v3501 = vlaneseq
          %v3502 = vshrl.u32 %v3501, 7
          %v3503 = vsub.s32 %v3420, %v3502
          %v3504 = vrot.slane %v3283, %v3503
          %v3505 = vsel %vm3425, %v3504, %v3500
          %vm3506 = vcmask 1042434
          %v3507 = vsel %vm3506, %v3426, %v3426
          %vm3508 = vcmask 1043459
          %v3509 = vsel %vm3508, %v3426, %v3507
          %vm3510 = vcmask 1044484
          %v3511 = vsel %vm3510, %v3426, %v3509
          %vm3512 = vcmask 1045509
          %v3513 = vsel %vm3512, %v3426, %v3511
          %vm3514 = vcmask 1046534
          %v3515 = vsel %vm3514, %v3426, %v3513
          %vm3516 = vcmask 1047559
          %v3517 = vsel %vm3516, %v3426, %v3515
          %v3518 = vsel %vm3506, %v3505, %v3505
          %v3519 = vsel %vm3508, %v3505, %v3518
          %v3520 = vsel %vm3510, %v3505, %v3519
          %v3521 = vsel %vm3512, %v3505, %v3520
          %v3522 = vsel %vm3514, %v3505, %v3521
          %v3523 = vsel %vm3516, %v3505, %v3522
          %3526 = vst [vmem:[%s148] sm:$0xff] %v3517
          %3527 = vst [vmem:[%s148 + $0x8] sm:$0xff] %v3523
        $region40: #{tpu_custom_call.1} parent=31 // pred_fallthru
          _
        %p3528 = scmp.eq.s32.totalorder %s17, 2
        // Predicated region
        $region41: #{tpu_custom_call.1} parent=31 // pred_check
          %p3529 = pneg %p3528
        $region42: #{tpu_custom_call.1} parent=31 // pred_check_branch
          %3531 = sbr.rel (%p3529) target = $region44
        $region43: #{tpu_custom_call.1} parent=31 // pred_region
          %v3532 = vld [vmem:[%s2] sm:$0xff]
          %v3533 = vld [vmem:[%s2 + $0x8] sm:$0xff]
          %v3534 = vld [vmem:[%s2 + $0x10] sm:$0xff]
          %v3535 = vld [vmem:[%s2 + $0x18] sm:$0xff]
          %v3536 = vld [vmem:[%s2 + $0x20] sm:$0xff]
          %v3537 = vld [vmem:[%s2 + $0x28] sm:$0xff]
          %v3538 = vld [vmem:[%s2 + $0x30] sm:$0xff]
          %v3539 = vld [vmem:[%s2 + $0x38] sm:$0xff]
          %v3540 = vld [vmem:[%s2 + $0x40] sm:$0xff]
          %v3541 = vld [vmem:[%s2 + $0x48] sm:$0xff]
          %v3542 = vld [vmem:[%s2 + $0x50] sm:$0xff]
          %v3543 = vld [vmem:[%s2 + $0x58] sm:$0xff]
          %v3544 = vld [vmem:[%s2 + $0x60] sm:$0xff]
          %v3545 = vld [vmem:[%s2 + $0x68] sm:$0xff]
          %v3546 = vld [vmem:[%s2 + $0x70] sm:$0xff]
          %v3547 = vld [vmem:[%s2 + $0x78] sm:$0xff]
          %v3548 = vld [vmem:[%s2 + $0x80] sm:$0xff]
          %v3549 = vld [vmem:[%s2 + $0x88] sm:$0xff]
          %v3550 = vld [vmem:[%s2 + $0x90] sm:$0xff]
          %v3551 = vld [vmem:[%s2 + $0x98] sm:$0xff]
          %v3552 = vld [vmem:[%s2 + $0xa0] sm:$0xff]
          %v3553 = vld [vmem:[%s2 + $0xa8] sm:$0xff]
          %v3554 = vld [vmem:[%s2 + $0xb0] sm:$0xff]
          %v3555 = vld [vmem:[%s2 + $0xb8] sm:$0xff]
          %v3556 = vld [vmem:[%s2 + $0xc0] sm:$0xff]
          %v3557 = vld [vmem:[%s2 + $0xc8] sm:$0xff]
          %v3558 = vld [vmem:[%s2 + $0xd0] sm:$0xff]
          %v3559 = vld [vmem:[%s2 + $0xd8] sm:$0xff]
          %v3560 = vld [vmem:[%s2 + $0xe0] sm:$0xff]
          %v3561 = vld [vmem:[%s2 + $0xe8] sm:$0xff]
          %v3562 = vld [vmem:[%s2 + $0xf0] sm:$0xff]
          %v3563 = vld [vmem:[%s2 + $0xf8] sm:$0xff]
          %v3564 = vld [vmem:[%s2 + $0x100] sm:$0xff]
          %v3565 = vld [vmem:[%s2 + $0x108] sm:$0xff]
          %v3566 = vld [vmem:[%s2 + $0x110] sm:$0xff]
          %v3567 = vld [vmem:[%s2 + $0x118] sm:$0xff]
          %v3568 = vld [vmem:[%s2 + $0x120] sm:$0xff]
          %v3569 = vld [vmem:[%s2 + $0x128] sm:$0xff]
          %v3570 = vld [vmem:[%s2 + $0x130] sm:$0xff]
          %v3571 = vld [vmem:[%s2 + $0x138] sm:$0xff]
          %v3572 = vld [vmem:[%s2 + $0x140] sm:$0xff]
          %v3573 = vld [vmem:[%s2 + $0x148] sm:$0xff]
          %v3574 = vld [vmem:[%s2 + $0x150] sm:$0xff]
          %v3575 = vld [vmem:[%s2 + $0x158] sm:$0xff]
          %v3576 = vld [vmem:[%s2 + $0x160] sm:$0xff]
          %v3577 = vld [vmem:[%s2 + $0x168] sm:$0xff]
          %v3578 = vld [vmem:[%s2 + $0x170] sm:$0xff]
          %v3579 = vld [vmem:[%s2 + $0x178] sm:$0xff]
          %v3580 = vld [vmem:[%s2 + $0x180] sm:$0xff]
          %v3581 = vld [vmem:[%s2 + $0x188] sm:$0xff]
          %v3582 = vld [vmem:[%s2 + $0x190] sm:$0xff]
          %v3583 = vld [vmem:[%s2 + $0x198] sm:$0xff]
          %v3584 = vld [vmem:[%s2 + $0x1a0] sm:$0xff]
          %v3585 = vld [vmem:[%s2 + $0x1a8] sm:$0xff]
          %v3586 = vld [vmem:[%s2 + $0x1b0] sm:$0xff]
          %v3587 = vld [vmem:[%s2 + $0x1b8] sm:$0xff]
          %v3588 = vld [vmem:[%s2 + $0x1c0] sm:$0xff]
          %v3589 = vld [vmem:[%s2 + $0x1c8] sm:$0xff]
          %v3590 = vld [vmem:[%s2 + $0x1d0] sm:$0xff]
          %v3591 = vld [vmem:[%s2 + $0x1d8] sm:$0xff]
          %v3592 = vld [vmem:[%s2 + $0x1e0] sm:$0xff]
          %v3593 = vld [vmem:[%s2 + $0x1e8] sm:$0xff]
          %v3594 = vld [vmem:[%s2 + $0x1f0] sm:$0xff]
          %v3595 = vld [vmem:[%s2 + $0x1f8] sm:$0xff]
          %v3596 = vld [vmem:[%s2 + $0x200] sm:$0xff]
          %v3597 = vld [vmem:[%s2 + $0x208] sm:$0xff]
          %v3598 = vld [vmem:[%s2 + $0x210] sm:$0xff]
          %v3599 = vld [vmem:[%s2 + $0x218] sm:$0xff]
          %v3600 = vld [vmem:[%s2 + $0x220] sm:$0xff]
          %v3601 = vld [vmem:[%s2 + $0x228] sm:$0xff]
          %v3602 = vld [vmem:[%s2 + $0x230] sm:$0xff]
          %v3603 = vld [vmem:[%s2 + $0x238] sm:$0xff]
          %v3604 = vld [vmem:[%s2 + $0x240] sm:$0xff]
          %v3605 = vld [vmem:[%s2 + $0x248] sm:$0xff]
          %v3606 = vld [vmem:[%s2 + $0x250] sm:$0xff]
          %v3607 = vld [vmem:[%s2 + $0x258] sm:$0xff]
          %v3608 = vld [vmem:[%s2 + $0x260] sm:$0xff]
          %v3609 = vld [vmem:[%s2 + $0x268] sm:$0xff]
          %v3610 = vld [vmem:[%s2 + $0x270] sm:$0xff]
          %v3611 = vld [vmem:[%s2 + $0x278] sm:$0xff]
          %v3612 = vld [vmem:[%s2 + $0x280] sm:$0xff]
          %v3613 = vld [vmem:[%s2 + $0x288] sm:$0xff]
          %v3614 = vld [vmem:[%s2 + $0x290] sm:$0xff]
          %v3615 = vld [vmem:[%s2 + $0x298] sm:$0xff]
          %v3616 = vld [vmem:[%s2 + $0x2a0] sm:$0xff]
          %v3617 = vld [vmem:[%s2 + $0x2a8] sm:$0xff]
          %v3618 = vld [vmem:[%s2 + $0x2b0] sm:$0xff]
          %v3619 = vld [vmem:[%s2 + $0x2b8] sm:$0xff]
          %v3620 = vld [vmem:[%s2 + $0x2c0] sm:$0xff]
          %v3621 = vld [vmem:[%s2 + $0x2c8] sm:$0xff]
          %v3622 = vld [vmem:[%s2 + $0x2d0] sm:$0xff]
          %v3623 = vld [vmem:[%s2 + $0x2d8] sm:$0xff]
          %v3624 = vld [vmem:[%s2 + $0x2e0] sm:$0xff]
          %v3625 = vld [vmem:[%s2 + $0x2e8] sm:$0xff]
          %v3626 = vld [vmem:[%s2 + $0x2f0] sm:$0xff]
          %v3627 = vld [vmem:[%s2 + $0x2f8] sm:$0xff]
          %v3628 = vld [vmem:[%s2 + $0x300] sm:$0xff]
          %v3629 = vld [vmem:[%s2 + $0x308] sm:$0xff]
          %v3630 = vld [vmem:[%s2 + $0x310] sm:$0xff]
          %v3631 = vld [vmem:[%s2 + $0x318] sm:$0xff]
          %v3632 = vld [vmem:[%s2 + $0x320] sm:$0xff]
          %v3633 = vld [vmem:[%s2 + $0x328] sm:$0xff]
          %v3634 = vld [vmem:[%s2 + $0x330] sm:$0xff]
          %v3635 = vld [vmem:[%s2 + $0x338] sm:$0xff]
          %v3636 = vld [vmem:[%s2 + $0x340] sm:$0xff]
          %v3637 = vld [vmem:[%s2 + $0x348] sm:$0xff]
          %v3638 = vld [vmem:[%s2 + $0x350] sm:$0xff]
          %v3639 = vld [vmem:[%s2 + $0x358] sm:$0xff]
          %v3640 = vld [vmem:[%s2 + $0x360] sm:$0xff]
          %v3641 = vld [vmem:[%s2 + $0x368] sm:$0xff]
          %v3642 = vld [vmem:[%s2 + $0x370] sm:$0xff]
          %v3643 = vld [vmem:[%s2 + $0x378] sm:$0xff]
          %v3644 = vld [vmem:[%s2 + $0x380] sm:$0xff]
          %v3645 = vld [vmem:[%s2 + $0x388] sm:$0xff]
          %v3646 = vld [vmem:[%s2 + $0x390] sm:$0xff]
          %v3647 = vld [vmem:[%s2 + $0x398] sm:$0xff]
          %v3648 = vld [vmem:[%s2 + $0x3a0] sm:$0xff]
          %v3649 = vld [vmem:[%s2 + $0x3a8] sm:$0xff]
          %v3650 = vld [vmem:[%s2 + $0x3b0] sm:$0xff]
          %v3651 = vld [vmem:[%s2 + $0x3b8] sm:$0xff]
          %v3652 = vld [vmem:[%s2 + $0x3c0] sm:$0xff]
          %v3653 = vld [vmem:[%s2 + $0x3c8] sm:$0xff]
          %v3654 = vld [vmem:[%s2 + $0x3d0] sm:$0xff]
          %v3655 = vld [vmem:[%s2 + $0x3d8] sm:$0xff]
          %v3656 = vld [vmem:[%s2 + $0x3e0] sm:$0xff]
          %v3657 = vld [vmem:[%s2 + $0x3e8] sm:$0xff]
          %v3658 = vld [vmem:[%s2 + $0x3f0] sm:$0xff]
          %v3659 = vld [vmem:[%s2 + $0x3f8] sm:$0xff]
          %v3660 = vld [vmem:[%s2 + $0x400] sm:$0xff]
          %v3661 = vld [vmem:[%s2 + $0x408] sm:$0xff]
          %v3662 = vld [vmem:[%s2 + $0x410] sm:$0xff]
          %v3663 = vld [vmem:[%s2 + $0x418] sm:$0xff]
          %v3664 = vld [vmem:[%s2 + $0x420] sm:$0xff]
          %v3665 = vld [vmem:[%s2 + $0x428] sm:$0xff]
          %v3666 = vld [vmem:[%s2 + $0x430] sm:$0xff]
          %v3667 = vld [vmem:[%s2 + $0x438] sm:$0xff]
          %v3668 = vld [vmem:[%s2 + $0x440] sm:$0xff]
          %v3669 = vld [vmem:[%s2 + $0x448] sm:$0xff]
          %v3670 = vld [vmem:[%s2 + $0x450] sm:$0xff]
          %v3671 = vld [vmem:[%s2 + $0x458] sm:$0xff]
          %v3672 = vld [vmem:[%s2 + $0x460] sm:$0xff]
          %v3673 = vld [vmem:[%s2 + $0x468] sm:$0xff]
          %v3674 = vld [vmem:[%s2 + $0x470] sm:$0xff]
          %v3675 = vld [vmem:[%s2 + $0x478] sm:$0xff]
          %v3676 = vld [vmem:[%s2 + $0x480] sm:$0xff]
          %v3677 = vld [vmem:[%s2 + $0x488] sm:$0xff]
          %v3678 = vld [vmem:[%s2 + $0x490] sm:$0xff]
          %v3679 = vld [vmem:[%s2 + $0x498] sm:$0xff]
          %v3680 = vld [vmem:[%s2 + $0x4a0] sm:$0xff]
          %v3681 = vld [vmem:[%s2 + $0x4a8] sm:$0xff]
          %v3682 = vld [vmem:[%s2 + $0x4b0] sm:$0xff]
          %v3683 = vld [vmem:[%s2 + $0x4b8] sm:$0xff]
          %v3684 = vld [vmem:[%s2 + $0x4c0] sm:$0xff]
          %v3685 = vld [vmem:[%s2 + $0x4c8] sm:$0xff]
          %v3686 = vld [vmem:[%s2 + $0x4d0] sm:$0xff]
          %v3687 = vld [vmem:[%s2 + $0x4d8] sm:$0xff]
          %v3688 = vld [vmem:[%s2 + $0x4e0] sm:$0xff]
          %v3689 = vld [vmem:[%s2 + $0x4e8] sm:$0xff]
          %v3690 = vld [vmem:[%s2 + $0x4f0] sm:$0xff]
          %v3691 = vld [vmem:[%s2 + $0x4f8] sm:$0xff]
          %v3692 = vld [vmem:[%s2 + $0x500] sm:$0xff]
          %v3693 = vld [vmem:[%s2 + $0x508] sm:$0xff]
          %v3694 = vld [vmem:[%s2 + $0x510] sm:$0xff]
          %v3695 = vld [vmem:[%s2 + $0x518] sm:$0xff]
          %v3696 = vld [vmem:[%s2 + $0x520] sm:$0xff]
          %v3697 = vld [vmem:[%s2 + $0x528] sm:$0xff]
          %v3698 = vld [vmem:[%s2 + $0x530] sm:$0xff]
          %v3699 = vld [vmem:[%s2 + $0x538] sm:$0xff]
          %v3700 = vld [vmem:[%s2 + $0x540] sm:$0xff]
          %v3701 = vld [vmem:[%s2 + $0x548] sm:$0xff]
          %v3702 = vld [vmem:[%s2 + $0x550] sm:$0xff]
          %v3703 = vld [vmem:[%s2 + $0x558] sm:$0xff]
          %v3704 = vld [vmem:[%s2 + $0x560] sm:$0xff]
          %v3705 = vld [vmem:[%s2 + $0x568] sm:$0xff]
          %v3706 = vld [vmem:[%s2 + $0x570] sm:$0xff]
          %v3707 = vld [vmem:[%s2 + $0x578] sm:$0xff]
          %v3708 = vld [vmem:[%s2 + $0x580] sm:$0xff]
          %v3709 = vld [vmem:[%s2 + $0x588] sm:$0xff]
          %v3710 = vld [vmem:[%s2 + $0x590] sm:$0xff]
          %v3711 = vld [vmem:[%s2 + $0x598] sm:$0xff]
          %v3712 = vld [vmem:[%s2 + $0x5a0] sm:$0xff]
          %v3713 = vld [vmem:[%s2 + $0x5a8] sm:$0xff]
          %v3714 = vld [vmem:[%s2 + $0x5b0] sm:$0xff]
          %v3715 = vld [vmem:[%s2 + $0x5b8] sm:$0xff]
          %v3716 = vld [vmem:[%s2 + $0x5c0] sm:$0xff]
          %v3717 = vld [vmem:[%s2 + $0x5c8] sm:$0xff]
          %v3718 = vld [vmem:[%s2 + $0x5d0] sm:$0xff]
          %v3719 = vld [vmem:[%s2 + $0x5d8] sm:$0xff]
          %v3720 = vld [vmem:[%s2 + $0x5e0] sm:$0xff]
          %v3721 = vld [vmem:[%s2 + $0x5e8] sm:$0xff]
          %v3722 = vld [vmem:[%s2 + $0x5f0] sm:$0xff]
          %v3723 = vld [vmem:[%s2 + $0x5f8] sm:$0xff]
          %vm3724 = vcmask 400384
          %v3725 = vsel %vm3724, %v3532, 0.0
          %3726 = vadd.xlane.f32.xlu0 %v3725
          %v3727 = vpop.xlane.xlu0 %3726
          %v3728 = vsel %vm3724, %v3533, 0.0
          %3729 = vadd.xlane.f32.xlu0 %v3728
          %v3730 = vpop.xlane.xlu0 %3729
          %v3731 = vsel %vm3724, %v3534, 0.0
          %3732 = vadd.xlane.f32.xlu0 %v3731
          %v3733 = vpop.xlane.xlu0 %3732
          %v3734 = vsel %vm3724, %v3535, 0.0
          %3735 = vadd.xlane.f32.xlu0 %v3734
          %v3736 = vpop.xlane.xlu0 %3735
          %v3737 = vsel %vm3724, %v3536, 0.0
          %3738 = vadd.xlane.f32.xlu0 %v3737
          %v3739 = vpop.xlane.xlu0 %3738
          %v3740 = vsel %vm3724, %v3537, 0.0
          %3741 = vadd.xlane.f32.xlu0 %v3740
          %v3742 = vpop.xlane.xlu0 %3741
          %v3743 = vsel %vm3724, %v3538, 0.0
          %3744 = vadd.xlane.f32.xlu0 %v3743
          %v3745 = vpop.xlane.xlu0 %3744
          %v3746 = vsel %vm3724, %v3539, 0.0
          %3747 = vadd.xlane.f32.xlu0 %v3746
          %v3748 = vpop.xlane.xlu0 %3747
          %v3749 = vsel %vm3724, %v3540, 0.0
          %3750 = vadd.xlane.f32.xlu0 %v3749
          %v3751 = vpop.xlane.xlu0 %3750
          %v3752 = vsel %vm3724, %v3541, 0.0
          %3753 = vadd.xlane.f32.xlu0 %v3752
          %v3754 = vpop.xlane.xlu0 %3753
          %v3755 = vsel %vm3724, %v3542, 0.0
          %3756 = vadd.xlane.f32.xlu0 %v3755
          %v3757 = vpop.xlane.xlu0 %3756
          %v3758 = vsel %vm3724, %v3543, 0.0
          %3759 = vadd.xlane.f32.xlu0 %v3758
          %v3760 = vpop.xlane.xlu0 %3759
          %v3761 = vsel %vm3724, %v3544, 0.0
          %3762 = vadd.xlane.f32.xlu0 %v3761
          %v3763 = vpop.xlane.xlu0 %3762
          %v3764 = vsel %vm3724, %v3545, 0.0
          %3765 = vadd.xlane.f32.xlu0 %v3764
          %v3766 = vpop.xlane.xlu0 %3765
          %v3767 = vsel %vm3724, %v3546, 0.0
          %3768 = vadd.xlane.f32.xlu0 %v3767
          %v3769 = vpop.xlane.xlu0 %3768
          %v3770 = vsel %vm3724, %v3547, 0.0
          %3771 = vadd.xlane.f32.xlu0 %v3770
          %v3772 = vpop.xlane.xlu0 %3771
          %v3773 = vsel %vm3724, %v3548, 0.0
          %3774 = vadd.xlane.f32.xlu0 %v3773
          %v3775 = vpop.xlane.xlu0 %3774
          %v3776 = vsel %vm3724, %v3549, 0.0
          %3777 = vadd.xlane.f32.xlu0 %v3776
          %v3778 = vpop.xlane.xlu0 %3777
          %v3779 = vsel %vm3724, %v3550, 0.0
          %3780 = vadd.xlane.f32.xlu0 %v3779
          %v3781 = vpop.xlane.xlu0 %3780
          %v3782 = vsel %vm3724, %v3551, 0.0
          %3783 = vadd.xlane.f32.xlu0 %v3782
          %v3784 = vpop.xlane.xlu0 %3783
          %v3785 = vsel %vm3724, %v3552, 0.0
          %3786 = vadd.xlane.f32.xlu0 %v3785
          %v3787 = vpop.xlane.xlu0 %3786
          %v3788 = vsel %vm3724, %v3553, 0.0
          %3789 = vadd.xlane.f32.xlu0 %v3788
          %v3790 = vpop.xlane.xlu0 %3789
          %v3791 = vsel %vm3724, %v3554, 0.0
          %3792 = vadd.xlane.f32.xlu0 %v3791
          %v3793 = vpop.xlane.xlu0 %3792
          %v3794 = vsel %vm3724, %v3555, 0.0
          %3795 = vadd.xlane.f32.xlu0 %v3794
          %v3796 = vpop.xlane.xlu0 %3795
          %v3797 = vsel %vm3724, %v3556, 0.0
          %3798 = vadd.xlane.f32.xlu0 %v3797
          %v3799 = vpop.xlane.xlu0 %3798
          %v3800 = vsel %vm3724, %v3557, 0.0
          %3801 = vadd.xlane.f32.xlu0 %v3800
          %v3802 = vpop.xlane.xlu0 %3801
          %v3803 = vsel %vm3724, %v3558, 0.0
          %3804 = vadd.xlane.f32.xlu0 %v3803
          %v3805 = vpop.xlane.xlu0 %3804
          %v3806 = vsel %vm3724, %v3559, 0.0
          %3807 = vadd.xlane.f32.xlu0 %v3806
          %v3808 = vpop.xlane.xlu0 %3807
          %v3809 = vsel %vm3724, %v3560, 0.0
          %3810 = vadd.xlane.f32.xlu0 %v3809
          %v3811 = vpop.xlane.xlu0 %3810
          %v3812 = vsel %vm3724, %v3561, 0.0
          %3813 = vadd.xlane.f32.xlu0 %v3812
          %v3814 = vpop.xlane.xlu0 %3813
          %v3815 = vsel %vm3724, %v3562, 0.0
          %3816 = vadd.xlane.f32.xlu0 %v3815
          %v3817 = vpop.xlane.xlu0 %3816
          %v3818 = vsel %vm3724, %v3563, 0.0
          %3819 = vadd.xlane.f32.xlu0 %v3818
          %v3820 = vpop.xlane.xlu0 %3819
          %v3821 = vsel %vm3724, %v3564, 0.0
          %3822 = vadd.xlane.f32.xlu0 %v3821
          %v3823 = vpop.xlane.xlu0 %3822
          %v3824 = vsel %vm3724, %v3565, 0.0
          %3825 = vadd.xlane.f32.xlu0 %v3824
          %v3826 = vpop.xlane.xlu0 %3825
          %v3827 = vsel %vm3724, %v3566, 0.0
          %3828 = vadd.xlane.f32.xlu0 %v3827
          %v3829 = vpop.xlane.xlu0 %3828
          %v3830 = vsel %vm3724, %v3567, 0.0
          %3831 = vadd.xlane.f32.xlu0 %v3830
          %v3832 = vpop.xlane.xlu0 %3831
          %v3833 = vsel %vm3724, %v3568, 0.0
          %3834 = vadd.xlane.f32.xlu0 %v3833
          %v3835 = vpop.xlane.xlu0 %3834
          %v3836 = vsel %vm3724, %v3569, 0.0
          %3837 = vadd.xlane.f32.xlu0 %v3836
          %v3838 = vpop.xlane.xlu0 %3837
          %v3839 = vsel %vm3724, %v3570, 0.0
          %3840 = vadd.xlane.f32.xlu0 %v3839
          %v3841 = vpop.xlane.xlu0 %3840
          %v3842 = vsel %vm3724, %v3571, 0.0
          %3843 = vadd.xlane.f32.xlu0 %v3842
          %v3844 = vpop.xlane.xlu0 %3843
          %v3845 = vsel %vm3724, %v3572, 0.0
          %3846 = vadd.xlane.f32.xlu0 %v3845
          %v3847 = vpop.xlane.xlu0 %3846
          %v3848 = vsel %vm3724, %v3573, 0.0
          %3849 = vadd.xlane.f32.xlu0 %v3848
          %v3850 = vpop.xlane.xlu0 %3849
          %v3851 = vsel %vm3724, %v3574, 0.0
          %3852 = vadd.xlane.f32.xlu0 %v3851
          %v3853 = vpop.xlane.xlu0 %3852
          %v3854 = vsel %vm3724, %v3575, 0.0
          %3855 = vadd.xlane.f32.xlu0 %v3854
          %v3856 = vpop.xlane.xlu0 %3855
          %v3857 = vsel %vm3724, %v3576, 0.0
          %3858 = vadd.xlane.f32.xlu0 %v3857
          %v3859 = vpop.xlane.xlu0 %3858
          %v3860 = vsel %vm3724, %v3577, 0.0
          %3861 = vadd.xlane.f32.xlu0 %v3860
          %v3862 = vpop.xlane.xlu0 %3861
          %v3863 = vsel %vm3724, %v3578, 0.0
          %3864 = vadd.xlane.f32.xlu0 %v3863
          %v3865 = vpop.xlane.xlu0 %3864
          %v3866 = vsel %vm3724, %v3579, 0.0
          %3867 = vadd.xlane.f32.xlu0 %v3866
          %v3868 = vpop.xlane.xlu0 %3867
          %v3869 = vsel %vm3724, %v3580, 0.0
          %3870 = vadd.xlane.f32.xlu0 %v3869
          %v3871 = vpop.xlane.xlu0 %3870
          %v3872 = vsel %vm3724, %v3581, 0.0
          %3873 = vadd.xlane.f32.xlu0 %v3872
          %v3874 = vpop.xlane.xlu0 %3873
          %v3875 = vsel %vm3724, %v3582, 0.0
          %3876 = vadd.xlane.f32.xlu0 %v3875
          %v3877 = vpop.xlane.xlu0 %3876
          %v3878 = vsel %vm3724, %v3583, 0.0
          %3879 = vadd.xlane.f32.xlu0 %v3878
          %v3880 = vpop.xlane.xlu0 %3879
          %v3881 = vsel %vm3724, %v3584, 0.0
          %3882 = vadd.xlane.f32.xlu0 %v3881
          %v3883 = vpop.xlane.xlu0 %3882
          %v3884 = vsel %vm3724, %v3585, 0.0
          %3885 = vadd.xlane.f32.xlu0 %v3884
          %v3886 = vpop.xlane.xlu0 %3885
          %v3887 = vsel %vm3724, %v3586, 0.0
          %3888 = vadd.xlane.f32.xlu0 %v3887
          %v3889 = vpop.xlane.xlu0 %3888
          %v3890 = vsel %vm3724, %v3587, 0.0
          %3891 = vadd.xlane.f32.xlu0 %v3890
          %v3892 = vpop.xlane.xlu0 %3891
          %v3893 = vsel %vm3724, %v3588, 0.0
          %3894 = vadd.xlane.f32.xlu0 %v3893
          %v3895 = vpop.xlane.xlu0 %3894
          %v3896 = vsel %vm3724, %v3589, 0.0
          %3897 = vadd.xlane.f32.xlu0 %v3896
          %v3898 = vpop.xlane.xlu0 %3897
          %v3899 = vsel %vm3724, %v3590, 0.0
          %3900 = vadd.xlane.f32.xlu0 %v3899
          %v3901 = vpop.xlane.xlu0 %3900
          %v3902 = vsel %vm3724, %v3591, 0.0
          %3903 = vadd.xlane.f32.xlu0 %v3902
          %v3904 = vpop.xlane.xlu0 %3903
          %v3905 = vsel %vm3724, %v3592, 0.0
          %3906 = vadd.xlane.f32.xlu0 %v3905
          %v3907 = vpop.xlane.xlu0 %3906
          %v3908 = vsel %vm3724, %v3593, 0.0
          %3909 = vadd.xlane.f32.xlu0 %v3908
          %v3910 = vpop.xlane.xlu0 %3909
          %v3911 = vsel %vm3724, %v3594, 0.0
          %3912 = vadd.xlane.f32.xlu0 %v3911
          %v3913 = vpop.xlane.xlu0 %3912
          %v3914 = vsel %vm3724, %v3595, 0.0
          %3915 = vadd.xlane.f32.xlu0 %v3914
          %v3916 = vpop.xlane.xlu0 %3915
          %v3917 = vsel %vm3724, %v3596, 0.0
          %3918 = vadd.xlane.f32.xlu0 %v3917
          %v3919 = vpop.xlane.xlu0 %3918
          %v3920 = vsel %vm3724, %v3597, 0.0
          %3921 = vadd.xlane.f32.xlu0 %v3920
          %v3922 = vpop.xlane.xlu0 %3921
          %v3923 = vsel %vm3724, %v3598, 0.0
          %3924 = vadd.xlane.f32.xlu0 %v3923
          %v3925 = vpop.xlane.xlu0 %3924
          %v3926 = vsel %vm3724, %v3599, 0.0
          %3927 = vadd.xlane.f32.xlu0 %v3926
          %v3928 = vpop.xlane.xlu0 %3927
          %v3929 = vsel %vm3724, %v3600, 0.0
          %3930 = vadd.xlane.f32.xlu0 %v3929
          %v3931 = vpop.xlane.xlu0 %3930
          %v3932 = vsel %vm3724, %v3601, 0.0
          %3933 = vadd.xlane.f32.xlu0 %v3932
          %v3934 = vpop.xlane.xlu0 %3933
          %v3935 = vsel %vm3724, %v3602, 0.0
          %3936 = vadd.xlane.f32.xlu0 %v3935
          %v3937 = vpop.xlane.xlu0 %3936
          %v3938 = vsel %vm3724, %v3603, 0.0
          %3939 = vadd.xlane.f32.xlu0 %v3938
          %v3940 = vpop.xlane.xlu0 %3939
          %v3941 = vsel %vm3724, %v3604, 0.0
          %3942 = vadd.xlane.f32.xlu0 %v3941
          %v3943 = vpop.xlane.xlu0 %3942
          %v3944 = vsel %vm3724, %v3605, 0.0
          %3945 = vadd.xlane.f32.xlu0 %v3944
          %v3946 = vpop.xlane.xlu0 %3945
          %v3947 = vsel %vm3724, %v3606, 0.0
          %3948 = vadd.xlane.f32.xlu0 %v3947
          %v3949 = vpop.xlane.xlu0 %3948
          %v3950 = vsel %vm3724, %v3607, 0.0
          %3951 = vadd.xlane.f32.xlu0 %v3950
          %v3952 = vpop.xlane.xlu0 %3951
          %v3953 = vsel %vm3724, %v3608, 0.0
          %3954 = vadd.xlane.f32.xlu0 %v3953
          %v3955 = vpop.xlane.xlu0 %3954
          %v3956 = vsel %vm3724, %v3609, 0.0
          %3957 = vadd.xlane.f32.xlu0 %v3956
          %v3958 = vpop.xlane.xlu0 %3957
          %v3959 = vsel %vm3724, %v3610, 0.0
          %3960 = vadd.xlane.f32.xlu0 %v3959
          %v3961 = vpop.xlane.xlu0 %3960
          %v3962 = vsel %vm3724, %v3611, 0.0
          %3963 = vadd.xlane.f32.xlu0 %v3962
          %v3964 = vpop.xlane.xlu0 %3963
          %v3965 = vsel %vm3724, %v3612, 0.0
          %3966 = vadd.xlane.f32.xlu0 %v3965
          %v3967 = vpop.xlane.xlu0 %3966
          %v3968 = vsel %vm3724, %v3613, 0.0
          %3969 = vadd.xlane.f32.xlu0 %v3968
          %v3970 = vpop.xlane.xlu0 %3969
          %v3971 = vsel %vm3724, %v3614, 0.0
          %3972 = vadd.xlane.f32.xlu0 %v3971
          %v3973 = vpop.xlane.xlu0 %3972
          %v3974 = vsel %vm3724, %v3615, 0.0
          %3975 = vadd.xlane.f32.xlu0 %v3974
          %v3976 = vpop.xlane.xlu0 %3975
          %v3977 = vsel %vm3724, %v3616, 0.0
          %3978 = vadd.xlane.f32.xlu0 %v3977
          %v3979 = vpop.xlane.xlu0 %3978
          %v3980 = vsel %vm3724, %v3617, 0.0
          %3981 = vadd.xlane.f32.xlu0 %v3980
          %v3982 = vpop.xlane.xlu0 %3981
          %v3983 = vsel %vm3724, %v3618, 0.0
          %3984 = vadd.xlane.f32.xlu0 %v3983
          %v3985 = vpop.xlane.xlu0 %3984
          %v3986 = vsel %vm3724, %v3619, 0.0
          %3987 = vadd.xlane.f32.xlu0 %v3986
          %v3988 = vpop.xlane.xlu0 %3987
          %v3989 = vsel %vm3724, %v3620, 0.0
          %3990 = vadd.xlane.f32.xlu0 %v3989
          %v3991 = vpop.xlane.xlu0 %3990
          %v3992 = vsel %vm3724, %v3621, 0.0
          %3993 = vadd.xlane.f32.xlu0 %v3992
          %v3994 = vpop.xlane.xlu0 %3993
          %v3995 = vsel %vm3724, %v3622, 0.0
          %3996 = vadd.xlane.f32.xlu0 %v3995
          %v3997 = vpop.xlane.xlu0 %3996
          %v3998 = vsel %vm3724, %v3623, 0.0
          %3999 = vadd.xlane.f32.xlu0 %v3998
          %v4000 = vpop.xlane.xlu0 %3999
          %v4001 = vsel %vm3724, %v3624, 0.0
          %4002 = vadd.xlane.f32.xlu0 %v4001
          %v4003 = vpop.xlane.xlu0 %4002
          %v4004 = vsel %vm3724, %v3625, 0.0
          %4005 = vadd.xlane.f32.xlu0 %v4004
          %v4006 = vpop.xlane.xlu0 %4005
          %v4007 = vsel %vm3724, %v3626, 0.0
          %4008 = vadd.xlane.f32.xlu0 %v4007
          %v4009 = vpop.xlane.xlu0 %4008
          %v4010 = vsel %vm3724, %v3627, 0.0
          %4011 = vadd.xlane.f32.xlu0 %v4010
          %v4012 = vpop.xlane.xlu0 %4011
          %v4013 = vsel %vm3724, %v3628, 0.0
          %4014 = vadd.xlane.f32.xlu0 %v4013
          %v4015 = vpop.xlane.xlu0 %4014
          %v4016 = vsel %vm3724, %v3629, 0.0
          %4017 = vadd.xlane.f32.xlu0 %v4016
          %v4018 = vpop.xlane.xlu0 %4017
          %v4019 = vsel %vm3724, %v3630, 0.0
          %4020 = vadd.xlane.f32.xlu0 %v4019
          %v4021 = vpop.xlane.xlu0 %4020
          %v4022 = vsel %vm3724, %v3631, 0.0
          %4023 = vadd.xlane.f32.xlu0 %v4022
          %v4024 = vpop.xlane.xlu0 %4023
          %v4025 = vsel %vm3724, %v3632, 0.0
          %4026 = vadd.xlane.f32.xlu0 %v4025
          %v4027 = vpop.xlane.xlu0 %4026
          %v4028 = vsel %vm3724, %v3633, 0.0
          %4029 = vadd.xlane.f32.xlu0 %v4028
          %v4030 = vpop.xlane.xlu0 %4029
          %v4031 = vsel %vm3724, %v3634, 0.0
          %4032 = vadd.xlane.f32.xlu0 %v4031
          %v4033 = vpop.xlane.xlu0 %4032
          %v4034 = vsel %vm3724, %v3635, 0.0
          %4035 = vadd.xlane.f32.xlu0 %v4034
          %v4036 = vpop.xlane.xlu0 %4035
          %v4037 = vsel %vm3724, %v3636, 0.0
          %4038 = vadd.xlane.f32.xlu0 %v4037
          %v4039 = vpop.xlane.xlu0 %4038
          %v4040 = vsel %vm3724, %v3637, 0.0
          %4041 = vadd.xlane.f32.xlu0 %v4040
          %v4042 = vpop.xlane.xlu0 %4041
          %v4043 = vsel %vm3724, %v3638, 0.0
          %4044 = vadd.xlane.f32.xlu0 %v4043
          %v4045 = vpop.xlane.xlu0 %4044
          %v4046 = vsel %vm3724, %v3639, 0.0
          %4047 = vadd.xlane.f32.xlu0 %v4046
          %v4048 = vpop.xlane.xlu0 %4047
          %v4049 = vsel %vm3724, %v3640, 0.0
          %4050 = vadd.xlane.f32.xlu0 %v4049
          %v4051 = vpop.xlane.xlu0 %4050
          %v4052 = vsel %vm3724, %v3641, 0.0
          %4053 = vadd.xlane.f32.xlu0 %v4052
          %v4054 = vpop.xlane.xlu0 %4053
          %v4055 = vsel %vm3724, %v3642, 0.0
          %4056 = vadd.xlane.f32.xlu0 %v4055
          %v4057 = vpop.xlane.xlu0 %4056
          %v4058 = vsel %vm3724, %v3643, 0.0
          %4059 = vadd.xlane.f32.xlu0 %v4058
          %v4060 = vpop.xlane.xlu0 %4059
          %v4061 = vsel %vm3724, %v3644, 0.0
          %4062 = vadd.xlane.f32.xlu0 %v4061
          %v4063 = vpop.xlane.xlu0 %4062
          %v4064 = vsel %vm3724, %v3645, 0.0
          %4065 = vadd.xlane.f32.xlu0 %v4064
          %v4066 = vpop.xlane.xlu0 %4065
          %v4067 = vsel %vm3724, %v3646, 0.0
          %4068 = vadd.xlane.f32.xlu0 %v4067
          %v4069 = vpop.xlane.xlu0 %4068
          %v4070 = vsel %vm3724, %v3647, 0.0
          %4071 = vadd.xlane.f32.xlu0 %v4070
          %v4072 = vpop.xlane.xlu0 %4071
          %v4073 = vsel %vm3724, %v3648, 0.0
          %4074 = vadd.xlane.f32.xlu0 %v4073
          %v4075 = vpop.xlane.xlu0 %4074
          %v4076 = vsel %vm3724, %v3649, 0.0
          %4077 = vadd.xlane.f32.xlu0 %v4076
          %v4078 = vpop.xlane.xlu0 %4077
          %v4079 = vsel %vm3724, %v3650, 0.0
          %4080 = vadd.xlane.f32.xlu0 %v4079
          %v4081 = vpop.xlane.xlu0 %4080
          %v4082 = vsel %vm3724, %v3651, 0.0
          %4083 = vadd.xlane.f32.xlu0 %v4082
          %v4084 = vpop.xlane.xlu0 %4083
          %v4085 = vsel %vm3724, %v3652, 0.0
          %4086 = vadd.xlane.f32.xlu0 %v4085
          %v4087 = vpop.xlane.xlu0 %4086
          %v4088 = vsel %vm3724, %v3653, 0.0
          %4089 = vadd.xlane.f32.xlu0 %v4088
          %v4090 = vpop.xlane.xlu0 %4089
          %v4091 = vsel %vm3724, %v3654, 0.0
          %4092 = vadd.xlane.f32.xlu0 %v4091
          %v4093 = vpop.xlane.xlu0 %4092
          %v4094 = vsel %vm3724, %v3655, 0.0
          %4095 = vadd.xlane.f32.xlu0 %v4094
          %v4096 = vpop.xlane.xlu0 %4095
          %v4097 = vsel %vm3724, %v3656, 0.0
          %4098 = vadd.xlane.f32.xlu0 %v4097
          %v4099 = vpop.xlane.xlu0 %4098
          %v4100 = vsel %vm3724, %v3657, 0.0
          %4101 = vadd.xlane.f32.xlu0 %v4100
          %v4102 = vpop.xlane.xlu0 %4101
          %v4103 = vsel %vm3724, %v3658, 0.0
          %4104 = vadd.xlane.f32.xlu0 %v4103
          %v4105 = vpop.xlane.xlu0 %4104
          %v4106 = vsel %vm3724, %v3659, 0.0
          %4107 = vadd.xlane.f32.xlu0 %v4106
          %v4108 = vpop.xlane.xlu0 %4107
          %v4109 = vsel %vm3724, %v3660, 0.0
          %4110 = vadd.xlane.f32.xlu0 %v4109
          %v4111 = vpop.xlane.xlu0 %4110
          %v4112 = vsel %vm3724, %v3661, 0.0
          %4113 = vadd.xlane.f32.xlu0 %v4112
          %v4114 = vpop.xlane.xlu0 %4113
          %v4115 = vsel %vm3724, %v3662, 0.0
          %4116 = vadd.xlane.f32.xlu0 %v4115
          %v4117 = vpop.xlane.xlu0 %4116
          %v4118 = vsel %vm3724, %v3663, 0.0
          %4119 = vadd.xlane.f32.xlu0 %v4118
          %v4120 = vpop.xlane.xlu0 %4119
          %v4121 = vsel %vm3724, %v3664, 0.0
          %4122 = vadd.xlane.f32.xlu0 %v4121
          %v4123 = vpop.xlane.xlu0 %4122
          %v4124 = vsel %vm3724, %v3665, 0.0
          %4125 = vadd.xlane.f32.xlu0 %v4124
          %v4126 = vpop.xlane.xlu0 %4125
          %v4127 = vsel %vm3724, %v3666, 0.0
          %4128 = vadd.xlane.f32.xlu0 %v4127
          %v4129 = vpop.xlane.xlu0 %4128
          %v4130 = vsel %vm3724, %v3667, 0.0
          %4131 = vadd.xlane.f32.xlu0 %v4130
          %v4132 = vpop.xlane.xlu0 %4131
          %v4133 = vsel %vm3724, %v3668, 0.0
          %4134 = vadd.xlane.f32.xlu0 %v4133
          %v4135 = vpop.xlane.xlu0 %4134
          %v4136 = vsel %vm3724, %v3669, 0.0
          %4137 = vadd.xlane.f32.xlu0 %v4136
          %v4138 = vpop.xlane.xlu0 %4137
          %v4139 = vsel %vm3724, %v3670, 0.0
          %4140 = vadd.xlane.f32.xlu0 %v4139
          %v4141 = vpop.xlane.xlu0 %4140
          %v4142 = vsel %vm3724, %v3671, 0.0
          %4143 = vadd.xlane.f32.xlu0 %v4142
          %v4144 = vpop.xlane.xlu0 %4143
          %v4145 = vsel %vm3724, %v3672, 0.0
          %4146 = vadd.xlane.f32.xlu0 %v4145
          %v4147 = vpop.xlane.xlu0 %4146
          %v4148 = vsel %vm3724, %v3673, 0.0
          %4149 = vadd.xlane.f32.xlu0 %v4148
          %v4150 = vpop.xlane.xlu0 %4149
          %v4151 = vsel %vm3724, %v3674, 0.0
          %4152 = vadd.xlane.f32.xlu0 %v4151
          %v4153 = vpop.xlane.xlu0 %4152
          %v4154 = vsel %vm3724, %v3675, 0.0
          %4155 = vadd.xlane.f32.xlu0 %v4154
          %v4156 = vpop.xlane.xlu0 %4155
          %v4157 = vsel %vm3724, %v3676, 0.0
          %4158 = vadd.xlane.f32.xlu0 %v4157
          %v4159 = vpop.xlane.xlu0 %4158
          %v4160 = vsel %vm3724, %v3677, 0.0
          %4161 = vadd.xlane.f32.xlu0 %v4160
          %v4162 = vpop.xlane.xlu0 %4161
          %v4163 = vsel %vm3724, %v3678, 0.0
          %4164 = vadd.xlane.f32.xlu0 %v4163
          %v4165 = vpop.xlane.xlu0 %4164
          %v4166 = vsel %vm3724, %v3679, 0.0
          %4167 = vadd.xlane.f32.xlu0 %v4166
          %v4168 = vpop.xlane.xlu0 %4167
          %v4169 = vsel %vm3724, %v3680, 0.0
          %4170 = vadd.xlane.f32.xlu0 %v4169
          %v4171 = vpop.xlane.xlu0 %4170
          %v4172 = vsel %vm3724, %v3681, 0.0
          %4173 = vadd.xlane.f32.xlu0 %v4172
          %v4174 = vpop.xlane.xlu0 %4173
          %v4175 = vsel %vm3724, %v3682, 0.0
          %4176 = vadd.xlane.f32.xlu0 %v4175
          %v4177 = vpop.xlane.xlu0 %4176
          %v4178 = vsel %vm3724, %v3683, 0.0
          %4179 = vadd.xlane.f32.xlu0 %v4178
          %v4180 = vpop.xlane.xlu0 %4179
          %v4181 = vsel %vm3724, %v3684, 0.0
          %4182 = vadd.xlane.f32.xlu0 %v4181
          %v4183 = vpop.xlane.xlu0 %4182
          %v4184 = vsel %vm3724, %v3685, 0.0
          %4185 = vadd.xlane.f32.xlu0 %v4184
          %v4186 = vpop.xlane.xlu0 %4185
          %v4187 = vsel %vm3724, %v3686, 0.0
          %4188 = vadd.xlane.f32.xlu0 %v4187
          %v4189 = vpop.xlane.xlu0 %4188
          %v4190 = vsel %vm3724, %v3687, 0.0
          %4191 = vadd.xlane.f32.xlu0 %v4190
          %v4192 = vpop.xlane.xlu0 %4191
          %v4193 = vsel %vm3724, %v3688, 0.0
          %4194 = vadd.xlane.f32.xlu0 %v4193
          %v4195 = vpop.xlane.xlu0 %4194
          %v4196 = vsel %vm3724, %v3689, 0.0
          %4197 = vadd.xlane.f32.xlu0 %v4196
          %v4198 = vpop.xlane.xlu0 %4197
          %v4199 = vsel %vm3724, %v3690, 0.0
          %4200 = vadd.xlane.f32.xlu0 %v4199
          %v4201 = vpop.xlane.xlu0 %4200
          %v4202 = vsel %vm3724, %v3691, 0.0
          %4203 = vadd.xlane.f32.xlu0 %v4202
          %v4204 = vpop.xlane.xlu0 %4203
          %v4205 = vsel %vm3724, %v3692, 0.0
          %4206 = vadd.xlane.f32.xlu0 %v4205
          %v4207 = vpop.xlane.xlu0 %4206
          %v4208 = vsel %vm3724, %v3693, 0.0
          %4209 = vadd.xlane.f32.xlu0 %v4208
          %v4210 = vpop.xlane.xlu0 %4209
          %v4211 = vsel %vm3724, %v3694, 0.0
          %4212 = vadd.xlane.f32.xlu0 %v4211
          %v4213 = vpop.xlane.xlu0 %4212
          %v4214 = vsel %vm3724, %v3695, 0.0
          %4215 = vadd.xlane.f32.xlu0 %v4214
          %v4216 = vpop.xlane.xlu0 %4215
          %v4217 = vsel %vm3724, %v3696, 0.0
          %4218 = vadd.xlane.f32.xlu0 %v4217
          %v4219 = vpop.xlane.xlu0 %4218
          %v4220 = vsel %vm3724, %v3697, 0.0
          %4221 = vadd.xlane.f32.xlu0 %v4220
          %v4222 = vpop.xlane.xlu0 %4221
          %v4223 = vsel %vm3724, %v3698, 0.0
          %4224 = vadd.xlane.f32.xlu0 %v4223
          %v4225 = vpop.xlane.xlu0 %4224
          %v4226 = vsel %vm3724, %v3699, 0.0
          %4227 = vadd.xlane.f32.xlu0 %v4226
          %v4228 = vpop.xlane.xlu0 %4227
          %v4229 = vsel %vm3724, %v3700, 0.0
          %4230 = vadd.xlane.f32.xlu0 %v4229
          %v4231 = vpop.xlane.xlu0 %4230
          %v4232 = vsel %vm3724, %v3701, 0.0
          %4233 = vadd.xlane.f32.xlu0 %v4232
          %v4234 = vpop.xlane.xlu0 %4233
          %v4235 = vsel %vm3724, %v3702, 0.0
          %4236 = vadd.xlane.f32.xlu0 %v4235
          %v4237 = vpop.xlane.xlu0 %4236
          %v4238 = vsel %vm3724, %v3703, 0.0
          %4239 = vadd.xlane.f32.xlu0 %v4238
          %v4240 = vpop.xlane.xlu0 %4239
          %v4241 = vsel %vm3724, %v3704, 0.0
          %4242 = vadd.xlane.f32.xlu0 %v4241
          %v4243 = vpop.xlane.xlu0 %4242
          %v4244 = vsel %vm3724, %v3705, 0.0
          %4245 = vadd.xlane.f32.xlu0 %v4244
          %v4246 = vpop.xlane.xlu0 %4245
          %v4247 = vsel %vm3724, %v3706, 0.0
          %4248 = vadd.xlane.f32.xlu0 %v4247
          %v4249 = vpop.xlane.xlu0 %4248
          %v4250 = vsel %vm3724, %v3707, 0.0
          %4251 = vadd.xlane.f32.xlu0 %v4250
          %v4252 = vpop.xlane.xlu0 %4251
          %v4253 = vsel %vm3724, %v3708, 0.0
          %4254 = vadd.xlane.f32.xlu0 %v4253
          %v4255 = vpop.xlane.xlu0 %4254
          %v4256 = vsel %vm3724, %v3709, 0.0
          %4257 = vadd.xlane.f32.xlu0 %v4256
          %v4258 = vpop.xlane.xlu0 %4257
          %v4259 = vsel %vm3724, %v3710, 0.0
          %4260 = vadd.xlane.f32.xlu0 %v4259
          %v4261 = vpop.xlane.xlu0 %4260
          %v4262 = vsel %vm3724, %v3711, 0.0
          %4263 = vadd.xlane.f32.xlu0 %v4262
          %v4264 = vpop.xlane.xlu0 %4263
          %v4265 = vsel %vm3724, %v3712, 0.0
          %4266 = vadd.xlane.f32.xlu0 %v4265
          %v4267 = vpop.xlane.xlu0 %4266
          %v4268 = vsel %vm3724, %v3713, 0.0
          %4269 = vadd.xlane.f32.xlu0 %v4268
          %v4270 = vpop.xlane.xlu0 %4269
          %v4271 = vsel %vm3724, %v3714, 0.0
          %4272 = vadd.xlane.f32.xlu0 %v4271
          %v4273 = vpop.xlane.xlu0 %4272
          %v4274 = vsel %vm3724, %v3715, 0.0
          %4275 = vadd.xlane.f32.xlu0 %v4274
          %v4276 = vpop.xlane.xlu0 %4275
          %v4277 = vsel %vm3724, %v3716, 0.0
          %4278 = vadd.xlane.f32.xlu0 %v4277
          %v4279 = vpop.xlane.xlu0 %4278
          %v4280 = vsel %vm3724, %v3717, 0.0
          %4281 = vadd.xlane.f32.xlu0 %v4280
          %v4282 = vpop.xlane.xlu0 %4281
          %v4283 = vsel %vm3724, %v3718, 0.0
          %4284 = vadd.xlane.f32.xlu0 %v4283
          %v4285 = vpop.xlane.xlu0 %4284
          %v4286 = vsel %vm3724, %v3719, 0.0
          %4287 = vadd.xlane.f32.xlu0 %v4286
          %v4288 = vpop.xlane.xlu0 %4287
          %v4289 = vsel %vm3724, %v3720, 0.0
          %4290 = vadd.xlane.f32.xlu0 %v4289
          %v4291 = vpop.xlane.xlu0 %4290
          %v4292 = vsel %vm3724, %v3721, 0.0
          %4293 = vadd.xlane.f32.xlu0 %v4292
          %v4294 = vpop.xlane.xlu0 %4293
          %v4295 = vsel %vm3724, %v3722, 0.0
          %4296 = vadd.xlane.f32.xlu0 %v4295
          %v4297 = vpop.xlane.xlu0 %4296
          %v4298 = vsel %vm3724, %v3723, 0.0
          %4299 = vadd.xlane.f32.xlu0 %v4298
          %v4300 = vpop.xlane.xlu0 %4299
          %v4301 = vmax.f32 %v3727, %v3823
          %v4302 = vmax.f32 %v4301, %v3919
          %v4303 = vmax.f32 %v4302, %v4015
          %v4304 = vmax.f32 %v4303, %v4111
          %v4305 = vmax.f32 %v4304, %v4207
          %v4306 = vmax.f32 %v3730, %v3826
          %v4307 = vmax.f32 %v4306, %v3922
          %v4308 = vmax.f32 %v4307, %v4018
          %v4309 = vmax.f32 %v4308, %v4114
          %v4310 = vmax.f32 %v4309, %v4210
          %v4311 = vmax.f32 %v3733, %v3829
          %v4312 = vmax.f32 %v4311, %v3925
          %v4313 = vmax.f32 %v4312, %v4021
          %v4314 = vmax.f32 %v4313, %v4117
          %v4315 = vmax.f32 %v4314, %v4213
          %v4316 = vmax.f32 %v3736, %v3832
          %v4317 = vmax.f32 %v4316, %v3928
          %v4318 = vmax.f32 %v4317, %v4024
          %v4319 = vmax.f32 %v4318, %v4120
          %v4320 = vmax.f32 %v4319, %v4216
          %v4321 = vmax.f32 %v3739, %v3835
          %v4322 = vmax.f32 %v4321, %v3931
          %v4323 = vmax.f32 %v4322, %v4027
          %v4324 = vmax.f32 %v4323, %v4123
          %v4325 = vmax.f32 %v4324, %v4219
          %v4326 = vmax.f32 %v3742, %v3838
          %v4327 = vmax.f32 %v4326, %v3934
          %v4328 = vmax.f32 %v4327, %v4030
          %v4329 = vmax.f32 %v4328, %v4126
          %v4330 = vmax.f32 %v4329, %v4222
          %v4331 = vmax.f32 %v3745, %v3841
          %v4332 = vmax.f32 %v4331, %v3937
          %v4333 = vmax.f32 %v4332, %v4033
          %v4334 = vmax.f32 %v4333, %v4129
          %v4335 = vmax.f32 %v4334, %v4225
          %v4336 = vmax.f32 %v3748, %v3844
          %v4337 = vmax.f32 %v4336, %v3940
          %v4338 = vmax.f32 %v4337, %v4036
          %v4339 = vmax.f32 %v4338, %v4132
          %v4340 = vmax.f32 %v4339, %v4228
          %v4341 = vmax.f32 %v3751, %v3847
          %v4342 = vmax.f32 %v4341, %v3943
          %v4343 = vmax.f32 %v4342, %v4039
          %v4344 = vmax.f32 %v4343, %v4135
          %v4345 = vmax.f32 %v4344, %v4231
          %v4346 = vmax.f32 %v3754, %v3850
          %v4347 = vmax.f32 %v4346, %v3946
          %v4348 = vmax.f32 %v4347, %v4042
          %v4349 = vmax.f32 %v4348, %v4138
          %v4350 = vmax.f32 %v4349, %v4234
          %v4351 = vmax.f32 %v3757, %v3853
          %v4352 = vmax.f32 %v4351, %v3949
          %v4353 = vmax.f32 %v4352, %v4045
          %v4354 = vmax.f32 %v4353, %v4141
          %v4355 = vmax.f32 %v4354, %v4237
          %v4356 = vmax.f32 %v3760, %v3856
          %v4357 = vmax.f32 %v4356, %v3952
          %v4358 = vmax.f32 %v4357, %v4048
          %v4359 = vmax.f32 %v4358, %v4144
          %v4360 = vmax.f32 %v4359, %v4240
          %v4361 = vmax.f32 %v3763, %v3859
          %v4362 = vmax.f32 %v4361, %v3955
          %v4363 = vmax.f32 %v4362, %v4051
          %v4364 = vmax.f32 %v4363, %v4147
          %v4365 = vmax.f32 %v4364, %v4243
          %v4366 = vmax.f32 %v3766, %v3862
          %v4367 = vmax.f32 %v4366, %v3958
          %v4368 = vmax.f32 %v4367, %v4054
          %v4369 = vmax.f32 %v4368, %v4150
          %v4370 = vmax.f32 %v4369, %v4246
          %v4371 = vmax.f32 %v3769, %v3865
          %v4372 = vmax.f32 %v4371, %v3961
          %v4373 = vmax.f32 %v4372, %v4057
          %v4374 = vmax.f32 %v4373, %v4153
          %v4375 = vmax.f32 %v4374, %v4249
          %v4376 = vmax.f32 %v3772, %v3868
          %v4377 = vmax.f32 %v4376, %v3964
          %v4378 = vmax.f32 %v4377, %v4060
          %v4379 = vmax.f32 %v4378, %v4156
          %v4380 = vmax.f32 %v4379, %v4252
          %v4381 = vmax.f32 %v3775, %v3871
          %v4382 = vmax.f32 %v4381, %v3967
          %v4383 = vmax.f32 %v4382, %v4063
          %v4384 = vmax.f32 %v4383, %v4159
          %v4385 = vmax.f32 %v4384, %v4255
          %v4386 = vmax.f32 %v3778, %v3874
          %v4387 = vmax.f32 %v4386, %v3970
          %v4388 = vmax.f32 %v4387, %v4066
          %v4389 = vmax.f32 %v4388, %v4162
          %v4390 = vmax.f32 %v4389, %v4258
          %v4391 = vmax.f32 %v3781, %v3877
          %v4392 = vmax.f32 %v4391, %v3973
          %v4393 = vmax.f32 %v4392, %v4069
          %v4394 = vmax.f32 %v4393, %v4165
          %v4395 = vmax.f32 %v4394, %v4261
          %v4396 = vmax.f32 %v3784, %v3880
          %v4397 = vmax.f32 %v4396, %v3976
          %v4398 = vmax.f32 %v4397, %v4072
          %v4399 = vmax.f32 %v4398, %v4168
          %v4400 = vmax.f32 %v4399, %v4264
          %v4401 = vmax.f32 %v3787, %v3883
          %v4402 = vmax.f32 %v4401, %v3979
          %v4403 = vmax.f32 %v4402, %v4075
          %v4404 = vmax.f32 %v4403, %v4171
          %v4405 = vmax.f32 %v4404, %v4267
          %v4406 = vmax.f32 %v3790, %v3886
          %v4407 = vmax.f32 %v4406, %v3982
          %v4408 = vmax.f32 %v4407, %v4078
          %v4409 = vmax.f32 %v4408, %v4174
          %v4410 = vmax.f32 %v4409, %v4270
          %v4411 = vmax.f32 %v3793, %v3889
          %v4412 = vmax.f32 %v4411, %v3985
          %v4413 = vmax.f32 %v4412, %v4081
          %v4414 = vmax.f32 %v4413, %v4177
          %v4415 = vmax.f32 %v4414, %v4273
          %v4416 = vmax.f32 %v3796, %v3892
          %v4417 = vmax.f32 %v4416, %v3988
          %v4418 = vmax.f32 %v4417, %v4084
          %v4419 = vmax.f32 %v4418, %v4180
          %v4420 = vmax.f32 %v4419, %v4276
          %v4421 = vmax.f32 %v3799, %v3895
          %v4422 = vmax.f32 %v4421, %v3991
          %v4423 = vmax.f32 %v4422, %v4087
          %v4424 = vmax.f32 %v4423, %v4183
          %v4425 = vmax.f32 %v4424, %v4279
          %v4426 = vmax.f32 %v3802, %v3898
          %v4427 = vmax.f32 %v4426, %v3994
          %v4428 = vmax.f32 %v4427, %v4090
          %v4429 = vmax.f32 %v4428, %v4186
          %v4430 = vmax.f32 %v4429, %v4282
          %v4431 = vmax.f32 %v3805, %v3901
          %v4432 = vmax.f32 %v4431, %v3997
          %v4433 = vmax.f32 %v4432, %v4093
          %v4434 = vmax.f32 %v4433, %v4189
          %v4435 = vmax.f32 %v4434, %v4285
          %v4436 = vmax.f32 %v3808, %v3904
          %v4437 = vmax.f32 %v4436, %v4000
          %v4438 = vmax.f32 %v4437, %v4096
          %v4439 = vmax.f32 %v4438, %v4192
          %v4440 = vmax.f32 %v4439, %v4288
          %v4441 = vmax.f32 %v3811, %v3907
          %v4442 = vmax.f32 %v4441, %v4003
          %v4443 = vmax.f32 %v4442, %v4099
          %v4444 = vmax.f32 %v4443, %v4195
          %v4445 = vmax.f32 %v4444, %v4291
          %v4446 = vmax.f32 %v3814, %v3910
          %v4447 = vmax.f32 %v4446, %v4006
          %v4448 = vmax.f32 %v4447, %v4102
          %v4449 = vmax.f32 %v4448, %v4198
          %v4450 = vmax.f32 %v4449, %v4294
          %v4451 = vmax.f32 %v3817, %v3913
          %v4452 = vmax.f32 %v4451, %v4009
          %v4453 = vmax.f32 %v4452, %v4105
          %v4454 = vmax.f32 %v4453, %v4201
          %v4455 = vmax.f32 %v4454, %v4297
          %v4456 = vmax.f32 %v3820, %v3916
          %v4457 = vmax.f32 %v4456, %v4012
          %v4458 = vmax.f32 %v4457, %v4108
          %v4459 = vmax.f32 %v4458, %v4204
          %v4460 = vmax.f32 %v4459, %v4300
          %v4461 = vmul.f32 %v4305, 0.020408163
          %v4462 = vmul.f32 %v4310, 0.020408163
          %v4463 = vmul.f32 %v4315, 0.020408163
          %v4464 = vmul.f32 %v4320, 0.020408163
          %v4465 = vmul.f32 %v4325, 0.020408163
          %v4466 = vmul.f32 %v4330, 0.020408163
          %v4467 = vmul.f32 %v4335, 0.020408163
          %v4468 = vmul.f32 %v4340, 0.020408163
          %v4469 = vmul.f32 %v4345, 0.020408163
          %v4470 = vmul.f32 %v4350, 0.020408163
          %v4471 = vmul.f32 %v4355, 0.020408163
          %v4472 = vmul.f32 %v4360, 0.020408163
          %v4473 = vmul.f32 %v4365, 0.020408163
          %v4474 = vmul.f32 %v4370, 0.020408163
          %v4475 = vmul.f32 %v4375, 0.020408163
          %v4476 = vmul.f32 %v4380, 0.020408163
          %v4477 = vmul.f32 %v4385, 0.020408163
          %v4478 = vmul.f32 %v4390, 0.020408163
          %v4479 = vmul.f32 %v4395, 0.020408163
          %v4480 = vmul.f32 %v4400, 0.020408163
          %v4481 = vmul.f32 %v4405, 0.020408163
          %v4482 = vmul.f32 %v4410, 0.020408163
          %v4483 = vmul.f32 %v4415, 0.020408163
          %v4484 = vmul.f32 %v4420, 0.020408163
          %v4485 = vmul.f32 %v4425, 0.020408163
          %v4486 = vmul.f32 %v4430, 0.020408163
          %v4487 = vmul.f32 %v4435, 0.020408163
          %v4488 = vmul.f32 %v4440, 0.020408163
          %v4489 = vmul.f32 %v4445, 0.020408163
          %v4490 = vmul.f32 %v4450, 0.020408163
          %v4491 = vmul.f32 %v4455, 0.020408163
          %v4492 = vmul.f32 %v4460, 0.020408163
          %v4525 = vlaneseq
          %v4526 = vand.u32 %v4525, 127
          %v4527 = vlaneseq
          %v4528 = vshrl.u32 %v4527, 7
          %v4529 = vsub.s32 %v4526, %v4528
          %v4530 = vrot.slane %v4461, %v4529
          %v4531 = vadd.s32 %v4526, 4294967288
          %v4532 = vlaneseq
          %v4533 = vshrl.u32 %v4532, 7
          %v4534 = vsub.s32 %v4531, %v4533
          %v4535 = vrot.slane %v4462, %v4534
          %vm4536 = vcmask 130112
          %v4537 = vsel %vm4536, %v4535, %v4530
          %v4538 = vadd.s32 %v4526, 4294967280
          %v4539 = vlaneseq
          %v4540 = vshrl.u32 %v4539, 7
          %v4541 = vsub.s32 %v4538, %v4540
          %v4542 = vrot.slane %v4463, %v4541
          %vm4543 = vcmask 195712
          %v4544 = vsel %vm4543, %v4542, %v4537
          %v4545 = vadd.s32 %v4526, 4294967272
          %v4546 = vlaneseq
          %v4547 = vshrl.u32 %v4546, 7
          %v4548 = vsub.s32 %v4545, %v4547
          %v4549 = vrot.slane %v4464, %v4548
          %vm4550 = vcmask 261312
          %v4551 = vsel %vm4550, %v4549, %v4544
          %v4552 = vadd.s32 %v4526, 4294967264
          %v4553 = vlaneseq
          %v4554 = vshrl.u32 %v4553, 7
          %v4555 = vsub.s32 %v4552, %v4554
          %v4556 = vrot.slane %v4465, %v4555
          %vm4557 = vcmask 326912
          %v4558 = vsel %vm4557, %v4556, %v4551
          %v4559 = vadd.s32 %v4526, 4294967256
          %v4560 = vlaneseq
          %v4561 = vshrl.u32 %v4560, 7
          %v4562 = vsub.s32 %v4559, %v4561
          %v4563 = vrot.slane %v4466, %v4562
          %vm4564 = vcmask 392512
          %v4565 = vsel %vm4564, %v4563, %v4558
          %v4566 = vadd.s32 %v4526, 4294967248
          %v4567 = vlaneseq
          %v4568 = vshrl.u32 %v4567, 7
          %v4569 = vsub.s32 %v4566, %v4568
          %v4570 = vrot.slane %v4467, %v4569
          %vm4571 = vcmask 458112
          %v4572 = vsel %vm4571, %v4570, %v4565
          %v4573 = vadd.s32 %v4526, 4294967240
          %v4574 = vlaneseq
          %v4575 = vshrl.u32 %v4574, 7
          %v4576 = vsub.s32 %v4573, %v4575
          %v4577 = vrot.slane %v4468, %v4576
          %vm4578 = vcmask 523712
          %v4579 = vsel %vm4578, %v4577, %v4572
          %v4580 = vadd.s32 %v4526, 4294967232
          %v4581 = vlaneseq
          %v4582 = vshrl.u32 %v4581, 7
          %v4583 = vsub.s32 %v4580, %v4582
          %v4584 = vrot.slane %v4469, %v4583
          %vm4585 = vcmask 589312
          %v4586 = vsel %vm4585, %v4584, %v4579
          %v4587 = vadd.s32 %v4526, 4294967224
          %v4588 = vlaneseq
          %v4589 = vshrl.u32 %v4588, 7
          %v4590 = vsub.s32 %v4587, %v4589
          %v4591 = vrot.slane %v4470, %v4590
          %vm4592 = vcmask 654912
          %v4593 = vsel %vm4592, %v4591, %v4586
          %v4594 = vadd.s32 %v4526, 4294967216
          %v4595 = vlaneseq
          %v4596 = vshrl.u32 %v4595, 7
          %v4597 = vsub.s32 %v4594, %v4596
          %v4598 = vrot.slane %v4471, %v4597
          %vm4599 = vcmask 720512
          %v4600 = vsel %vm4599, %v4598, %v4593
          %v4601 = vadd.s32 %v4526, 4294967208
          %v4602 = vlaneseq
          %v4603 = vshrl.u32 %v4602, 7
          %v4604 = vsub.s32 %v4601, %v4603
          %v4605 = vrot.slane %v4472, %v4604
          %vm4606 = vcmask 786112
          %v4607 = vsel %vm4606, %v4605, %v4600
          %v4608 = vadd.s32 %v4526, 4294967200
          %v4609 = vlaneseq
          %v4610 = vshrl.u32 %v4609, 7
          %v4611 = vsub.s32 %v4608, %v4610
          %v4612 = vrot.slane %v4473, %v4611
          %vm4613 = vcmask 851712
          %v4614 = vsel %vm4613, %v4612, %v4607
          %v4615 = vadd.s32 %v4526, 4294967192
          %v4616 = vlaneseq
          %v4617 = vshrl.u32 %v4616, 7
          %v4618 = vsub.s32 %v4615, %v4617
          %v4619 = vrot.slane %v4474, %v4618
          %vm4620 = vcmask 917312
          %v4621 = vsel %vm4620, %v4619, %v4614
          %v4622 = vadd.s32 %v4526, 4294967184
          %v4623 = vlaneseq
          %v4624 = vshrl.u32 %v4623, 7
          %v4625 = vsub.s32 %v4622, %v4624
          %v4626 = vrot.slane %v4475, %v4625
          %vm4627 = vcmask 982912
          %v4628 = vsel %vm4627, %v4626, %v4621
          %v4629 = vadd.s32 %v4526, 4294967176
          %v4630 = vlaneseq
          %v4631 = vshrl.u32 %v4630, 7
          %v4632 = vsub.s32 %v4629, %v4631
          %v4633 = vrot.slane %v4476, %v4632
          %vm4634 = vcmask 1048512
          %v4635 = vsel %vm4634, %v4633, %v4628
          %v4636 = vlaneseq
          %v4637 = vshrl.u32 %v4636, 7
          %v4638 = vsub.s32 %v4526, %v4637
          %v4639 = vrot.slane %v4477, %v4638
          %v4640 = vlaneseq
          %v4641 = vshrl.u32 %v4640, 7
          %v4642 = vsub.s32 %v4531, %v4641
          %v4643 = vrot.slane %v4478, %v4642
          %v4644 = vsel %vm4536, %v4643, %v4639
          %v4645 = vlaneseq
          %v4646 = vshrl.u32 %v4645, 7
          %v4647 = vsub.s32 %v4538, %v4646
          %v4648 = vrot.slane %v4479, %v4647
          %v4649 = vsel %vm4543, %v4648, %v4644
          %v4650 = vlaneseq
          %v4651 = vshrl.u32 %v4650, 7
          %v4652 = vsub.s32 %v4545, %v4651
          %v4653 = vrot.slane %v4480, %v4652
          %v4654 = vsel %vm4550, %v4653, %v4649
          %v4655 = vlaneseq
          %v4656 = vshrl.u32 %v4655, 7
          %v4657 = vsub.s32 %v4552, %v4656
          %v4658 = vrot.slane %v4481, %v4657
          %v4659 = vsel %vm4557, %v4658, %v4654
          %v4660 = vlaneseq
          %v4661 = vshrl.u32 %v4660, 7
          %v4662 = vsub.s32 %v4559, %v4661
          %v4663 = vrot.slane %v4482, %v4662
          %v4664 = vsel %vm4564, %v4663, %v4659
          %v4665 = vlaneseq
          %v4666 = vshrl.u32 %v4665, 7
          %v4667 = vsub.s32 %v4566, %v4666
          %v4668 = vrot.slane %v4483, %v4667
          %v4669 = vsel %vm4571, %v4668, %v4664
          %v4670 = vlaneseq
          %v4671 = vshrl.u32 %v4670, 7
          %v4672 = vsub.s32 %v4573, %v4671
          %v4673 = vrot.slane %v4484, %v4672
          %v4674 = vsel %vm4578, %v4673, %v4669
          %v4675 = vlaneseq
          %v4676 = vshrl.u32 %v4675, 7
          %v4677 = vsub.s32 %v4580, %v4676
          %v4678 = vrot.slane %v4485, %v4677
          %v4679 = vsel %vm4585, %v4678, %v4674
          %v4680 = vlaneseq
          %v4681 = vshrl.u32 %v4680, 7
          %v4682 = vsub.s32 %v4587, %v4681
          %v4683 = vrot.slane %v4486, %v4682
          %v4684 = vsel %vm4592, %v4683, %v4679
          %v4685 = vlaneseq
          %v4686 = vshrl.u32 %v4685, 7
          %v4687 = vsub.s32 %v4594, %v4686
          %v4688 = vrot.slane %v4487, %v4687
          %v4689 = vsel %vm4599, %v4688, %v4684
          %v4690 = vlaneseq
          %v4691 = vshrl.u32 %v4690, 7
          %v4692 = vsub.s32 %v4601, %v4691
          %v4693 = vrot.slane %v4488, %v4692
          %v4694 = vsel %vm4606, %v4693, %v4689
          %v4695 = vlaneseq
          %v4696 = vshrl.u32 %v4695, 7
          %v4697 = vsub.s32 %v4608, %v4696
          %v4698 = vrot.slane %v4489, %v4697
          %v4699 = vsel %vm4613, %v4698, %v4694
          %v4700 = vlaneseq
          %v4701 = vshrl.u32 %v4700, 7
          %v4702 = vsub.s32 %v4615, %v4701
          %v4703 = vrot.slane %v4490, %v4702
          %v4704 = vsel %vm4620, %v4703, %v4699
          %v4705 = vlaneseq
          %v4706 = vshrl.u32 %v4705, 7
          %v4707 = vsub.s32 %v4622, %v4706
          %v4708 = vrot.slane %v4491, %v4707
          %v4709 = vsel %vm4627, %v4708, %v4704
          %v4710 = vlaneseq
          %v4711 = vshrl.u32 %v4710, 7
          %v4712 = vsub.s32 %v4629, %v4711
          %v4713 = vrot.slane %v4492, %v4712
          %v4714 = vsel %vm4634, %v4713, %v4709
          %vm4715 = vcmask 1042434
          %v4716 = vsel %vm4715, %v4635, %v4635
          %vm4717 = vcmask 1043459
          %v4718 = vsel %vm4717, %v4635, %v4716
          %vm4719 = vcmask 1044484
          %v4720 = vsel %vm4719, %v4635, %v4718
          %vm4721 = vcmask 1045509
          %v4722 = vsel %vm4721, %v4635, %v4720
          %vm4723 = vcmask 1046534
          %v4724 = vsel %vm4723, %v4635, %v4722
          %vm4725 = vcmask 1047559
          %v4726 = vsel %vm4725, %v4635, %v4724
          %v4727 = vsel %vm4715, %v4714, %v4714
          %v4728 = vsel %vm4717, %v4714, %v4727
          %v4729 = vsel %vm4719, %v4714, %v4728
          %v4730 = vsel %vm4721, %v4714, %v4729
          %v4731 = vsel %vm4723, %v4714, %v4730
          %v4732 = vsel %vm4725, %v4714, %v4731
          %4735 = vst [vmem:[%s148] sm:$0xff] %v4726
          %4736 = vst [vmem:[%s148 + $0x8] sm:$0xff] %v4732
        $region44: #{tpu_custom_call.1} parent=31 // pred_fallthru
          _
        %s4737 = sand.u32 %s88, 1
        %s4738 = scalar_lea.sflag [#allocation3], %s4737
        %s4739 = sand.u32 %s88, 1
        %s4740 = smul.addr %s4739, 16
        %s4741 = scalar_lea.vmem [#allocation2], %s4740
        // Predicated region
        $region45: #{tpu_custom_call.1} parent=31 // pred_check
          %p4742 = pneg %p98
        $region46: #{tpu_custom_call.1} parent=31 // pred_check_branch
          %4744 = sbr.rel (%p4742) target = $region48
        $region47: #{tpu_custom_call.1} parent=31 // pred_region
          %s4745 = smul.u32 2, %s17
          %s4747 = ssub.s32 256, 256
          %4748 = vsyncadd %s4738, %s4747
          %s4749 = smul.addr %s4745, 128
          %s4750 = scalar_lea.hbm %s3, %s4749
          %s4752 = sshll.u32 %s4741, 4
          %s4753 = int_to_ptr.vmem [resolvable:$true] %s4752
          %4755 = dma.vmem_to_hbm [thread:$0]  %s4753, 256, %s4750, %s4738
        $region48: #{tpu_custom_call.1} parent=31 // pred_fallthru
          _
      $region32: #{tpu_custom_call.1} parent=5 // pred_fallthru
        _
      %p4756 = scmp.le.s32.totalorder 2, %s12
      // Predicated region
      $region49: #{tpu_custom_call.1} parent=5 // pred_check
        %p4757 = pneg %p4756
      $region50: #{tpu_custom_call.1} parent=5 // pred_check_branch
        %4759 = sbr.rel (%p4757) target = $region52
      $region51: #{tpu_custom_call.1} parent=5 // pred_region
        %s4760 = ssub.s32 %s12, 2
        // Predicated region
        $region53: #{tpu_custom_call.1} parent=51 // pred_check
          %p4761 = pneg %p104
        $region54: #{tpu_custom_call.1} parent=51 // pred_check_branch
          %4763 = sbr.rel (%p4761) target = $region56
        $region55: #{tpu_custom_call.1} parent=51 // pred_region
          %s4764 = sand.u32 %s89, 1
          %s4765 = scalar_lea.sflag [#allocation3], %s4764
          %s4766 = sand.u32 %s89, 1
          %s4767 = smul.addr %s4766, 16
          %s4768 = scalar_lea.vmem [#allocation2], %s4767
          %4769 = dma.done %s4765, 256
        $region56: #{tpu_custom_call.1} parent=51 // pred_fallthru
          _
      $region52: #{tpu_custom_call.1} parent=5 // pred_fallthru
        _
    $region6: #{tpu_custom_call.1} parent=1 // loop_footer
      %s16 = sadd.s32 1, %s12
    $region7: #{tpu_custom_call.1} parent=1 // loop_footer_branch
      %11 = sbr.rel target = $region3
    $region8: #{tpu_custom_call.1} parent=1 // loop_exit
      _
    %4770 = vsyncpa [#allocation3], 1
    %s4771 = scalar_lea.sflag [#allocation3], 1
    %4772 = vsyncpa %s4771, 1

</llo_original>
